<compile_context>
chip_gen: v7x
topology: tpu7x:2x2x1
jax: 0.10.0
libtpu: 0.0.40
codegen_flags: <defaults>
</compile_context>

<pallas_src>
import functools
import math

import jax
import jax.numpy as jnp
from jax import lax
from jax.experimental import pallas as pl
from jax.experimental.pallas import tpu as pltpu

_LN_EPS = 1e-5


def _gelu_tanh(x):
    # TODO(synk): PyTorch nn.GELU defaults to the exact erf form; the tanh
    # approximation (max abs deviation ~1e-3) is used since it lowers to pure
    # VPU/EUP ops on all TPU generations.
    c = math.sqrt(2.0 / math.pi)
    return 0.5 * x * (1.0 + jnp.tanh(c * (x + 0.044715 * x * x * x)))


def _layernorm_affine(x, gamma, beta):
    mean = jnp.mean(x, axis=-1, keepdims=True)
    cen = x - mean
    var = jnp.mean(cen * cen, axis=-1, keepdims=True)
    return cen * lax.rsqrt(var + _LN_EPS) * gamma + beta


def _cycle_block_kernel(
    x_ref, masks_ref,
    g1_ref, b1_ref,
    wh_ref, bh_ref,
    ww_ref, bw_ref,
    wc_ref,
    wr1_ref, br1_ref,
    wr2_ref, br2_ref,
    wp_ref, bp_ref,
    wm1_ref, bm1_ref,
    wm2_ref, bm2_ref,
    o_ref,
    pad_ref,
    *, inv_skip_lam,
):
    H, W, C = x_ref.shape
    HW = H * W

    x = x_ref[...]                                   # (H, W, C)

    # Per-channel cycle masks: row 0 -> offset 0, row 1 -> +1, row 2 -> -1.
    m0 = masks_ref[0:1, :]                           # (1, C), broadcasts over (H, W, C)
    mp = masks_ref[1:2, :]
    mm = masks_ref[2:3, :]

    # ---- norm1 ----
    xn = _layernorm_affine(x, g1_ref[...], b1_ref[...])

    # ---- cycle shifts via a zero halo (reproduces deform_conv2d OOB == 0) ----
    pad_ref[...] = jnp.zeros(pad_ref.shape, pad_ref.dtype)
    pad_ref[1:H + 1, 1:W + 1, :] = xn
    right = pad_ref[1:H + 1, 2:W + 2, :]             # value at (h, w+1)
    left = pad_ref[1:H + 1, 0:W, :]                  # value at (h, w-1)
    down = pad_ref[2:H + 2, 1:W + 1, :]              # value at (h+1, w)
    up = pad_ref[0:H, 1:W + 1, :]                    # value at (h-1, w)

    gath_h = xn * m0 + right * mp + left * mm        # sfc_h: (1,3) kernel, cycles along W
    gath_w = xn * m0 + down * mp + up * mm           # sfc_w: (3,1) kernel, cycles along H

    xn2d = xn.reshape(HW, C)
    h_br = jnp.dot(gath_h.reshape(HW, C), wh_ref[...],
                   preferred_element_type=jnp.float32) + bh_ref[...]
    w_br = jnp.dot(gath_w.reshape(HW, C), ww_ref[...],
                   preferred_element_type=jnp.float32) + bw_ref[...]
    c_br = jnp.dot(xn2d, wc_ref[...], preferred_element_type=jnp.float32)  # no bias

    # ---- reweight: spatial mean -> tiny MLP -> softmax over the 3 branches ----
    s_mean = jnp.mean(h_br + w_br + c_br, axis=0, keepdims=True)           # (1, C)
    r = _gelu_tanh(jnp.dot(s_mean, wr1_ref[...],
                           preferred_element_type=jnp.float32) + br1_ref[...])
    z0 = jnp.dot(r, wr2_ref[0], preferred_element_type=jnp.float32) + br2_ref[0:1, :]
    z1 = jnp.dot(r, wr2_ref[1], preferred_element_type=jnp.float32) + br2_ref[1:2, :]
    z2 = jnp.dot(r, wr2_ref[2], preferred_element_type=jnp.float32) + br2_ref[2:3, :]
    zmax = jnp.maximum(jnp.maximum(z0, z1), z2)
    e0 = jnp.exp(z0 - zmax)
    e1 = jnp.exp(z1 - zmax)
    e2 = jnp.exp(z2 - zmax)
    inv = 1.0 / (e0 + e1 + e2)
    a0 = e0 * inv
    a1 = e1 * inv
    a2 = e2 * inv                                                           # (1, C)

    mixed = h_br * a0 + w_br * a1 + c_br * a2                               # (HW, C)
    attn = jnp.dot(mixed, wp_ref[...],
                   preferred_element_type=jnp.float32) + bp_ref[...]

    x1 = x.reshape(HW, C) + attn * inv_skip_lam

    # ---- norm2 (affine folded into wm1/bm1 in the wrapper) + MLP + residual ----
    mean2 = jnp.mean(x1, axis=-1, keepdims=True)
    cen2 = x1 - mean2
    var2 = jnp.mean(cen2 * cen2, axis=-1, keepdims=True)
    xn2 = cen2 * lax.rsqrt(var2 + _LN_EPS)

    hmid = _gelu_tanh(jnp.dot(xn2, wm1_ref[...],
                              preferred_element_type=jnp.float32) + bm1_ref[...])
    mlp_out = jnp.dot(hmid, wm2_ref[...],
                      preferred_element_type=jnp.float32) + bm2_ref[...]

    o_ref[...] = (x1 + mlp_out * inv_skip_lam).reshape(H, W, C).astype(o_ref.dtype)


def cycle_block_forward(x, p, *, skip_lam=1.0):
    """CycleBlock forward. x: (B, H, W, C) -> (B, H, W, C)."""
    B, H, W, C = x.shape
    assert C % 4 == 0, "dim must be divisible by 4 (reweight hidden = dim // 4)"
    assert H >= 2 and W >= 2

    c4 = p["wr1"].shape[1]
    hidden = p["wm1"].shape[1]
    f32 = jnp.float32

    # Channel cycle masks for the size-3 CycleFC kernels: offset = (i + 1) % 3 - 1.
    grp = jnp.arange(C) % 3
    masks = jnp.stack([grp == 0, grp == 1, grp == 2], axis=0).astype(f32)   # (3, C)

    # Split the reweight fc2 (C//4 -> 3C, flat index = 3*c + j) into 3 logits.
    wr2s = jnp.stack([p["wr2"][:, j::3] for j in range(3)], axis=0)         # (3, C//4, C)
    br2s = jnp.stack([p["br2"][j::3] for j in range(3)], axis=0)            # (3, C)

    # Fold the norm2 affine into the MLP fc1 (identical math, saves VPU work).
    wm1f = p["g2"][:, None] * p["wm1"]
    bm1f = jnp.dot(p["b2"], p["wm1"], precision="highest") + p["bm1"]

    def row(v):
        return v.reshape(1, -1)

    args = (
        x, masks,
        row(p["g1"]), row(p["b1"]),
        p["wh"], row(p["bh"]),
        p["ww"], row(p["bw"]),
        p["wc"],
        p["wr1"], row(p["br1"]),
        wr2s, br2s,
        p["wp"], row(p["bp"]),
        wm1f, row(bm1f),
        p["wm2"], row(p["bm2"]),
    )

    const2 = lambda b: (0, 0)
    const3 = lambda b: (0, 0, 0)
    in_specs = [
        pl.BlockSpec((None, H, W, C), lambda b: (b, 0, 0, 0)),             # x
        pl.BlockSpec((3, C), const2),                                      # cycle masks
        pl.BlockSpec((1, C), const2), pl.BlockSpec((1, C), const2),        # g1, b1
        pl.BlockSpec((C, C), const2), pl.BlockSpec((1, C), const2),        # wh, bh
        pl.BlockSpec((C, C), const2), pl.BlockSpec((1, C), const2),        # ww, bw
        pl.BlockSpec((C, C), const2),                                      # wc
        pl.BlockSpec((C, c4), const2), pl.BlockSpec((1, c4), const2),      # wr1, br1
        pl.BlockSpec((3, c4, C), const3), pl.BlockSpec((3, C), const2),    # wr2, br2
        pl.BlockSpec((C, C), const2), pl.BlockSpec((1, C), const2),        # wp, bp
        pl.BlockSpec((C, hidden), const2), pl.BlockSpec((1, hidden), const2),  # wm1, bm1
        pl.BlockSpec((hidden, C), const2), pl.BlockSpec((1, C), const2),   # wm2, bm2
    ]

    tokens = B * H * W
    flops = 2 * tokens * (4 * C * C + 2 * C * hidden) + 2 * B * (C * c4 + 3 * c4 * C)
    transcendentals = tokens * hidden + B * (c4 + 3 * C)
    bytes_accessed = 4 * (2 * int(x.size) + sum(int(a.size) for a in args[1:]))

    kernel = functools.partial(_cycle_block_kernel,
                               inv_skip_lam=float(1.0 / skip_lam))

    return pl.pallas_call(
        kernel,
        out_shape=jax.ShapeDtypeStruct((B, H, W, C), x.dtype),
        grid_spec=pltpu.PrefetchScalarGridSpec(
            num_scalar_prefetch=0,
            grid=(B,),
            in_specs=in_specs,
            out_specs=pl.BlockSpec((None, H, W, C), lambda b: (b, 0, 0, 0)),
            scratch_shapes=[pltpu.VMEM((H + 2, W + 2, C), jnp.float32)],
        ),
        compiler_params=pltpu.CompilerParams(
            dimension_semantics=("parallel",),
        ),
        cost_estimate=pl.CostEstimate(
            flops=int(flops),
            transcendentals=int(transcendentals),
            bytes_accessed=int(bytes_accessed),
        ),
    )(*args)


def _cycle_block_reference(x, p, *, skip_lam=1.0):
    """Pure-JAX reference mirroring the PyTorch CycleBlock forward (unfolded)."""
    B, H, W, C = x.shape
    hp = "highest"

    def ln(t, g, b):
        mu = jnp.mean(t, axis=-1, keepdims=True)
        var = jnp.mean((t - mu) ** 2, axis=-1, keepdims=True)
        return (t - mu) / jnp.sqrt(var + _LN_EPS) * g + b

    xn = ln(x, p["g1"], p["b1"])

    delta = (jnp.arange(C) + 1) % 3 - 1                      # per-channel cycle offsets

    # sfc_h: (1,3) kernel -> gather along W with zero out-of-bounds.
    idx_w = jnp.arange(W)[:, None] + delta[None, :]          # (W, C)
    valid_w = (idx_w >= 0) & (idx_w < W)
    gw = jnp.take_along_axis(
        xn, jnp.broadcast_to(jnp.clip(idx_w, 0, W - 1)[None, None], (B, H, W, C)),
        axis=2)
    gath_h = jnp.where(valid_w[None, None], gw, 0.0)

    # sfc_w: (3,1) kernel -> gather along H with zero out-of-bounds.
    idx_h = jnp.arange(H)[:, None] + delta[None, :]          # (H, C)
    valid_h = (idx_h >= 0) & (idx_h < H)
    gh = jnp.take_along_axis(
        xn, jnp.broadcast_to(jnp.clip(idx_h, 0, H - 1)[None, :, None, :], (B, H, W, C)),
        axis=1)
    gath_w = jnp.where(valid_h[None, :, None, :], gh, 0.0)

    h = jnp.einsum("bhwc,cd->bhwd", gath_h, p["wh"], precision=hp) + p["bh"]
    w = jnp.einsum("bhwc,cd->bhwd", gath_w, p["ww"], precision=hp) + p["bw"]
    c = jnp.einsum("bhwc,cd->bhwd", xn, p["wc"], precision=hp)

    a = jnp.mean((h + w + c).reshape(B, H * W, C), axis=1)                 # (B, C)
    a = _gelu_tanh(jnp.dot(a, p["wr1"], precision=hp) + p["br1"])
    a = jnp.dot(a, p["wr2"], precision=hp) + p["br2"]                      # (B, 3C)
    a = jax.nn.softmax(a.reshape(B, C, 3), axis=-1)
    a = jnp.transpose(a, (2, 0, 1))[:, :, None, None, :]                   # (3, B, 1, 1, C)

    mixed = h * a[0] + w * a[1] + c * a[2]
    attn = jnp.einsum("bhwc,cd->bhwd", mixed, p["wp"], precision=hp) + p["bp"]

    x1 = x + attn / skip_lam
    xn2 = ln(x1, p["g2"], p["b2"])
    hmid = _gelu_tanh(
        jnp.einsum("bhwc,cd->bhwd", xn2, p["wm1"], precision=hp) + p["bm1"])
    mlp = jnp.einsum("bhwd,dc->bhwc", hmid, p["wm2"], precision=hp) + p["bm2"]
    return x1 + mlp / skip_lam


if __name__ == "__main__":
    B, H, W, C = 2, 8, 8, 128          # lane-dense channel dim (multiple of 128)
    mlp_ratio = 4.0
    hidden = int(C * mlp_ratio)
    c4 = C // 4

    key = jax.random.PRNGKey(0)
    ks = jax.random.split(key, 20)

    def nrm(k, shape, scale=1.0):
        return jax.random.normal(k, shape, dtype=jnp.float32) * scale

    x = nrm(ks[0], (B, H, W, C))

    p = {
        "g1": 1.0 + 0.1 * nrm(ks[1], (C,)),
        "b1": 0.1 * nrm(ks[2], (C,)),
        "g2": 1.0 + 0.1 * nrm(ks[3], (C,)),
        "b2": 0.1 * nrm(ks[4], (C,)),
        "wh": nrm(ks[5], (C, C), C ** -0.5),
        "bh": 0.1 * nrm(ks[6], (C,)),
        "ww": nrm(ks[7], (C, C), C ** -0.5),
        "bw": 0.1 * nrm(ks[8], (C,)),
        "wc": nrm(ks[9], (C, C), C ** -0.5),
        "wr1": nrm(ks[10], (C, c4), C ** -0.5),
        "br1": 0.1 * nrm(ks[11], (c4,)),
        "wr2": nrm(ks[12], (c4, 3 * C), c4 ** -0.5),
        "br2": 0.1 * nrm(ks[13], (3 * C,)),
        "wp": nrm(ks[14], (C, C), C ** -0.5),
        "bp": 0.1 * nrm(ks[15], (C,)),
        "wm1": nrm(ks[16], (C, hidden), C ** -0.5),
        "bm1": 0.1 * nrm(ks[17], (hidden,)),
        "wm2": nrm(ks[18], (hidden, C), hidden ** -0.5),
        "bm2": 0.1 * nrm(ks[19], (C,)),
    }

    y = cycle_block_forward(x, p)
    jax.block_until_ready(y)

    y_ref = _cycle_block_reference(x, p)
    assert y.shape == (B, H, W, C), y.shape
    max_err = float(jnp.max(jnp.abs(y - y_ref)))
    # Expected error ~1e-5 (f32 everywhere); loose-ish bound only guards against
    # accumulation-order differences between MXU and the XLA reference.
    assert jnp.allclose(y, y_ref, atol=2e-3, rtol=2e-3), max_err

    print("KERNEL_OK")
</pallas_src>

<mosaic_0001>
module attributes {stable_mosaic.version = 11 : i64} {
  func.func @_cycle_block_kernel(%arg0: i32, %arg1: memref<1x8x8x128xf32, #tpu.memory_space<vmem>>, %arg2: memref<3x128xf32, #tpu.memory_space<vmem>>, %arg3: memref<1x128xf32, #tpu.memory_space<vmem>>, %arg4: memref<1x128xf32, #tpu.memory_space<vmem>>, %arg5: memref<128x128xf32, #tpu.memory_space<vmem>>, %arg6: memref<1x128xf32, #tpu.memory_space<vmem>>, %arg7: memref<128x128xf32, #tpu.memory_space<vmem>>, %arg8: memref<1x128xf32, #tpu.memory_space<vmem>>, %arg9: memref<128x128xf32, #tpu.memory_space<vmem>>, %arg10: memref<128x32xf32, #tpu.memory_space<vmem>>, %arg11: memref<1x32xf32, #tpu.memory_space<vmem>>, %arg12: memref<3x32x128xf32, #tpu.memory_space<vmem>>, %arg13: memref<3x128xf32, #tpu.memory_space<vmem>>, %arg14: memref<128x128xf32, #tpu.memory_space<vmem>>, %arg15: memref<1x128xf32, #tpu.memory_space<vmem>>, %arg16: memref<128x512xf32, #tpu.memory_space<vmem>>, %arg17: memref<1x512xf32, #tpu.memory_space<vmem>>, %arg18: memref<512x128xf32, #tpu.memory_space<vmem>>, %arg19: memref<1x128xf32, #tpu.memory_space<vmem>>, %arg20: memref<1x8x8x128xf32, #tpu.memory_space<vmem>>, %arg21: memref<10x10x128xf32, #tpu.memory_space<vmem>>) attributes {dimension_semantics = [#tpu.dimension_semantics<parallel>], iteration_bounds = array<i64: 2>, scalar_prefetch = 0 : i64, scratch_operands = 1 : i64, tpu.core_type = #tpu.core_type<tc>, window_params = [{transform_indices = @transform_0, window_bounds = array<i64: 1, 8, 8, 128>}, {pipeline_mode = #tpu.pipeline_mode<synchronous>, transform_indices = @transform_1, window_bounds = array<i64: 3, 128>}, {pipeline_mode = #tpu.pipeline_mode<synchronous>, transform_indices = @transform_2, window_bounds = array<i64: 1, 128>}, {pipeline_mode = #tpu.pipeline_mode<synchronous>, transform_indices = @transform_3, window_bounds = array<i64: 1, 128>}, {pipeline_mode = #tpu.pipeline_mode<synchronous>, transform_indices = @transform_4, window_bounds = array<i64: 128, 128>}, {pipeline_mode = #tpu.pipeline_mode<synchronous>, transform_indices = @transform_5, window_bounds = array<i64: 1, 128>}, {pipeline_mode = #tpu.pipeline_mode<synchronous>, transform_indices = @transform_6, window_bounds = array<i64: 128, 128>}, {pipeline_mode = #tpu.pipeline_mode<synchronous>, transform_indices = @transform_7, window_bounds = array<i64: 1, 128>}, {pipeline_mode = #tpu.pipeline_mode<synchronous>, transform_indices = @transform_8, window_bounds = array<i64: 128, 128>}, {pipeline_mode = #tpu.pipeline_mode<synchronous>, transform_indices = @transform_9, window_bounds = array<i64: 128, 32>}, {pipeline_mode = #tpu.pipeline_mode<synchronous>, transform_indices = @transform_10, window_bounds = array<i64: 1, 32>}, {pipeline_mode = #tpu.pipeline_mode<synchronous>, transform_indices = @transform_11, window_bounds = array<i64: 3, 32, 128>}, {pipeline_mode = #tpu.pipeline_mode<synchronous>, transform_indices = @transform_12, window_bounds = array<i64: 3, 128>}, {pipeline_mode = #tpu.pipeline_mode<synchronous>, transform_indices = @transform_13, window_bounds = array<i64: 128, 128>}, {pipeline_mode = #tpu.pipeline_mode<synchronous>, transform_indices = @transform_14, window_bounds = array<i64: 1, 128>}, {pipeline_mode = #tpu.pipeline_mode<synchronous>, transform_indices = @transform_15, window_bounds = array<i64: 128, 512>}, {pipeline_mode = #tpu.pipeline_mode<synchronous>, transform_indices = @transform_16, window_bounds = array<i64: 1, 512>}, {pipeline_mode = #tpu.pipeline_mode<synchronous>, transform_indices = @transform_17, window_bounds = array<i64: 512, 128>}, {pipeline_mode = #tpu.pipeline_mode<synchronous>, transform_indices = @transform_18, window_bounds = array<i64: 1, 128>}, {transform_indices = @transform_19, window_bounds = array<i64: 1, 8, 8, 128>}]} {
    %c0 = arith.constant 0 : index
    %c0_0 = arith.constant 0 : index
    %c0_1 = arith.constant 0 : index
    %c0_2 = arith.constant 0 : index
    %0 = vector.load %arg1[%c0, %c0_0, %c0_1, %c0_2] : memref<1x8x8x128xf32, #tpu.memory_space<vmem>>, vector<1x8x8x128xf32>
    %1 = vector.shape_cast %0 : vector<1x8x8x128xf32> to vector<8x8x128xf32>
    %c0_3 = arith.constant 0 : index
    %c0_4 = arith.constant 0 : index
    %2 = vector.load %arg2[%c0_3, %c0_4] : memref<3x128xf32, #tpu.memory_space<vmem>>, vector<1x128xf32>
    %c1 = arith.constant 1 : index
    %c0_5 = arith.constant 0 : index
    %3 = vector.load %arg2[%c1, %c0_5] : memref<3x128xf32, #tpu.memory_space<vmem>>, vector<1x128xf32>
    %c2 = arith.constant 2 : index
    %c0_6 = arith.constant 0 : index
    %4 = vector.load %arg2[%c2, %c0_6] : memref<3x128xf32, #tpu.memory_space<vmem>>, vector<1x128xf32>
    %c0_7 = arith.constant 0 : index
    %c0_8 = arith.constant 0 : index
    %5 = vector.load %arg3[%c0_7, %c0_8] : memref<1x128xf32, #tpu.memory_space<vmem>>, vector<1x128xf32>
    %c0_9 = arith.constant 0 : index
    %c0_10 = arith.constant 0 : index
    %6 = vector.load %arg4[%c0_9, %c0_10] : memref<1x128xf32, #tpu.memory_space<vmem>>, vector<1x128xf32>
    %cst = arith.constant dense<0.000000e+00> : vector<8x8xf32>
    %7 = vector.multi_reduction <add>, %1, %cst [2] : vector<8x8x128xf32> to vector<8x8xf32>
    %8 = vector.shape_cast %7 : vector<8x8xf32> to vector<8x8x1xf32>
    %cst_11 = arith.constant 1.280000e+02 : f32
    %9 = vector.broadcast %cst_11 : f32 to vector<8x8x1xf32>
    %10 = arith.divf %8, %9 : vector<8x8x1xf32>
    %11 = vector.broadcast %10 : vector<8x8x1xf32> to vector<8x8x128xf32>
    %12 = arith.subf %1, %11 : vector<8x8x128xf32>
    %13 = arith.mulf %12, %12 : vector<8x8x128xf32>
    %cst_12 = arith.constant dense<0.000000e+00> : vector<8x8xf32>
    %14 = vector.multi_reduction <add>, %13, %cst_12 [2] : vector<8x8x128xf32> to vector<8x8xf32>
    %15 = vector.shape_cast %14 : vector<8x8xf32> to vector<8x8x1xf32>
    %cst_13 = arith.constant 1.280000e+02 : f32
    %16 = vector.broadcast %cst_13 : f32 to vector<8x8x1xf32>
    %17 = arith.divf %15, %16 : vector<8x8x1xf32>
    %cst_14 = arith.constant 9.99999974E-6 : f32
    %18 = vector.broadcast %cst_14 : f32 to vector<8x8x1xf32>
    %19 = arith.addf %17, %18 : vector<8x8x1xf32>
    %20 = math.rsqrt %19 : vector<8x8x1xf32>
    %21 = vector.broadcast %20 : vector<8x8x1xf32> to vector<8x8x128xf32>
    %22 = arith.mulf %12, %21 : vector<8x8x128xf32>
    %23 = vector.shape_cast %5 : vector<1x128xf32> to vector<1x1x128xf32>
    %24 = vector.broadcast %23 : vector<1x1x128xf32> to vector<8x8x128xf32>
    %25 = arith.mulf %22, %24 : vector<8x8x128xf32>
    %26 = vector.shape_cast %6 : vector<1x128xf32> to vector<1x1x128xf32>
    %27 = vector.broadcast %26 : vector<1x1x128xf32> to vector<8x8x128xf32>
    %28 = arith.addf %25, %27 : vector<8x8x128xf32>
    %cst_15 = arith.constant 0.000000e+00 : f32
    %29 = vector.broadcast %cst_15 : f32 to vector<10x10x128xf32>
    %c0_16 = arith.constant 0 : index
    %c0_17 = arith.constant 0 : index
    %c0_18 = arith.constant 0 : index
    %30 = vector.load %arg21[%c0_16, %c0_17, %c0_18] : memref<10x10x128xf32, #tpu.memory_space<vmem>>, vector<10x10x128xf32>
    tpu.vector_store %arg21[%c0_16, %c0_17, %c0_18], %29 {strides = array<i32>} : memref<10x10x128xf32, #tpu.memory_space<vmem>>, vector<10x10x128xf32>,
    %c1_19 = arith.constant 1 : index
    %c1_20 = arith.constant 1 : index
    %c0_21 = arith.constant 0 : index
    %31 = vector.load %arg21[%c1_19, %c1_20, %c0_21] : memref<10x10x128xf32, #tpu.memory_space<vmem>>, vector<8x8x128xf32>
    tpu.vector_store %arg21[%c1_19, %c1_20, %c0_21], %28 {strides = array<i32>} : memref<10x10x128xf32, #tpu.memory_space<vmem>>, vector<8x8x128xf32>,
    %c1_22 = arith.constant 1 : index
    %c2_23 = arith.constant 2 : index
    %c0_24 = arith.constant 0 : index
    %32 = vector.load %arg21[%c1_22, %c2_23, %c0_24] : memref<10x10x128xf32, #tpu.memory_space<vmem>>, vector<8x8x128xf32>
    %c1_25 = arith.constant 1 : index
    %c0_26 = arith.constant 0 : index
    %c0_27 = arith.constant 0 : index
    %33 = vector.load %arg21[%c1_25, %c0_26, %c0_27] : memref<10x10x128xf32, #tpu.memory_space<vmem>>, vector<8x8x128xf32>
    %c2_28 = arith.constant 2 : index
    %c1_29 = arith.constant 1 : index
    %c0_30 = arith.constant 0 : index
    %34 = vector.load %arg21[%c2_28, %c1_29, %c0_30] : memref<10x10x128xf32, #tpu.memory_space<vmem>>, vector<8x8x128xf32>
    %c0_31 = arith.constant 0 : index
    %c1_32 = arith.constant 1 : index
    %c0_33 = arith.constant 0 : index
    %35 = vector.load %arg21[%c0_31, %c1_32, %c0_33] : memref<10x10x128xf32, #tpu.memory_space<vmem>>, vector<8x8x128xf32>
    %36 = vector.shape_cast %2 : vector<1x128xf32> to vector<1x1x128xf32>
    %37 = vector.broadcast %36 : vector<1x1x128xf32> to vector<8x8x128xf32>
    %38 = arith.mulf %28, %37 : vector<8x8x128xf32>
    %39 = vector.shape_cast %3 : vector<1x128xf32> to vector<1x1x128xf32>
    %40 = vector.broadcast %39 : vector<1x1x128xf32> to vector<8x8x128xf32>
    %41 = arith.mulf %32, %40 : vector<8x8x128xf32>
    %42 = arith.addf %38, %41 : vector<8x8x128xf32>
    %43 = vector.shape_cast %4 : vector<1x128xf32> to vector<1x1x128xf32>
    %44 = vector.broadcast %43 : vector<1x1x128xf32> to vector<8x8x128xf32>
    %45 = arith.mulf %33, %44 : vector<8x8x128xf32>
    %46 = arith.addf %42, %45 : vector<8x8x128xf32>
    %47 = vector.shape_cast %2 : vector<1x128xf32> to vector<1x1x128xf32>
    %48 = vector.broadcast %47 : vector<1x1x128xf32> to vector<8x8x128xf32>
    %49 = arith.mulf %28, %48 : vector<8x8x128xf32>
    %50 = vector.shape_cast %3 : vector<1x128xf32> to vector<1x1x128xf32>
    %51 = vector.broadcast %50 : vector<1x1x128xf32> to vector<8x8x128xf32>
    %52 = arith.mulf %34, %51 : vector<8x8x128xf32>
    %53 = arith.addf %49, %52 : vector<8x8x128xf32>
    %54 = vector.shape_cast %4 : vector<1x128xf32> to vector<1x1x128xf32>
    %55 = vector.broadcast %54 : vector<1x1x128xf32> to vector<8x8x128xf32>
    %56 = arith.mulf %35, %55 : vector<8x8x128xf32>
    %57 = arith.addf %53, %56 : vector<8x8x128xf32>
    %58 = vector.shape_cast %28 : vector<8x8x128xf32> to vector<64x128xf32>
    %59 = vector.shape_cast %46 : vector<8x8x128xf32> to vector<64x128xf32>
    %c0_34 = arith.constant 0 : index
    %c0_35 = arith.constant 0 : index
    %60 = vector.load %arg5[%c0_34, %c0_35] : memref<128x128xf32, #tpu.memory_space<vmem>>, vector<128x128xf32>
    %cst_36 = arith.constant dense<0.000000e+00> : vector<64x128xf32>
    %61 = tpu.matmul %59, %60, %cst_36 {dimension_numbers = #tpu.dot_dimension_numbers<[1], [0], [0], [1], [0, 0, 1, 1], [], []>} : vector<64x128xf32>, vector<128x128xf32>, vector<64x128xf32> -> vector<64x128xf32>
    %c0_37 = arith.constant 0 : index
    %c0_38 = arith.constant 0 : index
    %62 = vector.load %arg6[%c0_37, %c0_38] : memref<1x128xf32, #tpu.memory_space<vmem>>, vector<1x128xf32>
    %63 = vector.broadcast %62 : vector<1x128xf32> to vector<64x128xf32>
    %64 = arith.addf %61, %63 : vector<64x128xf32>
    %65 = vector.shape_cast %57 : vector<8x8x128xf32> to vector<64x128xf32>
    %c0_39 = arith.constant 0 : index
    %c0_40 = arith.constant 0 : index
    %66 = vector.load %arg7[%c0_39, %c0_40] : memref<128x128xf32, #tpu.memory_space<vmem>>, vector<128x128xf32>
    %cst_41 = arith.constant dense<0.000000e+00> : vector<64x128xf32>
    %67 = tpu.matmul %65, %66, %cst_41 {dimension_numbers = #tpu.dot_dimension_numbers<[1], [0], [0], [1], [0, 0, 1, 1], [], []>} : vector<64x128xf32>, vector<128x128xf32>, vector<64x128xf32> -> vector<64x128xf32>
    %c0_42 = arith.constant 0 : index
    %c0_43 = arith.constant 0 : index
    %68 = vector.load %arg8[%c0_42, %c0_43] : memref<1x128xf32, #tpu.memory_space<vmem>>, vector<1x128xf32>
    %69 = vector.broadcast %68 : vector<1x128xf32> to vector<64x128xf32>
    %70 = arith.addf %67, %69 : vector<64x128xf32>
    %c0_44 = arith.constant 0 : index
    %c0_45 = arith.constant 0 : index
    %71 = vector.load %arg9[%c0_44, %c0_45] : memref<128x128xf32, #tpu.memory_space<vmem>>, vector<128x128xf32>
    %cst_46 = arith.constant dense<0.000000e+00> : vector<64x128xf32>
    %72 = tpu.matmul %58, %71, %cst_46 {dimension_numbers = #tpu.dot_dimension_numbers<[1], [0], [0], [1], [0, 0, 1, 1], [], []>} : vector<64x128xf32>, vector<128x128xf32>, vector<64x128xf32> -> vector<64x128xf32>
    %73 = arith.addf %64, %70 : vector<64x128xf32>
    %74 = arith.addf %73, %72 : vector<64x128xf32>
    %cst_47 = arith.constant dense<0.000000e+00> : vector<128xf32>
    %75 = vector.multi_reduction <add>, %74, %cst_47 [0] : vector<64x128xf32> to vector<128xf32>
    %76 = vector.shape_cast %75 : vector<128xf32> to vector<1x128xf32>
    %cst_48 = arith.constant 6.400000e+01 : f32
    %77 = vector.broadcast %cst_48 : f32 to vector<1x128xf32>
    %78 = arith.divf %76, %77 : vector<1x128xf32>
    %c0_49 = arith.constant 0 : index
    %c0_50 = arith.constant 0 : index
    %79 = vector.load %arg10[%c0_49, %c0_50] : memref<128x32xf32, #tpu.memory_space<vmem>>, vector<128x32xf32>
    %cst_51 = arith.constant dense<0.000000e+00> : vector<1x32xf32>
    %80 = tpu.matmul %78, %79, %cst_51 {dimension_numbers = #tpu.dot_dimension_numbers<[1], [0], [0], [1], [0, 0, 1, 1], [], []>} : vector<1x128xf32>, vector<128x32xf32>, vector<1x32xf32> -> vector<1x32xf32>
    %c0_52 = arith.constant 0 : index
    %c0_53 = arith.constant 0 : index
    %81 = vector.load %arg11[%c0_52, %c0_53] : memref<1x32xf32, #tpu.memory_space<vmem>>, vector<1x32xf32>
    %82 = arith.addf %80, %81 : vector<1x32xf32>
    %cst_54 = arith.constant 5.000000e-01 : f32
    %83 = vector.broadcast %cst_54 : f32 to vector<1x32xf32>
    %84 = arith.mulf %83, %82 : vector<1x32xf32>
    %cst_55 = arith.constant 4.471500e-02 : f32
    %85 = vector.broadcast %cst_55 : f32 to vector<1x32xf32>
    %86 = arith.mulf %85, %82 : vector<1x32xf32>
    %87 = arith.mulf %86, %82 : vector<1x32xf32>
    %88 = arith.mulf %87, %82 : vector<1x32xf32>
    %89 = arith.addf %82, %88 : vector<1x32xf32>
    %cst_56 = arith.constant 0.797884583 : f32
    %90 = vector.broadcast %cst_56 : f32 to vector<1x32xf32>
    %91 = arith.mulf %90, %89 : vector<1x32xf32>
    %92 = math.tanh %91 : vector<1x32xf32>
    %cst_57 = arith.constant 1.000000e+00 : f32
    %93 = vector.broadcast %cst_57 : f32 to vector<1x32xf32>
    %94 = arith.addf %93, %92 : vector<1x32xf32>
    %95 = arith.mulf %84, %94 : vector<1x32xf32>
    %c0_58 = arith.constant 0 : index
    %c0_59 = arith.constant 0 : index
    %c0_60 = arith.constant 0 : index
    %96 = vector.load %arg12[%c0_58, %c0_59, %c0_60] : memref<3x32x128xf32, #tpu.memory_space<vmem>>, vector<1x32x128xf32>
    %97 = vector.shape_cast %96 : vector<1x32x128xf32> to vector<32x128xf32>
    %cst_61 = arith.constant dense<0.000000e+00> : vector<1x128xf32>
    %98 = tpu.matmul %95, %97, %cst_61 {dimension_numbers = #tpu.dot_dimension_numbers<[1], [0], [0], [1], [0, 0, 1, 1], [], []>} : vector<1x32xf32>, vector<32x128xf32>, vector<1x128xf32> -> vector<1x128xf32>
    %c0_62 = arith.constant 0 : index
    %c0_63 = arith.constant 0 : index
    %99 = vector.load %arg13[%c0_62, %c0_63] : memref<3x128xf32, #tpu.memory_space<vmem>>, vector<1x128xf32>
    %100 = arith.addf %98, %99 : vector<1x128xf32>
    %c1_64 = arith.constant 1 : index
    %c0_65 = arith.constant 0 : index
    %c0_66 = arith.constant 0 : index
    %101 = vector.load %arg12[%c1_64, %c0_65, %c0_66] : memref<3x32x128xf32, #tpu.memory_space<vmem>>, vector<1x32x128xf32>
    %102 = vector.shape_cast %101 : vector<1x32x128xf32> to vector<32x128xf32>
    %cst_67 = arith.constant dense<0.000000e+00> : vector<1x128xf32>
    %103 = tpu.matmul %95, %102, %cst_67 {dimension_numbers = #tpu.dot_dimension_numbers<[1], [0], [0], [1], [0, 0, 1, 1], [], []>} : vector<1x32xf32>, vector<32x128xf32>, vector<1x128xf32> -> vector<1x128xf32>
    %c1_68 = arith.constant 1 : index
    %c0_69 = arith.constant 0 : index
    %104 = vector.load %arg13[%c1_68, %c0_69] : memref<3x128xf32, #tpu.memory_space<vmem>>, vector<1x128xf32>
    %105 = arith.addf %103, %104 : vector<1x128xf32>
    %c2_70 = arith.constant 2 : index
    %c0_71 = arith.constant 0 : index
    %c0_72 = arith.constant 0 : index
    %106 = vector.load %arg12[%c2_70, %c0_71, %c0_72] : memref<3x32x128xf32, #tpu.memory_space<vmem>>, vector<1x32x128xf32>
    %107 = vector.shape_cast %106 : vector<1x32x128xf32> to vector<32x128xf32>
    %cst_73 = arith.constant dense<0.000000e+00> : vector<1x128xf32>
    %108 = tpu.matmul %95, %107, %cst_73 {dimension_numbers = #tpu.dot_dimension_numbers<[1], [0], [0], [1], [0, 0, 1, 1], [], []>} : vector<1x32xf32>, vector<32x128xf32>, vector<1x128xf32> -> vector<1x128xf32>
    %c2_74 = arith.constant 2 : index
    %c0_75 = arith.constant 0 : index
    %109 = vector.load %arg13[%c2_74, %c0_75] : memref<3x128xf32, #tpu.memory_space<vmem>>, vector<1x128xf32>
    %110 = arith.addf %108, %109 : vector<1x128xf32>
    %111 = arith.maximumf %100, %105 : vector<1x128xf32>
    %112 = arith.maximumf %111, %110 : vector<1x128xf32>
    %113 = arith.subf %100, %112 : vector<1x128xf32>
    %114 = math.exp %113 : vector<1x128xf32>
    %115 = arith.subf %105, %112 : vector<1x128xf32>
    %116 = math.exp %115 : vector<1x128xf32>
    %117 = arith.subf %110, %112 : vector<1x128xf32>
    %118 = math.exp %117 : vector<1x128xf32>
    %119 = arith.addf %114, %116 : vector<1x128xf32>
    %120 = arith.addf %119, %118 : vector<1x128xf32>
    %cst_76 = arith.constant 1.000000e+00 : f32
    %121 = vector.broadcast %cst_76 : f32 to vector<1x128xf32>
    %122 = arith.divf %121, %120 : vector<1x128xf32>
    %123 = arith.mulf %114, %122 : vector<1x128xf32>
    %124 = arith.mulf %116, %122 : vector<1x128xf32>
    %125 = arith.mulf %118, %122 : vector<1x128xf32>
    %126 = vector.broadcast %123 : vector<1x128xf32> to vector<64x128xf32>
    %127 = arith.mulf %64, %126 : vector<64x128xf32>
    %128 = vector.broadcast %124 : vector<1x128xf32> to vector<64x128xf32>
    %129 = arith.mulf %70, %128 : vector<64x128xf32>
    %130 = arith.addf %127, %129 : vector<64x128xf32>
    %131 = vector.broadcast %125 : vector<1x128xf32> to vector<64x128xf32>
    %132 = arith.mulf %72, %131 : vector<64x128xf32>
    %133 = arith.addf %130, %132 : vector<64x128xf32>
    %c0_77 = arith.constant 0 : index
    %c0_78 = arith.constant 0 : index
    %134 = vector.load %arg14[%c0_77, %c0_78] : memref<128x128xf32, #tpu.memory_space<vmem>>, vector<128x128xf32>
    %cst_79 = arith.constant dense<0.000000e+00> : vector<64x128xf32>
    %135 = tpu.matmul %133, %134, %cst_79 {dimension_numbers = #tpu.dot_dimension_numbers<[1], [0], [0], [1], [0, 0, 1, 1], [], []>} : vector<64x128xf32>, vector<128x128xf32>, vector<64x128xf32> -> vector<64x128xf32>
    %c0_80 = arith.constant 0 : index
    %c0_81 = arith.constant 0 : index
    %136 = vector.load %arg15[%c0_80, %c0_81] : memref<1x128xf32, #tpu.memory_space<vmem>>, vector<1x128xf32>
    %137 = vector.broadcast %136 : vector<1x128xf32> to vector<64x128xf32>
    %138 = arith.addf %135, %137 : vector<64x128xf32>
    %139 = vector.shape_cast %1 : vector<8x8x128xf32> to vector<64x128xf32>
    %cst_82 = arith.constant 1.000000e+00 : f32
    %140 = vector.broadcast %cst_82 : f32 to vector<64x128xf32>
    %141 = arith.mulf %138, %140 : vector<64x128xf32>
    %142 = arith.addf %139, %141 : vector<64x128xf32>
    %cst_83 = arith.constant dense<0.000000e+00> : vector<64xf32>
    %143 = vector.multi_reduction <add>, %142, %cst_83 [1] : vector<64x128xf32> to vector<64xf32>
    %144 = vector.shape_cast %143 : vector<64xf32> to vector<64x1xf32>
    %cst_84 = arith.constant 1.280000e+02 : f32
    %145 = vector.broadcast %cst_84 : f32 to vector<64x1xf32>
    %146 = arith.divf %144, %145 : vector<64x1xf32>
    %147 = vector.broadcast %146 : vector<64x1xf32> to vector<64x128xf32>
    %148 = arith.subf %142, %147 : vector<64x128xf32>
    %149 = arith.mulf %148, %148 : vector<64x128xf32>
    %cst_85 = arith.constant dense<0.000000e+00> : vector<64xf32>
    %150 = vector.multi_reduction <add>, %149, %cst_85 [1] : vector<64x128xf32> to vector<64xf32>
    %151 = vector.shape_cast %150 : vector<64xf32> to vector<64x1xf32>
    %cst_86 = arith.constant 1.280000e+02 : f32
    %152 = vector.broadcast %cst_86 : f32 to vector<64x1xf32>
    %153 = arith.divf %151, %152 : vector<64x1xf32>
    %cst_87 = arith.constant 9.99999974E-6 : f32
    %154 = vector.broadcast %cst_87 : f32 to vector<64x1xf32>
    %155 = arith.addf %153, %154 : vector<64x1xf32>
    %156 = math.rsqrt %155 : vector<64x1xf32>
    %157 = vector.broadcast %156 : vector<64x1xf32> to vector<64x128xf32>
    %158 = arith.mulf %148, %157 : vector<64x128xf32>
    %c0_88 = arith.constant 0 : index
    %c0_89 = arith.constant 0 : index
    %159 = vector.load %arg16[%c0_88, %c0_89] : memref<128x512xf32, #tpu.memory_space<vmem>>, vector<128x512xf32>
    %cst_90 = arith.constant dense<0.000000e+00> : vector<64x512xf32>
    %160 = tpu.matmul %158, %159, %cst_90 {dimension_numbers = #tpu.dot_dimension_numbers<[1], [0], [0], [1], [0, 0, 1, 1], [], []>} : vector<64x128xf32>, vector<128x512xf32>, vector<64x512xf32> -> vector<64x512xf32>
    %c0_91 = arith.constant 0 : index
    %c0_92 = arith.constant 0 : index
    %161 = vector.load %arg17[%c0_91, %c0_92] : memref<1x512xf32, #tpu.memory_space<vmem>>, vector<1x512xf32>
    %162 = vector.broadcast %161 : vector<1x512xf32> to vector<64x512xf32>
    %163 = arith.addf %160, %162 : vector<64x512xf32>
    %cst_93 = arith.constant 5.000000e-01 : f32
    %164 = vector.broadcast %cst_93 : f32 to vector<64x512xf32>
    %165 = arith.mulf %164, %163 : vector<64x512xf32>
    %cst_94 = arith.constant 4.471500e-02 : f32
    %166 = vector.broadcast %cst_94 : f32 to vector<64x512xf32>
    %167 = arith.mulf %166, %163 : vector<64x512xf32>
    %168 = arith.mulf %167, %163 : vector<64x512xf32>
    %169 = arith.mulf %168, %163 : vector<64x512xf32>
    %170 = arith.addf %163, %169 : vector<64x512xf32>
    %cst_95 = arith.constant 0.797884583 : f32
    %171 = vector.broadcast %cst_95 : f32 to vector<64x512xf32>
    %172 = arith.mulf %171, %170 : vector<64x512xf32>
    %173 = math.tanh %172 : vector<64x512xf32>
    %cst_96 = arith.constant 1.000000e+00 : f32
    %174 = vector.broadcast %cst_96 : f32 to vector<64x512xf32>
    %175 = arith.addf %174, %173 : vector<64x512xf32>
    %176 = arith.mulf %165, %175 : vector<64x512xf32>
    %c0_97 = arith.constant 0 : index
    %c0_98 = arith.constant 0 : index
    %177 = vector.load %arg18[%c0_97, %c0_98] : memref<512x128xf32, #tpu.memory_space<vmem>>, vector<512x128xf32>
    %cst_99 = arith.constant dense<0.000000e+00> : vector<64x128xf32>
    %178 = tpu.matmul %176, %177, %cst_99 {dimension_numbers = #tpu.dot_dimension_numbers<[1], [0], [0], [1], [0, 0, 1, 1], [], []>} : vector<64x512xf32>, vector<512x128xf32>, vector<64x128xf32> -> vector<64x128xf32>
    %c0_100 = arith.constant 0 : index
    %c0_101 = arith.constant 0 : index
    %179 = vector.load %arg19[%c0_100, %c0_101] : memref<1x128xf32, #tpu.memory_space<vmem>>, vector<1x128xf32>
    %180 = vector.broadcast %179 : vector<1x128xf32> to vector<64x128xf32>
    %181 = arith.addf %178, %180 : vector<64x128xf32>
    %cst_102 = arith.constant 1.000000e+00 : f32
    %182 = vector.broadcast %cst_102 : f32 to vector<64x128xf32>
    %183 = arith.mulf %181, %182 : vector<64x128xf32>
    %184 = arith.addf %142, %183 : vector<64x128xf32>
    %185 = vector.shape_cast %184 : vector<64x128xf32> to vector<8x8x128xf32>
    %c0_103 = arith.constant 0 : index
    %c0_104 = arith.constant 0 : index
    %c0_105 = arith.constant 0 : index
    %c0_106 = arith.constant 0 : index
    %186 = vector.load %arg20[%c0_103, %c0_104, %c0_105, %c0_106] : memref<1x8x8x128xf32, #tpu.memory_space<vmem>>, vector<1x8x8x128xf32>
    %187 = vector.shape_cast %186 : vector<1x8x8x128xf32> to vector<8x8x128xf32>
    %188 = vector.shape_cast %185 : vector<8x8x128xf32> to vector<1x8x8x128xf32>
    tpu.vector_store %arg20[%c0_103, %c0_104, %c0_105, %c0_106], %188 {strides = array<i32>} : memref<1x8x8x128xf32, #tpu.memory_space<vmem>>, vector<1x8x8x128xf32>,
    return
  }
  func.func @transform_0(%arg0: i32) -> (i32, i32, i32, i32) {
    %c0_i32 = arith.constant 0 : i32
    %c0_i32_0 = arith.constant 0 : i32
    %c0_i32_1 = arith.constant 0 : i32
    %c0_i32_2 = arith.constant 0 : i32
    return %arg0, %c0_i32, %c0_i32_0, %c0_i32_1 : i32, i32, i32, i32
  }
  func.func @transform_1(%arg0: i32) -> (i32, i32) {
    %c0_i32 = arith.constant 0 : i32
    %c0_i32_0 = arith.constant 0 : i32
    %c0_i32_1 = arith.constant 0 : i32
    return %c0_i32, %c0_i32_0 : i32, i32
  }
  func.func @transform_2(%arg0: i32) -> (i32, i32) {
    %c0_i32 = arith.constant 0 : i32
    %c0_i32_0 = arith.constant 0 : i32
    %c0_i32_1 = arith.constant 0 : i32
    return %c0_i32, %c0_i32_0 : i32, i32
  }
  func.func @transform_3(%arg0: i32) -> (i32, i32) {
    %c0_i32 = arith.constant 0 : i32
    %c0_i32_0 = arith.constant 0 : i32
    %c0_i32_1 = arith.constant 0 : i32
    return %c0_i32, %c0_i32_0 : i32, i32
  }
  func.func @transform_4(%arg0: i32) -> (i32, i32) {
    %c0_i32 = arith.constant 0 : i32
    %c0_i32_0 = arith.constant 0 : i32
    %c0_i32_1 = arith.constant 0 : i32
    return %c0_i32, %c0_i32_0 : i32, i32
  }
  func.func @transform_5(%arg0: i32) -> (i32, i32) {
    %c0_i32 = arith.constant 0 : i32
    %c0_i32_0 = arith.constant 0 : i32
    %c0_i32_1 = arith.constant 0 : i32
    return %c0_i32, %c0_i32_0 : i32, i32
  }
  func.func @transform_6(%arg0: i32) -> (i32, i32) {
    %c0_i32 = arith.constant 0 : i32
    %c0_i32_0 = arith.constant 0 : i32
    %c0_i32_1 = arith.constant 0 : i32
    return %c0_i32, %c0_i32_0 : i32, i32
  }
  func.func @transform_7(%arg0: i32) -> (i32, i32) {
    %c0_i32 = arith.constant 0 : i32
    %c0_i32_0 = arith.constant 0 : i32
    %c0_i32_1 = arith.constant 0 : i32
    return %c0_i32, %c0_i32_0 : i32, i32
  }
  func.func @transform_8(%arg0: i32) -> (i32, i32) {
    %c0_i32 = arith.constant 0 : i32
    %c0_i32_0 = arith.constant 0 : i32
    %c0_i32_1 = arith.constant 0 : i32
    return %c0_i32, %c0_i32_0 : i32, i32
  }
  func.func @transform_9(%arg0: i32) -> (i32, i32) {
    %c0_i32 = arith.constant 0 : i32
    %c0_i32_0 = arith.constant 0 : i32
    %c0_i32_1 = arith.constant 0 : i32
    return %c0_i32, %c0_i32_0 : i32, i32
  }
  func.func @transform_10(%arg0: i32) -> (i32, i32) {
    %c0_i32 = arith.constant 0 : i32
    %c0_i32_0 = arith.constant 0 : i32
    %c0_i32_1 = arith.constant 0 : i32
    return %c0_i32, %c0_i32_0 : i32, i32
  }
  func.func @transform_11(%arg0: i32) -> (i32, i32, i32) {
    %c0_i32 = arith.constant 0 : i32
    %c0_i32_0 = arith.constant 0 : i32
    %c0_i32_1 = arith.constant 0 : i32
    %c0_i32_2 = arith.constant 0 : i32
    return %c0_i32, %c0_i32_0, %c0_i32_1 : i32, i32, i32
  }
  func.func @transform_12(%arg0: i32) -> (i32, i32) {
    %c0_i32 = arith.constant 0 : i32
    %c0_i32_0 = arith.constant 0 : i32
    %c0_i32_1 = arith.constant 0 : i32
    return %c0_i32, %c0_i32_0 : i32, i32
  }
  func.func @transform_13(%arg0: i32) -> (i32, i32) {
    %c0_i32 = arith.constant 0 : i32
    %c0_i32_0 = arith.constant 0 : i32
    %c0_i32_1 = arith.constant 0 : i32
    return %c0_i32, %c0_i32_0 : i32, i32
  }
  func.func @transform_14(%arg0: i32) -> (i32, i32) {
    %c0_i32 = arith.constant 0 : i32
    %c0_i32_0 = arith.constant 0 : i32
    %c0_i32_1 = arith.constant 0 : i32
    return %c0_i32, %c0_i32_0 : i32, i32
  }
  func.func @transform_15(%arg0: i32) -> (i32, i32) {
    %c0_i32 = arith.constant 0 : i32
    %c0_i32_0 = arith.constant 0 : i32
    %c0_i32_1 = arith.constant 0 : i32
    return %c0_i32, %c0_i32_0 : i32, i32
  }
  func.func @transform_16(%arg0: i32) -> (i32, i32) {
    %c0_i32 = arith.constant 0 : i32
    %c0_i32_0 = arith.constant 0 : i32
    %c0_i32_1 = arith.constant 0 : i32
    return %c0_i32, %c0_i32_0 : i32, i32
  }
  func.func @transform_17(%arg0: i32) -> (i32, i32) {
    %c0_i32 = arith.constant 0 : i32
    %c0_i32_0 = arith.constant 0 : i32
    %c0_i32_1 = arith.constant 0 : i32
    return %c0_i32, %c0_i32_0 : i32, i32
  }
  func.func @transform_18(%arg0: i32) -> (i32, i32) {
    %c0_i32 = arith.constant 0 : i32
    %c0_i32_0 = arith.constant 0 : i32
    %c0_i32_1 = arith.constant 0 : i32
    return %c0_i32, %c0_i32_0 : i32, i32
  }
  func.func @transform_19(%arg0: i32) -> (i32, i32, i32, i32) {
    %c0_i32 = arith.constant 0 : i32
    %c0_i32_0 = arith.constant 0 : i32
    %c0_i32_1 = arith.constant 0 : i32
    %c0_i32_2 = arith.constant 0 : i32
    return %arg0, %c0_i32, %c0_i32_0, %c0_i32_1 : i32, i32, i32, i32
  }
}

</mosaic_0001>

<llo_original>
// kernel: tpu_custom_call.1
$region0: #{tpu_custom_call.1}
  #allocation0 [shape = 'u32[]', space=smem, size = 0x4, offset = 0x4, fixed_abs, tag = 'smem constant byte address 0x4 - core index']
  #allocation1 [shape = 'u32[144,128]{1,0:T(1,128)}', space=vmem, size = 0x12000, scoped, tag = 'internal scratch']
  #allocation2 [shape = 'f32[10,10,128]{2,1,0:T(8,128)}', space=vmem, size = 0x14000, scoped, tag = 'scratch operand']
  %s0 = inlined_call_operand.vmem [shape: f32[2,8,8,128], index: 0, kind: input, shape index: {}]
  %s1 = inlined_call_operand.vmem [shape: f32[3,128], index: 1, kind: input, shape index: {}]
  %s2 = inlined_call_operand.vmem [shape: f32[1,128], index: 2, kind: input, shape index: {}]
  %s3 = inlined_call_operand.vmem [shape: f32[1,128], index: 3, kind: input, shape index: {}]
  %s4 = inlined_call_operand.hbm [shape: f32[128,128], index: 4, kind: input, shape index: {}]
  %s5 = inlined_call_operand.vmem [shape: f32[1,128], index: 5, kind: input, shape index: {}]
  %s6 = inlined_call_operand.hbm [shape: f32[128,128], index: 6, kind: input, shape index: {}]
  %s7 = inlined_call_operand.vmem [shape: f32[1,128], index: 7, kind: input, shape index: {}]
  %s8 = inlined_call_operand.hbm [shape: f32[128,128], index: 8, kind: input, shape index: {}]
  %s9 = inlined_call_operand.vmem [shape: f32[128,32], index: 9, kind: input, shape index: {}]
  %s10 = inlined_call_operand.vmem [shape: f32[1,32], index: 10, kind: input, shape index: {}]
  %s11 = inlined_call_operand.hbm [shape: f32[3,32,128], index: 11, kind: input, shape index: {}]
  %s12 = inlined_call_operand.vmem [shape: f32[3,128], index: 12, kind: input, shape index: {}]
  %s13 = inlined_call_operand.hbm [shape: f32[128,128], index: 13, kind: input, shape index: {}]
  %s14 = inlined_call_operand.vmem [shape: f32[1,128], index: 14, kind: input, shape index: {}]
  %s15 = inlined_call_operand.hbm [shape: f32[128,512], index: 15, kind: input, shape index: {}]
  %s16 = inlined_call_operand.vmem [shape: f32[1,512], index: 16, kind: input, shape index: {}]
  %s17 = inlined_call_operand.hbm [shape: f32[512,128], index: 17, kind: input, shape index: {}]
  %s18 = inlined_call_operand.vmem [shape: f32[1,128], index: 18, kind: input, shape index: {}]
  %s19 = inlined_call_operand.hbm [shape: f32[2,8,8,128], index: 19, kind: output, shape index: {}]
  %s20 = sld [smem:[#allocation0]]
  $region137: #{tpu_custom_call.1} parent=0
    _
  %s22 = ssub.s32 1, %s20
  %s23 = scalar_select 0, %s22, %s20
  $region1: #{tpu_custom_call.1} parent=0
    #allocation3 [shape = 'u8[65536]{0}', space=vmem, size = 0x10000, scoped, tag = 'input window, operand 4, single buffered']
    #allocation4 [shape = 's32[2]{0}', space=sflag, size = 0x8, scoped, tag = 'scoped memory for tpu_custom_call.1']
    #allocation5 [shape = 's32[2]{0}', space=sflag, size = 0x8, scoped, tag = 'scoped memory for tpu_custom_call.1']
    #allocation6 [shape = 'u8[65536]{0}', space=vmem, size = 0x10000, scoped, tag = 'input window, operand 6, single buffered']
    #allocation7 [shape = 's32[1]{0}', space=sflag, size = 0x4, scoped, tag = 'scoped memory for tpu_custom_call.1']
    #allocation8 [shape = 'u8[65536]{0}', space=vmem, size = 0x10000, scoped, tag = 'input window, operand 8, single buffered']
    #allocation9 [shape = 'u8[49152]{0}', space=vmem, size = 0xc000, scoped, tag = 'input window, operand 11, single buffered']
    #allocation10 [shape = 's32[1]{0}', space=sflag, size = 0x4, scoped, tag = 'scoped memory for tpu_custom_call.1']
    #allocation11 [shape = 'u8[65536]{0}', space=vmem, size = 0x10000, scoped, tag = 'input window, operand 13, single buffered']
    #allocation12 [shape = 'u8[262144]{0}', space=vmem, size = 0x40000, scoped, tag = 'input window, operand 15, single buffered']
    #allocation13 [shape = 's32[1]{0}', space=sflag, size = 0x4, scoped, tag = 'scoped memory for tpu_custom_call.1']
    #allocation14 [shape = 'u8[262144]{0}', space=vmem, size = 0x40000, scoped, tag = 'input window, operand 17, single buffered']
    #allocation15 [shape = 'u8[65536]{0}', space=vmem, size = 0x10000, scoped, tag = 'output window, operand 0']
    %24 = vsyncpa [#allocation4], 0
    %25 = vsyncpa [#allocation7], 0
    %26 = vsyncpa [#allocation10], 0
    %27 = vsyncpa [#allocation13], 0
    %28 = vsyncpa [#allocation5], 0
    %s29 = scalar_lea.sflag [#allocation5], 1
    %30 = vsyncpa %s29, 0
    loop: start=0, step=1, limit=4
    $region2: #{tpu_custom_call.1} parent=1 // loop_pre_header
      _
    $region3: #{tpu_custom_call.1} parent=1 // loop_header
      %s32 = sphi 0, %s36
      %p33 = scmp.ge.s32.totalorder %s32, 4
      %s42 = sphi 0, %s44
      %s45 = sphi 0, %s42
      %s46 = sphi 0, %s45
      %s62 = sphi 0, %s46
      %s66 = sphi 0, %s66
      %s68 = sphi 0, %s66
      %s69 = sphi 0, %s68
      %s83 = sphi 0, %s69
      %s87 = sphi 0, %s87
      %s89 = sphi 0, %s87
      %s90 = sphi 0, %s89
      %s104 = sphi 0, %s90
      %s108 = sphi 0, %s108
      %s110 = sphi 0, %s108
      %s111 = sphi 0, %s110
      %s125 = sphi 0, %s111
      %s129 = sphi 0, %s129
      %s131 = sphi 0, %s129
      %s132 = sphi 0, %s131
      %s146 = sphi 0, %s132
      %s150 = sphi 0, %s150
      %s152 = sphi 0, %s150
      %s153 = sphi 0, %s152
      %s167 = sphi 0, %s153
      %s171 = sphi 0, %s171
      %s173 = sphi 0, %s171
      %s174 = sphi 0, %s173
      %s188 = sphi 0, %s174
      %s192 = sphi 0, %s192
      %s194 = sphi 0, %s192
      %s195 = sphi 0, %s194
      %s209 = sphi 0, %s195
      %s213 = sphi 0, %s213
      %s215 = sphi 0, %s213
      %s216 = sphi 0, %s215
      %s230 = sphi 0, %s216
      %s234 = sphi 0, %s234
      %s236 = sphi 0, %s234
      %s237 = sphi 0, %s236
      %s251 = sphi 0, %s237
      %s255 = sphi 0, %s255
      %s257 = sphi 0, %s255
      %s258 = sphi 0, %s257
      %s272 = sphi 0, %s258
      %s276 = sphi 0, %s276
      %s278 = sphi 0, %s276
      %s279 = sphi 0, %s278
      %s293 = sphi 0, %s279
      %s297 = sphi 0, %s297
      %s299 = sphi 0, %s297
      %s300 = sphi 0, %s299
      %s314 = sphi 0, %s300
      %s318 = sphi 0, %s318
      %s320 = sphi 0, %s318
      %s321 = sphi 0, %s320
      %s335 = sphi 0, %s321
      %s339 = sphi 0, %s339
      %s341 = sphi 0, %s339
      %s342 = sphi 0, %s341
      %s356 = sphi 0, %s342
      %s360 = sphi 0, %s360
      %s362 = sphi 0, %s360
      %s363 = sphi 0, %s362
      %s377 = sphi 0, %s363
      %s381 = sphi 0, %s381
      %s383 = sphi 0, %s381
      %s384 = sphi 0, %s383
      %s398 = sphi 0, %s384
      %s402 = sphi 0, %s402
      %s404 = sphi 0, %s402
      %s405 = sphi 0, %s404
      %s419 = sphi 0, %s405
      %s423 = sphi 0, %s423
      %s425 = sphi 0, %s423
      %s426 = sphi 0, %s425
      %s440 = sphi 0, %s426
      %s446 = sphi 0, %s448
      %s449 = sphi 0, %s446
      %s450 = sphi 0, %s449
      %s466 = sphi 0, %s450
    $region4: #{tpu_custom_call.1} parent=1 // loop_header_branch
      %35 = sbr.rel (%p33) target = $region8
    $region5: #{tpu_custom_call.1} parent=1 // loop_body
      %s37 = ssub.s32 %s32, 1
      %s38 = ssub.s32 %s32, 2
      %s39 = sadd.s32 %s32, 1
      %s40 = ssub.s32 %s32, %s39
      %p41 = scmp.eq.s32.totalorder %s40, 0
      %s43 = sadd.s32 %s42, 1
      %s44 = scalar_select %p41, %s42, %s43
      %p47 = pneg %p41
      %p48 = scmp.eq.s32.totalorder %s32, 1
      %p49 = por %p47, %p48
      %p50 = scmp.ne.s32.totalorder %s42, %s45
      %p51 = scmp.eq.s32.totalorder %s32, 0
      %p52 = por %p50, %p51
      %p53 = scmp.ne.s32.totalorder %s42, %s45
      %p54 = scmp.eq.s32.totalorder %s37, 1
      %p55 = por %p53, %p54
      %p56 = scmp.ne.s32.totalorder %s45, %s46
      %p57 = scmp.eq.s32.totalorder %s37, 0
      %p58 = por %p56, %p57
      %p59 = scmp.ne.s32.totalorder %s45, %s46
      %p60 = scmp.eq.s32.totalorder %s38, 1
      %p61 = por %p59, %p60
      %p63 = scmp.ne.s32.totalorder %s46, %s62
      %p64 = scmp.eq.s32.totalorder %s38, 0
      %p65 = por %p63, %p64
      %s67 = sadd.s32 %s66, 1
      %p70 = scmp.eq.s32.totalorder %s32, 1
      %p71 = scmp.ne.s32.totalorder %s66, %s68
      %p72 = scmp.eq.s32.totalorder %s32, 0
      %p73 = por %p71, %p72
      %p74 = scmp.ne.s32.totalorder %s66, %s68
      %p75 = scmp.eq.s32.totalorder %s37, 1
      %p76 = por %p74, %p75
      %p77 = scmp.ne.s32.totalorder %s68, %s69
      %p78 = scmp.eq.s32.totalorder %s37, 0
      %p79 = por %p77, %p78
      %p80 = scmp.ne.s32.totalorder %s68, %s69
      %p81 = scmp.eq.s32.totalorder %s38, 1
      %p82 = por %p80, %p81
      %p84 = scmp.ne.s32.totalorder %s69, %s83
      %p85 = scmp.eq.s32.totalorder %s38, 0
      %p86 = por %p84, %p85
      %s88 = sadd.s32 %s87, 1
      %p91 = scmp.eq.s32.totalorder %s32, 1
      %p92 = scmp.ne.s32.totalorder %s87, %s89
      %p93 = scmp.eq.s32.totalorder %s32, 0
      %p94 = por %p92, %p93
      %p95 = scmp.ne.s32.totalorder %s87, %s89
      %p96 = scmp.eq.s32.totalorder %s37, 1
      %p97 = por %p95, %p96
      %p98 = scmp.ne.s32.totalorder %s89, %s90
      %p99 = scmp.eq.s32.totalorder %s37, 0
      %p100 = por %p98, %p99
      %p101 = scmp.ne.s32.totalorder %s89, %s90
      %p102 = scmp.eq.s32.totalorder %s38, 1
      %p103 = por %p101, %p102
      %p105 = scmp.ne.s32.totalorder %s90, %s104
      %p106 = scmp.eq.s32.totalorder %s38, 0
      %p107 = por %p105, %p106
      %s109 = sadd.s32 %s108, 1
      %p112 = scmp.eq.s32.totalorder %s32, 1
      %p113 = scmp.ne.s32.totalorder %s108, %s110
      %p114 = scmp.eq.s32.totalorder %s32, 0
      %p115 = por %p113, %p114
      %p116 = scmp.ne.s32.totalorder %s108, %s110
      %p117 = scmp.eq.s32.totalorder %s37, 1
      %p118 = por %p116, %p117
      %p119 = scmp.ne.s32.totalorder %s110, %s111
      %p120 = scmp.eq.s32.totalorder %s37, 0
      %p121 = por %p119, %p120
      %p122 = scmp.ne.s32.totalorder %s110, %s111
      %p123 = scmp.eq.s32.totalorder %s38, 1
      %p124 = por %p122, %p123
      %p126 = scmp.ne.s32.totalorder %s111, %s125
      %p127 = scmp.eq.s32.totalorder %s38, 0
      %p128 = por %p126, %p127
      %s130 = sadd.s32 %s129, 1
      %p133 = scmp.eq.s32.totalorder %s32, 1
      %p134 = scmp.ne.s32.totalorder %s129, %s131
      %p135 = scmp.eq.s32.totalorder %s32, 0
      %p136 = por %p134, %p135
      %p137 = scmp.ne.s32.totalorder %s129, %s131
      %p138 = scmp.eq.s32.totalorder %s37, 1
      %p139 = por %p137, %p138
      %p140 = scmp.ne.s32.totalorder %s131, %s132
      %p141 = scmp.eq.s32.totalorder %s37, 0
      %p142 = por %p140, %p141
      %p143 = scmp.ne.s32.totalorder %s131, %s132
      %p144 = scmp.eq.s32.totalorder %s38, 1
      %p145 = por %p143, %p144
      %p147 = scmp.ne.s32.totalorder %s132, %s146
      %p148 = scmp.eq.s32.totalorder %s38, 0
      %p149 = por %p147, %p148
      %s151 = sadd.s32 %s150, 1
      %p154 = scmp.eq.s32.totalorder %s32, 1
      %p155 = scmp.ne.s32.totalorder %s150, %s152
      %p156 = scmp.eq.s32.totalorder %s32, 0
      %p157 = por %p155, %p156
      %p158 = scmp.ne.s32.totalorder %s150, %s152
      %p159 = scmp.eq.s32.totalorder %s37, 1
      %p160 = por %p158, %p159
      %p161 = scmp.ne.s32.totalorder %s152, %s153
      %p162 = scmp.eq.s32.totalorder %s37, 0
      %p163 = por %p161, %p162
      %p164 = scmp.ne.s32.totalorder %s152, %s153
      %p165 = scmp.eq.s32.totalorder %s38, 1
      %p166 = por %p164, %p165
      %p168 = scmp.ne.s32.totalorder %s153, %s167
      %p169 = scmp.eq.s32.totalorder %s38, 0
      %p170 = por %p168, %p169
      %s172 = sadd.s32 %s171, 1
      %p175 = scmp.eq.s32.totalorder %s32, 1
      %p176 = scmp.ne.s32.totalorder %s171, %s173
      %p177 = scmp.eq.s32.totalorder %s32, 0
      %p178 = por %p176, %p177
      %p179 = scmp.ne.s32.totalorder %s171, %s173
      %p180 = scmp.eq.s32.totalorder %s37, 1
      %p181 = por %p179, %p180
      %p182 = scmp.ne.s32.totalorder %s173, %s174
      %p183 = scmp.eq.s32.totalorder %s37, 0
      %p184 = por %p182, %p183
      %p185 = scmp.ne.s32.totalorder %s173, %s174
      %p186 = scmp.eq.s32.totalorder %s38, 1
      %p187 = por %p185, %p186
      %p189 = scmp.ne.s32.totalorder %s174, %s188
      %p190 = scmp.eq.s32.totalorder %s38, 0
      %p191 = por %p189, %p190
      %s193 = sadd.s32 %s192, 1
      %p196 = scmp.eq.s32.totalorder %s32, 1
      %p197 = scmp.ne.s32.totalorder %s192, %s194
      %p198 = scmp.eq.s32.totalorder %s32, 0
      %p199 = por %p197, %p198
      %p200 = scmp.ne.s32.totalorder %s192, %s194
      %p201 = scmp.eq.s32.totalorder %s37, 1
      %p202 = por %p200, %p201
      %p203 = scmp.ne.s32.totalorder %s194, %s195
      %p204 = scmp.eq.s32.totalorder %s37, 0
      %p205 = por %p203, %p204
      %p206 = scmp.ne.s32.totalorder %s194, %s195
      %p207 = scmp.eq.s32.totalorder %s38, 1
      %p208 = por %p206, %p207
      %p210 = scmp.ne.s32.totalorder %s195, %s209
      %p211 = scmp.eq.s32.totalorder %s38, 0
      %p212 = por %p210, %p211
      %s214 = sadd.s32 %s213, 1
      %p217 = scmp.eq.s32.totalorder %s32, 1
      %p218 = scmp.ne.s32.totalorder %s213, %s215
      %p219 = scmp.eq.s32.totalorder %s32, 0
      %p220 = por %p218, %p219
      %p221 = scmp.ne.s32.totalorder %s213, %s215
      %p222 = scmp.eq.s32.totalorder %s37, 1
      %p223 = por %p221, %p222
      %p224 = scmp.ne.s32.totalorder %s215, %s216
      %p225 = scmp.eq.s32.totalorder %s37, 0
      %p226 = por %p224, %p225
      %p227 = scmp.ne.s32.totalorder %s215, %s216
      %p228 = scmp.eq.s32.totalorder %s38, 1
      %p229 = por %p227, %p228
      %p231 = scmp.ne.s32.totalorder %s216, %s230
      %p232 = scmp.eq.s32.totalorder %s38, 0
      %p233 = por %p231, %p232
      %s235 = sadd.s32 %s234, 1
      %p238 = scmp.eq.s32.totalorder %s32, 1
      %p239 = scmp.ne.s32.totalorder %s234, %s236
      %p240 = scmp.eq.s32.totalorder %s32, 0
      %p241 = por %p239, %p240
      %p242 = scmp.ne.s32.totalorder %s234, %s236
      %p243 = scmp.eq.s32.totalorder %s37, 1
      %p244 = por %p242, %p243
      %p245 = scmp.ne.s32.totalorder %s236, %s237
      %p246 = scmp.eq.s32.totalorder %s37, 0
      %p247 = por %p245, %p246
      %p248 = scmp.ne.s32.totalorder %s236, %s237
      %p249 = scmp.eq.s32.totalorder %s38, 1
      %p250 = por %p248, %p249
      %p252 = scmp.ne.s32.totalorder %s237, %s251
      %p253 = scmp.eq.s32.totalorder %s38, 0
      %p254 = por %p252, %p253
      %s256 = sadd.s32 %s255, 1
      %p259 = scmp.eq.s32.totalorder %s32, 1
      %p260 = scmp.ne.s32.totalorder %s255, %s257
      %p261 = scmp.eq.s32.totalorder %s32, 0
      %p262 = por %p260, %p261
      %p263 = scmp.ne.s32.totalorder %s255, %s257
      %p264 = scmp.eq.s32.totalorder %s37, 1
      %p265 = por %p263, %p264
      %p266 = scmp.ne.s32.totalorder %s257, %s258
      %p267 = scmp.eq.s32.totalorder %s37, 0
      %p268 = por %p266, %p267
      %p269 = scmp.ne.s32.totalorder %s257, %s258
      %p270 = scmp.eq.s32.totalorder %s38, 1
      %p271 = por %p269, %p270
      %p273 = scmp.ne.s32.totalorder %s258, %s272
      %p274 = scmp.eq.s32.totalorder %s38, 0
      %p275 = por %p273, %p274
      %s277 = sadd.s32 %s276, 1
      %p280 = scmp.eq.s32.totalorder %s32, 1
      %p281 = scmp.ne.s32.totalorder %s276, %s278
      %p282 = scmp.eq.s32.totalorder %s32, 0
      %p283 = por %p281, %p282
      %p284 = scmp.ne.s32.totalorder %s276, %s278
      %p285 = scmp.eq.s32.totalorder %s37, 1
      %p286 = por %p284, %p285
      %p287 = scmp.ne.s32.totalorder %s278, %s279
      %p288 = scmp.eq.s32.totalorder %s37, 0
      %p289 = por %p287, %p288
      %p290 = scmp.ne.s32.totalorder %s278, %s279
      %p291 = scmp.eq.s32.totalorder %s38, 1
      %p292 = por %p290, %p291
      %p294 = scmp.ne.s32.totalorder %s279, %s293
      %p295 = scmp.eq.s32.totalorder %s38, 0
      %p296 = por %p294, %p295
      %s298 = sadd.s32 %s297, 1
      %p301 = scmp.eq.s32.totalorder %s32, 1
      %p302 = scmp.ne.s32.totalorder %s297, %s299
      %p303 = scmp.eq.s32.totalorder %s32, 0
      %p304 = por %p302, %p303
      %p305 = scmp.ne.s32.totalorder %s297, %s299
      %p306 = scmp.eq.s32.totalorder %s37, 1
      %p307 = por %p305, %p306
      %p308 = scmp.ne.s32.totalorder %s299, %s300
      %p309 = scmp.eq.s32.totalorder %s37, 0
      %p310 = por %p308, %p309
      %p311 = scmp.ne.s32.totalorder %s299, %s300
      %p312 = scmp.eq.s32.totalorder %s38, 1
      %p313 = por %p311, %p312
      %p315 = scmp.ne.s32.totalorder %s300, %s314
      %p316 = scmp.eq.s32.totalorder %s38, 0
      %p317 = por %p315, %p316
      %s319 = sadd.s32 %s318, 1
      %p322 = scmp.eq.s32.totalorder %s32, 1
      %p323 = scmp.ne.s32.totalorder %s318, %s320
      %p324 = scmp.eq.s32.totalorder %s32, 0
      %p325 = por %p323, %p324
      %p326 = scmp.ne.s32.totalorder %s318, %s320
      %p327 = scmp.eq.s32.totalorder %s37, 1
      %p328 = por %p326, %p327
      %p329 = scmp.ne.s32.totalorder %s320, %s321
      %p330 = scmp.eq.s32.totalorder %s37, 0
      %p331 = por %p329, %p330
      %p332 = scmp.ne.s32.totalorder %s320, %s321
      %p333 = scmp.eq.s32.totalorder %s38, 1
      %p334 = por %p332, %p333
      %p336 = scmp.ne.s32.totalorder %s321, %s335
      %p337 = scmp.eq.s32.totalorder %s38, 0
      %p338 = por %p336, %p337
      %s340 = sadd.s32 %s339, 1
      %p343 = scmp.eq.s32.totalorder %s32, 1
      %p344 = scmp.ne.s32.totalorder %s339, %s341
      %p345 = scmp.eq.s32.totalorder %s32, 0
      %p346 = por %p344, %p345
      %p347 = scmp.ne.s32.totalorder %s339, %s341
      %p348 = scmp.eq.s32.totalorder %s37, 1
      %p349 = por %p347, %p348
      %p350 = scmp.ne.s32.totalorder %s341, %s342
      %p351 = scmp.eq.s32.totalorder %s37, 0
      %p352 = por %p350, %p351
      %p353 = scmp.ne.s32.totalorder %s341, %s342
      %p354 = scmp.eq.s32.totalorder %s38, 1
      %p355 = por %p353, %p354
      %p357 = scmp.ne.s32.totalorder %s342, %s356
      %p358 = scmp.eq.s32.totalorder %s38, 0
      %p359 = por %p357, %p358
      %s361 = sadd.s32 %s360, 1
      %p364 = scmp.eq.s32.totalorder %s32, 1
      %p365 = scmp.ne.s32.totalorder %s360, %s362
      %p366 = scmp.eq.s32.totalorder %s32, 0
      %p367 = por %p365, %p366
      %p368 = scmp.ne.s32.totalorder %s360, %s362
      %p369 = scmp.eq.s32.totalorder %s37, 1
      %p370 = por %p368, %p369
      %p371 = scmp.ne.s32.totalorder %s362, %s363
      %p372 = scmp.eq.s32.totalorder %s37, 0
      %p373 = por %p371, %p372
      %p374 = scmp.ne.s32.totalorder %s362, %s363
      %p375 = scmp.eq.s32.totalorder %s38, 1
      %p376 = por %p374, %p375
      %p378 = scmp.ne.s32.totalorder %s363, %s377
      %p379 = scmp.eq.s32.totalorder %s38, 0
      %p380 = por %p378, %p379
      %s382 = sadd.s32 %s381, 1
      %p385 = scmp.eq.s32.totalorder %s32, 1
      %p386 = scmp.ne.s32.totalorder %s381, %s383
      %p387 = scmp.eq.s32.totalorder %s32, 0
      %p388 = por %p386, %p387
      %p389 = scmp.ne.s32.totalorder %s381, %s383
      %p390 = scmp.eq.s32.totalorder %s37, 1
      %p391 = por %p389, %p390
      %p392 = scmp.ne.s32.totalorder %s383, %s384
      %p393 = scmp.eq.s32.totalorder %s37, 0
      %p394 = por %p392, %p393
      %p395 = scmp.ne.s32.totalorder %s383, %s384
      %p396 = scmp.eq.s32.totalorder %s38, 1
      %p397 = por %p395, %p396
      %p399 = scmp.ne.s32.totalorder %s384, %s398
      %p400 = scmp.eq.s32.totalorder %s38, 0
      %p401 = por %p399, %p400
      %s403 = sadd.s32 %s402, 1
      %p406 = scmp.eq.s32.totalorder %s32, 1
      %p407 = scmp.ne.s32.totalorder %s402, %s404
      %p408 = scmp.eq.s32.totalorder %s32, 0
      %p409 = por %p407, %p408
      %p410 = scmp.ne.s32.totalorder %s402, %s404
      %p411 = scmp.eq.s32.totalorder %s37, 1
      %p412 = por %p410, %p411
      %p413 = scmp.ne.s32.totalorder %s404, %s405
      %p414 = scmp.eq.s32.totalorder %s37, 0
      %p415 = por %p413, %p414
      %p416 = scmp.ne.s32.totalorder %s404, %s405
      %p417 = scmp.eq.s32.totalorder %s38, 1
      %p418 = por %p416, %p417
      %p420 = scmp.ne.s32.totalorder %s405, %s419
      %p421 = scmp.eq.s32.totalorder %s38, 0
      %p422 = por %p420, %p421
      %s424 = sadd.s32 %s423, 1
      %p427 = scmp.eq.s32.totalorder %s32, 1
      %p428 = scmp.ne.s32.totalorder %s423, %s425
      %p429 = scmp.eq.s32.totalorder %s32, 0
      %p430 = por %p428, %p429
      %p431 = scmp.ne.s32.totalorder %s423, %s425
      %p432 = scmp.eq.s32.totalorder %s37, 1
      %p433 = por %p431, %p432
      %p434 = scmp.ne.s32.totalorder %s425, %s426
      %p435 = scmp.eq.s32.totalorder %s37, 0
      %p436 = por %p434, %p435
      %p437 = scmp.ne.s32.totalorder %s425, %s426
      %p438 = scmp.eq.s32.totalorder %s38, 1
      %p439 = por %p437, %p438
      %p441 = scmp.ne.s32.totalorder %s426, %s440
      %p442 = scmp.eq.s32.totalorder %s38, 0
      %p443 = por %p441, %p442
      %s444 = ssub.s32 %s32, %s39
      %p445 = scmp.eq.s32.totalorder %s444, 0
      %s447 = sadd.s32 %s446, 1
      %s448 = scalar_select %p445, %s446, %s447
      %p451 = pneg %p445
      %p452 = scmp.eq.s32.totalorder %s32, 1
      %p453 = por %p451, %p452
      %p454 = scmp.ne.s32.totalorder %s446, %s449
      %p455 = scmp.eq.s32.totalorder %s32, 0
      %p456 = por %p454, %p455
      %p457 = scmp.ne.s32.totalorder %s446, %s449
      %p458 = scmp.eq.s32.totalorder %s37, 1
      %p459 = por %p457, %p458
      %p460 = scmp.ne.s32.totalorder %s449, %s450
      %p461 = scmp.eq.s32.totalorder %s37, 0
      %p462 = por %p460, %p461
      %p463 = scmp.ne.s32.totalorder %s449, %s450
      %p464 = scmp.eq.s32.totalorder %s38, 1
      %p465 = por %p463, %p464
      %p467 = scmp.ne.s32.totalorder %s450, %s466
      %p468 = scmp.eq.s32.totalorder %s38, 0
      %p469 = por %p467, %p468
      %p470 = scmp.le.s32.totalorder 1, %s32
      %p471 = scmp.lt.s32.totalorder %s32, 3
      %p472 = pnand %p470, %p471
      %p473 = pneg %p472
      // Predicated region
      $region9: #{tpu_custom_call.1} parent=5 // pred_check
        _
      $region10: #{tpu_custom_call.1} parent=5 // pred_check_branch
        %475 = sbr.rel (%p472) target = $region12
      $region11: #{tpu_custom_call.1} parent=5 // pred_region
        %s476 = ssub.s32 %s32, 1
        // Predicated region
        $region13: #{tpu_custom_call.1} parent=11 // pred_check
          %p477 = pneg %p79
        $region14: #{tpu_custom_call.1} parent=11 // pred_check_branch
          %479 = sbr.rel (%p477) target = $region16
        $region15: #{tpu_custom_call.1} parent=11 // pred_region
          _
        $region16: #{tpu_custom_call.1} parent=11 // pred_fallthru
          _
        // Predicated region
        $region17: #{tpu_custom_call.1} parent=11 // pred_check
          %p480 = pneg %p100
        $region18: #{tpu_custom_call.1} parent=11 // pred_check_branch
          %482 = sbr.rel (%p480) target = $region20
        $region19: #{tpu_custom_call.1} parent=11 // pred_region
          _
        $region20: #{tpu_custom_call.1} parent=11 // pred_fallthru
          _
        // Predicated region
        $region21: #{tpu_custom_call.1} parent=11 // pred_check
          %p483 = pneg %p121
        $region22: #{tpu_custom_call.1} parent=11 // pred_check_branch
          %485 = sbr.rel (%p483) target = $region24
        $region23: #{tpu_custom_call.1} parent=11 // pred_region
          _
        $region24: #{tpu_custom_call.1} parent=11 // pred_fallthru
          _
        // Predicated region
        $region25: #{tpu_custom_call.1} parent=11 // pred_check
          %p486 = pneg %p142
        $region26: #{tpu_custom_call.1} parent=11 // pred_check_branch
          %488 = sbr.rel (%p486) target = $region28
        $region27: #{tpu_custom_call.1} parent=11 // pred_region
          %s490 = ssub.s32 2048, 2048
          %491 = vsyncadd [#allocation4], %s490
          %s492 = sshll.u32 [#allocation3], 4
          %s493 = int_to_ptr.vmem [resolvable:$true] %s492
          %498 = dma.hbm_to_vmem [thread:$0]  %s4, 2048, %s493, [#allocation4], 128, 128, 8
        $region28: #{tpu_custom_call.1} parent=11 // pred_fallthru
          _
        // Predicated region
        $region29: #{tpu_custom_call.1} parent=11 // pred_check
          %p499 = pneg %p163
        $region30: #{tpu_custom_call.1} parent=11 // pred_check_branch
          %501 = sbr.rel (%p499) target = $region32
        $region31: #{tpu_custom_call.1} parent=11 // pred_region
          _
        $region32: #{tpu_custom_call.1} parent=11 // pred_fallthru
          _
        // Predicated region
        $region33: #{tpu_custom_call.1} parent=11 // pred_check
          %p502 = pneg %p184
        $region34: #{tpu_custom_call.1} parent=11 // pred_check_branch
          %504 = sbr.rel (%p502) target = $region36
        $region35: #{tpu_custom_call.1} parent=11 // pred_region
          %s506 = ssub.s32 2048, 2048
          %507 = vsyncadd [#allocation7], %s506
          %s508 = sshll.u32 [#allocation6], 4
          %s509 = int_to_ptr.vmem [resolvable:$true] %s508
          %514 = dma.hbm_to_vmem [thread:$0]  %s6, 2048, %s509, [#allocation7], 128, 128, 8
        $region36: #{tpu_custom_call.1} parent=11 // pred_fallthru
          _
        // Predicated region
        $region37: #{tpu_custom_call.1} parent=11 // pred_check
          %p515 = pneg %p205
        $region38: #{tpu_custom_call.1} parent=11 // pred_check_branch
          %517 = sbr.rel (%p515) target = $region40
        $region39: #{tpu_custom_call.1} parent=11 // pred_region
          _
        $region40: #{tpu_custom_call.1} parent=11 // pred_fallthru
          _
        // Predicated region
        $region41: #{tpu_custom_call.1} parent=11 // pred_check
          %p518 = pneg %p226
        $region42: #{tpu_custom_call.1} parent=11 // pred_check_branch
          %520 = sbr.rel (%p518) target = $region44
        $region43: #{tpu_custom_call.1} parent=11 // pred_region
          %s522 = ssub.s32 2048, 2048
          %523 = vsyncadd [#allocation7], %s522
          %s524 = sshll.u32 [#allocation8], 4
          %s525 = int_to_ptr.vmem [resolvable:$true] %s524
          %530 = dma.hbm_to_vmem [thread:$0]  %s8, 2048, %s525, [#allocation7], 128, 128, 8
        $region44: #{tpu_custom_call.1} parent=11 // pred_fallthru
          _
        // Predicated region
        $region45: #{tpu_custom_call.1} parent=11 // pred_check
          %p531 = pneg %p247
        $region46: #{tpu_custom_call.1} parent=11 // pred_check_branch
          %533 = sbr.rel (%p531) target = $region48
        $region47: #{tpu_custom_call.1} parent=11 // pred_region
          _
        $region48: #{tpu_custom_call.1} parent=11 // pred_fallthru
          _
        // Predicated region
        $region49: #{tpu_custom_call.1} parent=11 // pred_check
          %p534 = pneg %p268
        $region50: #{tpu_custom_call.1} parent=11 // pred_check_branch
          %536 = sbr.rel (%p534) target = $region52
        $region51: #{tpu_custom_call.1} parent=11 // pred_region
          _
        $region52: #{tpu_custom_call.1} parent=11 // pred_fallthru
          _
        // Predicated region
        $region53: #{tpu_custom_call.1} parent=11 // pred_check
          %p537 = pneg %p289
        $region54: #{tpu_custom_call.1} parent=11 // pred_check_branch
          %539 = sbr.rel (%p537) target = $region56
        $region55: #{tpu_custom_call.1} parent=11 // pred_region
          %s541 = ssub.s32 1536, 1536
          %542 = vsyncadd [#allocation10], %s541
          %s543 = sshll.u32 [#allocation9], 4
          %s544 = int_to_ptr.vmem [resolvable:$true] %s543
          %549 = dma.hbm_to_vmem [thread:$0]  %s11, 1536, %s544, [#allocation10], 128, 128, 8
        $region56: #{tpu_custom_call.1} parent=11 // pred_fallthru
          _
        // Predicated region
        $region57: #{tpu_custom_call.1} parent=11 // pred_check
          %p550 = pneg %p310
        $region58: #{tpu_custom_call.1} parent=11 // pred_check_branch
          %552 = sbr.rel (%p550) target = $region60
        $region59: #{tpu_custom_call.1} parent=11 // pred_region
          _
        $region60: #{tpu_custom_call.1} parent=11 // pred_fallthru
          _
        // Predicated region
        $region61: #{tpu_custom_call.1} parent=11 // pred_check
          %p553 = pneg %p331
        $region62: #{tpu_custom_call.1} parent=11 // pred_check_branch
          %555 = sbr.rel (%p553) target = $region64
        $region63: #{tpu_custom_call.1} parent=11 // pred_region
          %s557 = ssub.s32 2048, 2048
          %558 = vsyncadd [#allocation10], %s557
          %s559 = sshll.u32 [#allocation11], 4
          %s560 = int_to_ptr.vmem [resolvable:$true] %s559
          %565 = dma.hbm_to_vmem [thread:$0]  %s13, 2048, %s560, [#allocation10], 128, 128, 8
        $region64: #{tpu_custom_call.1} parent=11 // pred_fallthru
          _
        // Predicated region
        $region65: #{tpu_custom_call.1} parent=11 // pred_check
          %p566 = pneg %p352
        $region66: #{tpu_custom_call.1} parent=11 // pred_check_branch
          %568 = sbr.rel (%p566) target = $region68
        $region67: #{tpu_custom_call.1} parent=11 // pred_region
          _
        $region68: #{tpu_custom_call.1} parent=11 // pred_fallthru
          _
        // Predicated region
        $region69: #{tpu_custom_call.1} parent=11 // pred_check
          %p569 = pneg %p373
        $region70: #{tpu_custom_call.1} parent=11 // pred_check_branch
          %571 = sbr.rel (%p569) target = $region72
        $region71: #{tpu_custom_call.1} parent=11 // pred_region
          %s573 = ssub.s32 8192, 8192
          %574 = vsyncadd [#allocation13], %s573
          %s575 = sshll.u32 [#allocation12], 4
          %s576 = int_to_ptr.vmem [resolvable:$true] %s575
          %581 = dma.hbm_to_vmem [thread:$0]  %s15, 8192, %s576, [#allocation13], 512, 512, 32
        $region72: #{tpu_custom_call.1} parent=11 // pred_fallthru
          _
        // Predicated region
        $region73: #{tpu_custom_call.1} parent=11 // pred_check
          %p582 = pneg %p394
        $region74: #{tpu_custom_call.1} parent=11 // pred_check_branch
          %584 = sbr.rel (%p582) target = $region76
        $region75: #{tpu_custom_call.1} parent=11 // pred_region
          _
        $region76: #{tpu_custom_call.1} parent=11 // pred_fallthru
          _
        // Predicated region
        $region77: #{tpu_custom_call.1} parent=11 // pred_check
          %p585 = pneg %p415
        $region78: #{tpu_custom_call.1} parent=11 // pred_check_branch
          %587 = sbr.rel (%p585) target = $region80
        $region79: #{tpu_custom_call.1} parent=11 // pred_region
          %s589 = ssub.s32 8192, 8192
          %590 = vsyncadd [#allocation13], %s589
          %s591 = sshll.u32 [#allocation14], 4
          %s592 = int_to_ptr.vmem [resolvable:$true] %s591
          %597 = dma.hbm_to_vmem [thread:$0]  %s17, 8192, %s592, [#allocation13], 128, 128, 8
        $region80: #{tpu_custom_call.1} parent=11 // pred_fallthru
          _
        // Predicated region
        $region81: #{tpu_custom_call.1} parent=11 // pred_check
          %p598 = pneg %p436
        $region82: #{tpu_custom_call.1} parent=11 // pred_check_branch
          %600 = sbr.rel (%p598) target = $region84
        $region83: #{tpu_custom_call.1} parent=11 // pred_region
          _
        $region84: #{tpu_custom_call.1} parent=11 // pred_fallthru
          _
      $region12: #{tpu_custom_call.1} parent=5 // pred_fallthru
        _
      %p601 = scmp.lt.s32.totalorder %s32, 2
      // Predicated region
      $region85: #{tpu_custom_call.1} parent=5 // pred_check
        %p602 = pneg %p601
      $region86: #{tpu_custom_call.1} parent=5 // pred_check_branch
        %604 = sbr.rel (%p602) target = $region88
      $region87: #{tpu_custom_call.1} parent=5 // pred_region
        // Predicated region
        $region89: #{tpu_custom_call.1} parent=87 // pred_check
          %p605 = pneg %p52
        $region90: #{tpu_custom_call.1} parent=87 // pred_check_branch
          %607 = sbr.rel (%p605) target = $region92
        $region91: #{tpu_custom_call.1} parent=87 // pred_region
          %p608 = scmp.lt.s32.totalorder %s32, 1
          %s609 = scalar_select %p608, %s32, 1
          %s610 = smul.addr %s609, 8
          %s611 = smul.addr %s610, 8
          %s612 = scalar_lea.vmem %s0, %s611
        $region92: #{tpu_custom_call.1} parent=87 // pred_fallthru
          _
      $region88: #{tpu_custom_call.1} parent=5 // pred_fallthru
        _
      %p613 = scmp.le.s32.totalorder 1, %s32
      %p614 = scmp.lt.s32.totalorder %s32, 3
      %p615 = pnand %p613, %p614
      %p616 = pneg %p615
      // Predicated region
      $region93: #{tpu_custom_call.1} parent=5 // pred_check
        _
      $region94: #{tpu_custom_call.1} parent=5 // pred_check_branch
        %618 = sbr.rel (%p615) target = $region96
      $region95: #{tpu_custom_call.1} parent=5 // pred_region
        %s619 = ssub.s32 %s32, 1
        // Predicated region
        $region97: #{tpu_custom_call.1} parent=95 // pred_check
          %p620 = pneg %p142
        $region98: #{tpu_custom_call.1} parent=95 // pred_check_branch
          %622 = sbr.rel (%p620) target = $region100
        $region99: #{tpu_custom_call.1} parent=95 // pred_region
          %623 = dma.done [#allocation4], 2048
        $region100: #{tpu_custom_call.1} parent=95 // pred_fallthru
          _
        // Predicated region
        $region101: #{tpu_custom_call.1} parent=95 // pred_check
          %p624 = pneg %p184
        $region102: #{tpu_custom_call.1} parent=95 // pred_check_branch
          %626 = sbr.rel (%p624) target = $region104
        $region103: #{tpu_custom_call.1} parent=95 // pred_region
          %627 = dma.done [#allocation7], 2048
        $region104: #{tpu_custom_call.1} parent=95 // pred_fallthru
          _
        // Predicated region
        $region105: #{tpu_custom_call.1} parent=95 // pred_check
          %p628 = pneg %p226
        $region106: #{tpu_custom_call.1} parent=95 // pred_check_branch
          %630 = sbr.rel (%p628) target = $region108
        $region107: #{tpu_custom_call.1} parent=95 // pred_region
          %631 = dma.done [#allocation7], 2048
        $region108: #{tpu_custom_call.1} parent=95 // pred_fallthru
          _
        // Predicated region
        $region109: #{tpu_custom_call.1} parent=95 // pred_check
          %p632 = pneg %p289
        $region110: #{tpu_custom_call.1} parent=95 // pred_check_branch
          %634 = sbr.rel (%p632) target = $region112
        $region111: #{tpu_custom_call.1} parent=95 // pred_region
          %635 = dma.done [#allocation10], 1536
        $region112: #{tpu_custom_call.1} parent=95 // pred_fallthru
          _
        // Predicated region
        $region113: #{tpu_custom_call.1} parent=95 // pred_check
          %p636 = pneg %p331
        $region114: #{tpu_custom_call.1} parent=95 // pred_check_branch
          %638 = sbr.rel (%p636) target = $region116
        $region115: #{tpu_custom_call.1} parent=95 // pred_region
          %639 = dma.done [#allocation10], 2048
        $region116: #{tpu_custom_call.1} parent=95 // pred_fallthru
          _
        // Predicated region
        $region117: #{tpu_custom_call.1} parent=95 // pred_check
          %p640 = pneg %p373
        $region118: #{tpu_custom_call.1} parent=95 // pred_check_branch
          %642 = sbr.rel (%p640) target = $region120
        $region119: #{tpu_custom_call.1} parent=95 // pred_region
          %643 = dma.done [#allocation13], 8192
        $region120: #{tpu_custom_call.1} parent=95 // pred_fallthru
          _
        // Predicated region
        $region121: #{tpu_custom_call.1} parent=95 // pred_check
          %p644 = pneg %p415
        $region122: #{tpu_custom_call.1} parent=95 // pred_check_branch
          %646 = sbr.rel (%p644) target = $region124
        $region123: #{tpu_custom_call.1} parent=95 // pred_region
          %647 = dma.done [#allocation13], 8192
        $region124: #{tpu_custom_call.1} parent=95 // pred_fallthru
          _
        %p648 = scmp.lt.s32.totalorder %s37, 1
        %s649 = scalar_select %p648, %s37, 1
        %s650 = smul.addr %s649, 8
        %s651 = smul.addr %s650, 8
        %s652 = scalar_lea.vmem %s0, %s651
        %p653 = pneg %p58
        %p654 = pneg %p55
        %p655 = pneg %p79
        %p656 = pneg %p76
        %p657 = pneg %p100
        %p658 = pneg %p97
        %p659 = pneg %p121
        %p660 = pneg %p118
        %p661 = pneg %p142
        %p662 = pneg %p139
        %p663 = pneg %p163
        %p664 = pneg %p160
        %p665 = pneg %p184
        %p666 = pneg %p181
        %p667 = pneg %p205
        %p668 = pneg %p202
        %p669 = pneg %p226
        %p670 = pneg %p223
        %p671 = pneg %p247
        %p672 = pneg %p244
        %p673 = pneg %p268
        %p674 = pneg %p265
        %p675 = pneg %p289
        %p676 = pneg %p286
        %p677 = pneg %p310
        %p678 = pneg %p307
        %p679 = pneg %p331
        %p680 = pneg %p328
        %p681 = pneg %p352
        %p682 = pneg %p349
        %p683 = pneg %p373
        %p684 = pneg %p370
        %p685 = pneg %p394
        %p686 = pneg %p391
        %p687 = pneg %p415
        %p688 = pneg %p412
        %p689 = pneg %p436
        %p690 = pneg %p433
        %p691 = pneg %p462
        %p692 = pneg %p459
        %s693 = sand.u32 %s449, 1
        %s694 = scalar_lea.sflag [#allocation5], %s693
        %s695 = sand.u32 %s449, 1
        %s696 = smul.addr %s695, 64
        %s697 = scalar_lea.vmem [#allocation15], %s696
        %p698 = scmp.lt.s32.totalorder %s37, 1
        %s699 = scalar_select %p698, %s37, 1
        %s700 = smul.addr %s699, 8
        %s701 = smul.addr %s700, 8
        %s702 = scalar_lea.vmem %s0, %s701
        %v703 = vld [vmem:[%s702] sm:$0xff]
        %v704 = vld [vmem:[%s702 + $0x8] sm:$0xff]
        %v705 = vld [vmem:[%s702 + $0x10] sm:$0xff]
        %v706 = vld [vmem:[%s702 + $0x18] sm:$0xff]
        %v707 = vld [vmem:[%s702 + $0x20] sm:$0xff]
        %v708 = vld [vmem:[%s702 + $0x28] sm:$0xff]
        %v709 = vld [vmem:[%s702 + $0x30] sm:$0xff]
        %v710 = vld [vmem:[%s702 + $0x38] sm:$0xff]
        %v711 = vld [vmem:[%s1] sm:$0x1]
        %v712 = vld [vmem:[%s1 + $0x1] sm:$0x1]
        %v713 = vld [vmem:[%s1 + $0x2] sm:$0x1]
        %v714 = vld [vmem:[%s2] sm:$0x1]
        %v715 = vld [vmem:[%s3] sm:$0x1]
        %716 = vadd.xlane.f32.xlu0 %v703
        %v717 = vpop.xlane.xlu0 %716
        %718 = vadd.xlane.f32.xlu0 %v704
        %v719 = vpop.xlane.xlu0 %718
        %720 = vadd.xlane.f32.xlu0 %v705
        %v721 = vpop.xlane.xlu0 %720
        %722 = vadd.xlane.f32.xlu0 %v706
        %v723 = vpop.xlane.xlu0 %722
        %724 = vadd.xlane.f32.xlu0 %v707
        %v725 = vpop.xlane.xlu0 %724
        %726 = vadd.xlane.f32.xlu0 %v708
        %v727 = vpop.xlane.xlu0 %726
        %728 = vadd.xlane.f32.xlu0 %v709
        %v729 = vpop.xlane.xlu0 %728
        %730 = vadd.xlane.f32.xlu0 %v710
        %v731 = vpop.xlane.xlu0 %730
        %v732 = vrcp.pop 128.0
        %v733 = vmul.f32 %v717, %v732
        %v734 = vmul.f32 %v719, %v732
        %v735 = vmul.f32 %v721, %v732
        %v736 = vmul.f32 %v723, %v732
        %v737 = vmul.f32 %v725, %v732
        %v738 = vmul.f32 %v727, %v732
        %v739 = vmul.f32 %v729, %v732
        %v740 = vmul.f32 %v731, %v732
        %v741 = vsub.f32 %v703, %v733
        %v742 = vsub.f32 %v704, %v734
        %v743 = vsub.f32 %v705, %v735
        %v744 = vsub.f32 %v706, %v736
        %v745 = vsub.f32 %v707, %v737
        %v746 = vsub.f32 %v708, %v738
        %v747 = vsub.f32 %v709, %v739
        %v748 = vsub.f32 %v710, %v740
        %v749 = vmul.f32 %v741, %v741
        %v750 = vmul.f32 %v742, %v742
        %v751 = vmul.f32 %v743, %v743
        %v752 = vmul.f32 %v744, %v744
        %v753 = vmul.f32 %v745, %v745
        %v754 = vmul.f32 %v746, %v746
        %v755 = vmul.f32 %v747, %v747
        %v756 = vmul.f32 %v748, %v748
        %757 = vadd.xlane.f32.xlu0 %v749
        %v758 = vpop.xlane.xlu0 %757
        %759 = vadd.xlane.f32.xlu0 %v750
        %v760 = vpop.xlane.xlu0 %759
        %761 = vadd.xlane.f32.xlu0 %v751
        %v762 = vpop.xlane.xlu0 %761
        %763 = vadd.xlane.f32.xlu0 %v752
        %v764 = vpop.xlane.xlu0 %763
        %765 = vadd.xlane.f32.xlu0 %v753
        %v766 = vpop.xlane.xlu0 %765
        %767 = vadd.xlane.f32.xlu0 %v754
        %v768 = vpop.xlane.xlu0 %767
        %769 = vadd.xlane.f32.xlu0 %v755
        %v770 = vpop.xlane.xlu0 %769
        %771 = vadd.xlane.f32.xlu0 %v756
        %v772 = vpop.xlane.xlu0 %771
        %v773 = vmul.f32 %v758, %v732
        %v774 = vmul.f32 %v760, %v732
        %v775 = vmul.f32 %v762, %v732
        %v776 = vmul.f32 %v764, %v732
        %v777 = vmul.f32 %v766, %v732
        %v778 = vmul.f32 %v768, %v732
        %v779 = vmul.f32 %v770, %v732
        %v780 = vmul.f32 %v772, %v732
        %v781 = vadd.f32 %v773, 1e-05
        %v782 = vadd.f32 %v774, 1e-05
        %v783 = vadd.f32 %v775, 1e-05
        %v784 = vadd.f32 %v776, 1e-05
        %v785 = vadd.f32 %v777, 1e-05
        %v786 = vadd.f32 %v778, 1e-05
        %v787 = vadd.f32 %v779, 1e-05
        %v788 = vadd.f32 %v780, 1e-05
        %v789 = vrsqrt.pop %v781
        %v790 = vrsqrt.pop %v782
        %v791 = vrsqrt.pop %v783
        %v792 = vrsqrt.pop %v784
        %v793 = vrsqrt.pop %v785
        %v794 = vrsqrt.pop %v786
        %v795 = vrsqrt.pop %v787
        %v796 = vrsqrt.pop %v788
        %v797 = vmul.f32 %v741, %v789
        %v798 = vmul.f32 %v742, %v790
        %v799 = vmul.f32 %v743, %v791
        %v800 = vmul.f32 %v744, %v792
        %v801 = vmul.f32 %v745, %v793
        %v802 = vmul.f32 %v746, %v794
        %v803 = vmul.f32 %v747, %v795
        %v804 = vmul.f32 %v748, %v796
        %v806 = vlaneseq
        %v807 = vshrl.u32 %v806, 7
        %v808 = vsub.s32 0, %v807
        %v809 = vrot.slane %v714, %v808
        %v811 = vmul.f32 %v797, %v809
        %v812 = vmul.f32 %v798, %v809
        %v813 = vmul.f32 %v799, %v809
        %v814 = vmul.f32 %v800, %v809
        %v815 = vmul.f32 %v801, %v809
        %v816 = vmul.f32 %v802, %v809
        %v817 = vmul.f32 %v803, %v809
        %v818 = vmul.f32 %v804, %v809
        %v820 = vlaneseq
        %v821 = vshrl.u32 %v820, 7
        %v822 = vsub.s32 0, %v821
        %v823 = vrot.slane %v715, %v822
        %v825 = vadd.f32 %v811, %v823
        %v826 = vadd.f32 %v812, %v823
        %v827 = vadd.f32 %v813, %v823
        %v828 = vadd.f32 %v814, %v823
        %v829 = vadd.f32 %v815, %v823
        %v830 = vadd.f32 %v816, %v823
        %v831 = vadd.f32 %v817, %v823
        %v832 = vadd.f32 %v818, %v823
        %833 = vst [vmem:[#allocation2] sm:$0xff] 0.0
        %834 = vst [vmem:[#allocation2 + $0x8] sm:$0x3] 0.0
        %835 = vst [vmem:[#allocation2 + $0x10] sm:$0xff] 0.0
        %836 = vst [vmem:[#allocation2 + $0x18] sm:$0x3] 0.0
        %837 = vst [vmem:[#allocation2 + $0x20] sm:$0xff] 0.0
        %838 = vst [vmem:[#allocation2 + $0x28] sm:$0x3] 0.0
        %839 = vst [vmem:[#allocation2 + $0x30] sm:$0xff] 0.0
        %840 = vst [vmem:[#allocation2 + $0x38] sm:$0x3] 0.0
        %841 = vst [vmem:[#allocation2 + $0x40] sm:$0xff] 0.0
        %842 = vst [vmem:[#allocation2 + $0x48] sm:$0x3] 0.0
        %843 = vst [vmem:[#allocation2 + $0x50] sm:$0xff] 0.0
        %844 = vst [vmem:[#allocation2 + $0x58] sm:$0x3] 0.0
        %845 = vst [vmem:[#allocation2 + $0x60] sm:$0xff] 0.0
        %846 = vst [vmem:[#allocation2 + $0x68] sm:$0x3] 0.0
        %847 = vst [vmem:[#allocation2 + $0x70] sm:$0xff] 0.0
        %848 = vst [vmem:[#allocation2 + $0x78] sm:$0x3] 0.0
        %849 = vst [vmem:[#allocation2 + $0x80] sm:$0xff] 0.0
        %850 = vst [vmem:[#allocation2 + $0x88] sm:$0x3] 0.0
        %851 = vst [vmem:[#allocation2 + $0x90] sm:$0xff] 0.0
        %852 = vst [vmem:[#allocation2 + $0x98] sm:$0x3] 0.0
        %s853 = scalar_lea.vmem [#allocation2], 16
        %854 = vst [vmem:[%s853 + $0x1] sm:$0xff] %v825
        %855 = vst [vmem:[%s853 + $0x11] sm:$0xff] %v826
        %856 = vst [vmem:[%s853 + $0x21] sm:$0xff] %v827
        %857 = vst [vmem:[%s853 + $0x31] sm:$0xff] %v828
        %858 = vst [vmem:[%s853 + $0x41] sm:$0xff] %v829
        %859 = vst [vmem:[%s853 + $0x51] sm:$0xff] %v830
        %860 = vst [vmem:[%s853 + $0x61] sm:$0xff] %v831
        %861 = vst [vmem:[%s853 + $0x71] sm:$0xff] %v832
        %v862 = vld [vmem:[%s853 + $0x2] sm:$0xff]
        %v863 = vld [vmem:[%s853 + $0x12] sm:$0xff]
        %v864 = vld [vmem:[%s853 + $0x22] sm:$0xff]
        %v865 = vld [vmem:[%s853 + $0x32] sm:$0xff]
        %v866 = vld [vmem:[%s853 + $0x42] sm:$0xff]
        %v867 = vld [vmem:[%s853 + $0x52] sm:$0xff]
        %v868 = vld [vmem:[%s853 + $0x62] sm:$0xff]
        %v869 = vld [vmem:[%s853 + $0x72] sm:$0xff]
        %v870 = vld [vmem:[%s853] sm:$0xff]
        %v871 = vld [vmem:[%s853 + $0x10] sm:$0xff]
        %v872 = vld [vmem:[%s853 + $0x20] sm:$0xff]
        %v873 = vld [vmem:[%s853 + $0x30] sm:$0xff]
        %v874 = vld [vmem:[%s853 + $0x40] sm:$0xff]
        %v875 = vld [vmem:[%s853 + $0x50] sm:$0xff]
        %v876 = vld [vmem:[%s853 + $0x60] sm:$0xff]
        %v877 = vld [vmem:[%s853 + $0x70] sm:$0xff]
        %s878 = scalar_lea.vmem [#allocation2], 32
        %v879 = vld [vmem:[%s878 + $0x1] sm:$0xff]
        %v880 = vld [vmem:[%s878 + $0x11] sm:$0xff]
        %v881 = vld [vmem:[%s878 + $0x21] sm:$0xff]
        %v882 = vld [vmem:[%s878 + $0x31] sm:$0xff]
        %v883 = vld [vmem:[%s878 + $0x41] sm:$0xff]
        %v884 = vld [vmem:[%s878 + $0x51] sm:$0xff]
        %v885 = vld [vmem:[%s878 + $0x61] sm:$0xff]
        %v886 = vld [vmem:[%s878 + $0x71] sm:$0xff]
        %v887 = vld [vmem:[#allocation2 + $0x1] sm:$0xff]
        %v888 = vld [vmem:[#allocation2 + $0x11] sm:$0xff]
        %v889 = vld [vmem:[#allocation2 + $0x21] sm:$0xff]
        %v890 = vld [vmem:[#allocation2 + $0x31] sm:$0xff]
        %v891 = vld [vmem:[#allocation2 + $0x41] sm:$0xff]
        %v892 = vld [vmem:[#allocation2 + $0x51] sm:$0xff]
        %v893 = vld [vmem:[#allocation2 + $0x61] sm:$0xff]
        %v894 = vld [vmem:[#allocation2 + $0x71] sm:$0xff]
        %v895 = vlaneseq
        %v896 = vshrl.u32 %v895, 7
        %v897 = vsub.s32 0, %v896
        %v898 = vrot.slane %v711, %v897
        %v899 = vmul.f32 %v825, %v898
        %v900 = vmul.f32 %v826, %v898
        %v901 = vmul.f32 %v827, %v898
        %v902 = vmul.f32 %v828, %v898
        %v903 = vmul.f32 %v829, %v898
        %v904 = vmul.f32 %v830, %v898
        %v905 = vmul.f32 %v831, %v898
        %v906 = vmul.f32 %v832, %v898
        %v907 = vlaneseq
        %v908 = vshrl.u32 %v907, 7
        %v909 = vsub.s32 0, %v908
        %v910 = vrot.slane %v712, %v909
        %v911 = vmul.f32 %v862, %v910
        %v912 = vmul.f32 %v863, %v910
        %v913 = vmul.f32 %v864, %v910
        %v914 = vmul.f32 %v865, %v910
        %v915 = vmul.f32 %v866, %v910
        %v916 = vmul.f32 %v867, %v910
        %v917 = vmul.f32 %v868, %v910
        %v918 = vmul.f32 %v869, %v910
        %v919 = vadd.f32 %v899, %v911
        %v920 = vadd.f32 %v900, %v912
        %v921 = vadd.f32 %v901, %v913
        %v922 = vadd.f32 %v902, %v914
        %v923 = vadd.f32 %v903, %v915
        %v924 = vadd.f32 %v904, %v916
        %v925 = vadd.f32 %v905, %v917
        %v926 = vadd.f32 %v906, %v918
        %v927 = vlaneseq
        %v928 = vshrl.u32 %v927, 7
        %v929 = vsub.s32 0, %v928
        %v930 = vrot.slane %v713, %v929
        %v931 = vmul.f32 %v870, %v930
        %v932 = vmul.f32 %v871, %v930
        %v933 = vmul.f32 %v872, %v930
        %v934 = vmul.f32 %v873, %v930
        %v935 = vmul.f32 %v874, %v930
        %v936 = vmul.f32 %v875, %v930
        %v937 = vmul.f32 %v876, %v930
        %v938 = vmul.f32 %v877, %v930
        %v939 = vadd.f32 %v919, %v931
        %v940 = vadd.f32 %v920, %v932
        %v941 = vadd.f32 %v921, %v933
        %v942 = vadd.f32 %v922, %v934
        %v943 = vadd.f32 %v923, %v935
        %v944 = vadd.f32 %v924, %v936
        %v945 = vadd.f32 %v925, %v937
        %v946 = vadd.f32 %v926, %v938
        %v947 = vmul.f32 %v879, %v910
        %v948 = vmul.f32 %v880, %v910
        %v949 = vmul.f32 %v881, %v910
        %v950 = vmul.f32 %v882, %v910
        %v951 = vmul.f32 %v883, %v910
        %v952 = vmul.f32 %v884, %v910
        %v953 = vmul.f32 %v885, %v910
        %v954 = vmul.f32 %v886, %v910
        %v955 = vadd.f32 %v899, %v947
        %v956 = vadd.f32 %v900, %v948
        %v957 = vadd.f32 %v901, %v949
        %v958 = vadd.f32 %v902, %v950
        %v959 = vadd.f32 %v903, %v951
        %v960 = vadd.f32 %v904, %v952
        %v961 = vadd.f32 %v905, %v953
        %v962 = vadd.f32 %v906, %v954
        %v963 = vmul.f32 %v887, %v930
        %v964 = vmul.f32 %v888, %v930
        %v965 = vmul.f32 %v889, %v930
        %v966 = vmul.f32 %v890, %v930
        %v967 = vmul.f32 %v891, %v930
        %v968 = vmul.f32 %v892, %v930
        %v969 = vmul.f32 %v893, %v930
        %v970 = vmul.f32 %v894, %v930
        %v971 = vadd.f32 %v955, %v963
        %v972 = vadd.f32 %v956, %v964
        %v973 = vadd.f32 %v957, %v965
        %v974 = vadd.f32 %v958, %v966
        %v975 = vadd.f32 %v959, %v967
        %v976 = vadd.f32 %v960, %v968
        %v977 = vadd.f32 %v961, %v969
        %v978 = vadd.f32 %v962, %v970
        %v979 = vld [vmem:[#allocation3] sm:$0xff]
        %v980 = vld [vmem:[#allocation3 + $0x8] sm:$0xff]
        %v981 = vld [vmem:[#allocation3 + $0x10] sm:$0xff]
        %v982 = vld [vmem:[#allocation3 + $0x18] sm:$0xff]
        %v983 = vld [vmem:[#allocation3 + $0x20] sm:$0xff]
        %v984 = vld [vmem:[#allocation3 + $0x28] sm:$0xff]
        %v985 = vld [vmem:[#allocation3 + $0x30] sm:$0xff]
        %v986 = vld [vmem:[#allocation3 + $0x38] sm:$0xff]
        %v987 = vld [vmem:[#allocation3 + $0x40] sm:$0xff]
        %v988 = vld [vmem:[#allocation3 + $0x48] sm:$0xff]
        %v989 = vld [vmem:[#allocation3 + $0x50] sm:$0xff]
        %v990 = vld [vmem:[#allocation3 + $0x58] sm:$0xff]
        %v991 = vld [vmem:[#allocation3 + $0x60] sm:$0xff]
        %v992 = vld [vmem:[#allocation3 + $0x68] sm:$0xff]
        %v993 = vld [vmem:[#allocation3 + $0x70] sm:$0xff]
        %v994 = vld [vmem:[#allocation3 + $0x78] sm:$0xff]
        %v995 = vld [vmem:[%s5] sm:$0x1]
        %v997 = vlaneseq
        %v998 = vshrl.u32 %v997, 7
        %v999 = vsub.s32 0, %v998
        %v1000 = vrot.slane %v995, %v999
        %1002 = vmatprep.subr.mxu0 0.0
        %1003 = vmatpush1.msra.mxu0 %v979
        %1004 = vmatprep.subr.mxu0 0.0
        %1005 = vmatpush1.msra.mxu0 %v980
        %1006 = vmatprep.subr.mxu0 0.0
        %1007 = vmatpush1.msra.mxu0 %v981
        %1008 = vmatprep.subr.mxu0 0.0
        %1009 = vmatpush1.msra.mxu0 %v982
        %1010 = vmatprep.subr.mxu0 0.0
        %1011 = vmatpush1.msra.mxu0 %v983
        %1012 = vmatprep.subr.mxu0 0.0
        %1013 = vmatpush1.msra.mxu0 %v984
        %1014 = vmatprep.subr.mxu0 0.0
        %1015 = vmatpush1.msra.mxu0 %v985
        %1016 = vmatprep.subr.mxu0 0.0
        %1017 = vmatpush1.msra.mxu0 %v986
        %1018 = vmatprep.subr.mxu0 0.0
        %1019 = vmatpush1.msra.mxu0 %v987
        %1020 = vmatprep.subr.mxu0 0.0
        %1021 = vmatpush1.msra.mxu0 %v988
        %1022 = vmatprep.subr.mxu0 0.0
        %1023 = vmatpush1.msra.mxu0 %v989
        %1024 = vmatprep.subr.mxu0 0.0
        %1025 = vmatpush1.msra.mxu0 %v990
        %1026 = vmatprep.subr.mxu0 0.0
        %1027 = vmatpush1.msra.mxu0 %v991
        %1028 = vmatprep.subr.mxu0 0.0
        %1029 = vmatpush1.msra.mxu0 %v992
        %1030 = vmatprep.subr.mxu0 0.0
        %1031 = vmatpush1.msra.mxu0 %v993
        %1032 = vmatprep.subr.mxu0 0.0
        %1033 = vmatpush1.msra.mxu0 %v994
        %1034 = vmatprep.subr.mxu0 0.0
        %1035 = vmatpush1.msra.mxu0 0.0
        %1036 = vmatprep.subr.mxu0 0.0
        %1037 = vmatpush1.msra.mxu0 0.0
        %1038 = vmatprep.subr.mxu0 0.0
        %1039 = vmatpush1.msra.mxu0 0.0
        %1040 = vmatprep.subr.mxu0 0.0
        %1041 = vmatpush1.msra.mxu0 0.0
        %1042 = vmatprep.subr.mxu0 0.0
        %1043 = vmatpush1.msra.mxu0 0.0
        %1044 = vmatprep.subr.mxu0 0.0
        %1045 = vmatpush1.msra.mxu0 0.0
        %1046 = vmatprep.subr.mxu0 0.0
        %1047 = vmatpush1.msra.mxu0 0.0
        %1048 = vmatprep.subr.mxu0 0.0
        %1049 = vmatpush1.msra.mxu0 0.0
        %1050 = vmatprep.subr.mxu0 0.0
        %1051 = vmatpush1.msra.mxu0 0.0
        %1052 = vmatprep.subr.mxu0 0.0
        %1053 = vmatpush1.msra.mxu0 0.0
        %1054 = vmatprep.subr.mxu0 0.0
        %1055 = vmatpush1.msra.mxu0 0.0
        %1056 = vmatprep.subr.mxu0 0.0
        %1057 = vmatpush1.msra.mxu0 0.0
        %1058 = vmatprep.subr.mxu0 0.0
        %1059 = vmatpush1.msra.mxu0 0.0
        %1060 = vmatprep.subr.mxu0 0.0
        %1061 = vmatpush1.msra.mxu0 0.0
        %1062 = vmatprep.subr.mxu0 0.0
        %1063 = vmatpush1.msra.mxu0 0.0
        %1064 = vmatprep.subr.mxu0 0.0
        %1065 = vmatpush1.msra.mxu0 0.0
        %1066 = vmatprep.mubr.f32.mxu0 0.0
        %1067 = vmatmul.mubr.f32.gmra.mrb[0].mxu0 %v939
        %v1068 = vpop.f32.mrb[0].mxu0
        %v1069 = vadd.f32 %v1000, %v1068
        %v1070 = vpop.f32.mrb[0].mxu0
        %1071 = vmatprep.mubr.f32.mxu0 0.0
        %1072 = vmatmul.mubr.f32.gmra.mrb[0].mxu0 %v940
        %v1073 = vpop.f32.mrb[0].mxu0
        %v1074 = vadd.f32 %v1000, %v1073
        %v1075 = vpop.f32.mrb[0].mxu0
        %1076 = vmatprep.mubr.f32.mxu0 0.0
        %1077 = vmatmul.mubr.f32.gmra.mrb[0].mxu0 %v941
        %v1078 = vpop.f32.mrb[0].mxu0
        %v1079 = vadd.f32 %v1000, %v1078
        %v1080 = vpop.f32.mrb[0].mxu0
        %1081 = vmatprep.mubr.f32.mxu0 0.0
        %1082 = vmatmul.mubr.f32.gmra.mrb[0].mxu0 %v942
        %v1083 = vpop.f32.mrb[0].mxu0
        %v1084 = vadd.f32 %v1000, %v1083
        %v1085 = vpop.f32.mrb[0].mxu0
        %1086 = vmatprep.mubr.f32.mxu0 0.0
        %1087 = vmatmul.mubr.f32.gmra.mrb[0].mxu0 %v943
        %v1088 = vpop.f32.mrb[0].mxu0
        %v1089 = vadd.f32 %v1000, %v1088
        %v1090 = vpop.f32.mrb[0].mxu0
        %1091 = vmatprep.mubr.f32.mxu0 0.0
        %1092 = vmatmul.mubr.f32.gmra.mrb[0].mxu0 %v944
        %v1093 = vpop.f32.mrb[0].mxu0
        %v1094 = vadd.f32 %v1000, %v1093
        %v1095 = vpop.f32.mrb[0].mxu0
        %1096 = vmatprep.mubr.f32.mxu0 0.0
        %1097 = vmatmul.mubr.f32.gmra.mrb[0].mxu0 %v945
        %v1098 = vpop.f32.mrb[0].mxu0
        %v1099 = vadd.f32 %v1000, %v1098
        %v1100 = vpop.f32.mrb[0].mxu0
        %1101 = vmatprep.mubr.f32.mxu0 0.0
        %1102 = vmatmul.mubr.f32.gmra.mrb[0].mxu0 %v946
        %v1103 = vpop.f32.mrb[0].mxu0
        %v1104 = vadd.f32 %v1000, %v1103
        %v1105 = vpop.f32.mrb[0].mxu0
        %1106 = vdwg.mxu0
        %v1107 = vld [vmem:[#allocation6] sm:$0xff]
        %v1108 = vld [vmem:[#allocation6 + $0x8] sm:$0xff]
        %v1109 = vld [vmem:[#allocation6 + $0x10] sm:$0xff]
        %v1110 = vld [vmem:[#allocation6 + $0x18] sm:$0xff]
        %v1111 = vld [vmem:[#allocation6 + $0x20] sm:$0xff]
        %v1112 = vld [vmem:[#allocation6 + $0x28] sm:$0xff]
        %v1113 = vld [vmem:[#allocation6 + $0x30] sm:$0xff]
        %v1114 = vld [vmem:[#allocation6 + $0x38] sm:$0xff]
        %v1115 = vld [vmem:[#allocation6 + $0x40] sm:$0xff]
        %v1116 = vld [vmem:[#allocation6 + $0x48] sm:$0xff]
        %v1117 = vld [vmem:[#allocation6 + $0x50] sm:$0xff]
        %v1118 = vld [vmem:[#allocation6 + $0x58] sm:$0xff]
        %v1119 = vld [vmem:[#allocation6 + $0x60] sm:$0xff]
        %v1120 = vld [vmem:[#allocation6 + $0x68] sm:$0xff]
        %v1121 = vld [vmem:[#allocation6 + $0x70] sm:$0xff]
        %v1122 = vld [vmem:[#allocation6 + $0x78] sm:$0xff]
        %v1123 = vld [vmem:[%s7] sm:$0x1]
        %v1125 = vlaneseq
        %v1126 = vshrl.u32 %v1125, 7
        %v1127 = vsub.s32 0, %v1126
        %v1128 = vrot.slane %v1123, %v1127
        %1130 = vmatprep.subr.mxu0 0.0
        %1131 = vmatpush1.msra.mxu0 %v1107
        %1132 = vmatprep.subr.mxu0 0.0
        %1133 = vmatpush1.msra.mxu0 %v1108
        %1134 = vmatprep.subr.mxu0 0.0
        %1135 = vmatpush1.msra.mxu0 %v1109
        %1136 = vmatprep.subr.mxu0 0.0
        %1137 = vmatpush1.msra.mxu0 %v1110
        %1138 = vmatprep.subr.mxu0 0.0
        %1139 = vmatpush1.msra.mxu0 %v1111
        %1140 = vmatprep.subr.mxu0 0.0
        %1141 = vmatpush1.msra.mxu0 %v1112
        %1142 = vmatprep.subr.mxu0 0.0
        %1143 = vmatpush1.msra.mxu0 %v1113
        %1144 = vmatprep.subr.mxu0 0.0
        %1145 = vmatpush1.msra.mxu0 %v1114
        %1146 = vmatprep.subr.mxu0 0.0
        %1147 = vmatpush1.msra.mxu0 %v1115
        %1148 = vmatprep.subr.mxu0 0.0
        %1149 = vmatpush1.msra.mxu0 %v1116
        %1150 = vmatprep.subr.mxu0 0.0
        %1151 = vmatpush1.msra.mxu0 %v1117
        %1152 = vmatprep.subr.mxu0 0.0
        %1153 = vmatpush1.msra.mxu0 %v1118
        %1154 = vmatprep.subr.mxu0 0.0
        %1155 = vmatpush1.msra.mxu0 %v1119
        %1156 = vmatprep.subr.mxu0 0.0
        %1157 = vmatpush1.msra.mxu0 %v1120
        %1158 = vmatprep.subr.mxu0 0.0
        %1159 = vmatpush1.msra.mxu0 %v1121
        %1160 = vmatprep.subr.mxu0 0.0
        %1161 = vmatpush1.msra.mxu0 %v1122
        %1162 = vmatprep.subr.mxu0 0.0
        %1163 = vmatpush1.msra.mxu0 0.0
        %1164 = vmatprep.subr.mxu0 0.0
        %1165 = vmatpush1.msra.mxu0 0.0
        %1166 = vmatprep.subr.mxu0 0.0
        %1167 = vmatpush1.msra.mxu0 0.0
        %1168 = vmatprep.subr.mxu0 0.0
        %1169 = vmatpush1.msra.mxu0 0.0
        %1170 = vmatprep.subr.mxu0 0.0
        %1171 = vmatpush1.msra.mxu0 0.0
        %1172 = vmatprep.subr.mxu0 0.0
        %1173 = vmatpush1.msra.mxu0 0.0
        %1174 = vmatprep.subr.mxu0 0.0
        %1175 = vmatpush1.msra.mxu0 0.0
        %1176 = vmatprep.subr.mxu0 0.0
        %1177 = vmatpush1.msra.mxu0 0.0
        %1178 = vmatprep.subr.mxu0 0.0
        %1179 = vmatpush1.msra.mxu0 0.0
        %1180 = vmatprep.subr.mxu0 0.0
        %1181 = vmatpush1.msra.mxu0 0.0
        %1182 = vmatprep.subr.mxu0 0.0
        %1183 = vmatpush1.msra.mxu0 0.0
        %1184 = vmatprep.subr.mxu0 0.0
        %1185 = vmatpush1.msra.mxu0 0.0
        %1186 = vmatprep.subr.mxu0 0.0
        %1187 = vmatpush1.msra.mxu0 0.0
        %1188 = vmatprep.subr.mxu0 0.0
        %1189 = vmatpush1.msra.mxu0 0.0
        %1190 = vmatprep.subr.mxu0 0.0
        %1191 = vmatpush1.msra.mxu0 0.0
        %1192 = vmatprep.subr.mxu0 0.0
        %1193 = vmatpush1.msra.mxu0 0.0
        %1194 = vmatprep.mubr.f32.mxu0 0.0
        %1195 = vmatmul.mubr.f32.gmra.mrb[0].mxu0 %v971
        %v1196 = vpop.f32.mrb[0].mxu0
        %v1197 = vadd.f32 %v1128, %v1196
        %v1198 = vpop.f32.mrb[0].mxu0
        %1199 = vmatprep.mubr.f32.mxu0 0.0
        %1200 = vmatmul.mubr.f32.gmra.mrb[0].mxu0 %v972
        %v1201 = vpop.f32.mrb[0].mxu0
        %v1202 = vadd.f32 %v1128, %v1201
        %v1203 = vpop.f32.mrb[0].mxu0
        %1204 = vmatprep.mubr.f32.mxu0 0.0
        %1205 = vmatmul.mubr.f32.gmra.mrb[0].mxu0 %v973
        %v1206 = vpop.f32.mrb[0].mxu0
        %v1207 = vadd.f32 %v1128, %v1206
        %v1208 = vpop.f32.mrb[0].mxu0
        %1209 = vmatprep.mubr.f32.mxu0 0.0
        %1210 = vmatmul.mubr.f32.gmra.mrb[0].mxu0 %v974
        %v1211 = vpop.f32.mrb[0].mxu0
        %v1212 = vadd.f32 %v1128, %v1211
        %v1213 = vpop.f32.mrb[0].mxu0
        %1214 = vmatprep.mubr.f32.mxu0 0.0
        %1215 = vmatmul.mubr.f32.gmra.mrb[0].mxu0 %v975
        %v1216 = vpop.f32.mrb[0].mxu0
        %v1217 = vadd.f32 %v1128, %v1216
        %v1218 = vpop.f32.mrb[0].mxu0
        %1219 = vmatprep.mubr.f32.mxu0 0.0
        %1220 = vmatmul.mubr.f32.gmra.mrb[0].mxu0 %v976
        %v1221 = vpop.f32.mrb[0].mxu0
        %v1222 = vadd.f32 %v1128, %v1221
        %v1223 = vpop.f32.mrb[0].mxu0
        %1224 = vmatprep.mubr.f32.mxu0 0.0
        %1225 = vmatmul.mubr.f32.gmra.mrb[0].mxu0 %v977
        %v1226 = vpop.f32.mrb[0].mxu0
        %v1227 = vadd.f32 %v1128, %v1226
        %v1228 = vpop.f32.mrb[0].mxu0
        %1229 = vmatprep.mubr.f32.mxu0 0.0
        %1230 = vmatmul.mubr.f32.gmra.mrb[0].mxu0 %v978
        %v1231 = vpop.f32.mrb[0].mxu0
        %v1232 = vadd.f32 %v1128, %v1231
        %v1233 = vpop.f32.mrb[0].mxu0
        %1234 = vdwg.mxu0
        %v1235 = vld [vmem:[#allocation8] sm:$0xff]
        %v1236 = vld [vmem:[#allocation8 + $0x8] sm:$0xff]
        %v1237 = vld [vmem:[#allocation8 + $0x10] sm:$0xff]
        %v1238 = vld [vmem:[#allocation8 + $0x18] sm:$0xff]
        %v1239 = vld [vmem:[#allocation8 + $0x20] sm:$0xff]
        %v1240 = vld [vmem:[#allocation8 + $0x28] sm:$0xff]
        %v1241 = vld [vmem:[#allocation8 + $0x30] sm:$0xff]
        %v1242 = vld [vmem:[#allocation8 + $0x38] sm:$0xff]
        %v1243 = vld [vmem:[#allocation8 + $0x40] sm:$0xff]
        %v1244 = vld [vmem:[#allocation8 + $0x48] sm:$0xff]
        %v1245 = vld [vmem:[#allocation8 + $0x50] sm:$0xff]
        %v1246 = vld [vmem:[#allocation8 + $0x58] sm:$0xff]
        %v1247 = vld [vmem:[#allocation8 + $0x60] sm:$0xff]
        %v1248 = vld [vmem:[#allocation8 + $0x68] sm:$0xff]
        %v1249 = vld [vmem:[#allocation8 + $0x70] sm:$0xff]
        %v1250 = vld [vmem:[#allocation8 + $0x78] sm:$0xff]
        %1251 = vmatprep.subr.mxu0 0.0
        %1252 = vmatpush1.msra.mxu0 %v1235
        %1253 = vmatprep.subr.mxu0 0.0
        %1254 = vmatpush1.msra.mxu0 %v1236
        %1255 = vmatprep.subr.mxu0 0.0
        %1256 = vmatpush1.msra.mxu0 %v1237
        %1257 = vmatprep.subr.mxu0 0.0
        %1258 = vmatpush1.msra.mxu0 %v1238
        %1259 = vmatprep.subr.mxu0 0.0
        %1260 = vmatpush1.msra.mxu0 %v1239
        %1261 = vmatprep.subr.mxu0 0.0
        %1262 = vmatpush1.msra.mxu0 %v1240
        %1263 = vmatprep.subr.mxu0 0.0
        %1264 = vmatpush1.msra.mxu0 %v1241
        %1265 = vmatprep.subr.mxu0 0.0
        %1266 = vmatpush1.msra.mxu0 %v1242
        %1267 = vmatprep.subr.mxu0 0.0
        %1268 = vmatpush1.msra.mxu0 %v1243
        %1269 = vmatprep.subr.mxu0 0.0
        %1270 = vmatpush1.msra.mxu0 %v1244
        %1271 = vmatprep.subr.mxu0 0.0
        %1272 = vmatpush1.msra.mxu0 %v1245
        %1273 = vmatprep.subr.mxu0 0.0
        %1274 = vmatpush1.msra.mxu0 %v1246
        %1275 = vmatprep.subr.mxu0 0.0
        %1276 = vmatpush1.msra.mxu0 %v1247
        %1277 = vmatprep.subr.mxu0 0.0
        %1278 = vmatpush1.msra.mxu0 %v1248
        %1279 = vmatprep.subr.mxu0 0.0
        %1280 = vmatpush1.msra.mxu0 %v1249
        %1281 = vmatprep.subr.mxu0 0.0
        %1282 = vmatpush1.msra.mxu0 %v1250
        %1283 = vmatprep.subr.mxu0 0.0
        %1284 = vmatpush1.msra.mxu0 0.0
        %1285 = vmatprep.subr.mxu0 0.0
        %1286 = vmatpush1.msra.mxu0 0.0
        %1287 = vmatprep.subr.mxu0 0.0
        %1288 = vmatpush1.msra.mxu0 0.0
        %1289 = vmatprep.subr.mxu0 0.0
        %1290 = vmatpush1.msra.mxu0 0.0
        %1291 = vmatprep.subr.mxu0 0.0
        %1292 = vmatpush1.msra.mxu0 0.0
        %1293 = vmatprep.subr.mxu0 0.0
        %1294 = vmatpush1.msra.mxu0 0.0
        %1295 = vmatprep.subr.mxu0 0.0
        %1296 = vmatpush1.msra.mxu0 0.0
        %1297 = vmatprep.subr.mxu0 0.0
        %1298 = vmatpush1.msra.mxu0 0.0
        %1299 = vmatprep.subr.mxu0 0.0
        %1300 = vmatpush1.msra.mxu0 0.0
        %1301 = vmatprep.subr.mxu0 0.0
        %1302 = vmatpush1.msra.mxu0 0.0
        %1303 = vmatprep.subr.mxu0 0.0
        %1304 = vmatpush1.msra.mxu0 0.0
        %1305 = vmatprep.subr.mxu0 0.0
        %1306 = vmatpush1.msra.mxu0 0.0
        %1307 = vmatprep.subr.mxu0 0.0
        %1308 = vmatpush1.msra.mxu0 0.0
        %1309 = vmatprep.subr.mxu0 0.0
        %1310 = vmatpush1.msra.mxu0 0.0
        %1311 = vmatprep.subr.mxu0 0.0
        %1312 = vmatpush1.msra.mxu0 0.0
        %1313 = vmatprep.subr.mxu0 0.0
        %1314 = vmatpush1.msra.mxu0 0.0
        %1315 = vmatprep.mubr.f32.mxu0 0.0
        %1316 = vmatmul.mubr.f32.gmra.mrb[0].mxu0 %v825
        %v1317 = vpop.f32.mrb[0].mxu0
        %v1318 = vadd.f32 0.0, %v1317
        %v1319 = vpop.f32.mrb[0].mxu0
        %1320 = vmatprep.mubr.f32.mxu0 0.0
        %1321 = vmatmul.mubr.f32.gmra.mrb[0].mxu0 %v826
        %v1322 = vpop.f32.mrb[0].mxu0
        %v1323 = vadd.f32 0.0, %v1322
        %v1324 = vpop.f32.mrb[0].mxu0
        %1325 = vmatprep.mubr.f32.mxu0 0.0
        %1326 = vmatmul.mubr.f32.gmra.mrb[0].mxu0 %v827
        %v1327 = vpop.f32.mrb[0].mxu0
        %v1328 = vadd.f32 0.0, %v1327
        %v1329 = vpop.f32.mrb[0].mxu0
        %1330 = vmatprep.mubr.f32.mxu0 0.0
        %1331 = vmatmul.mubr.f32.gmra.mrb[0].mxu0 %v828
        %v1332 = vpop.f32.mrb[0].mxu0
        %v1333 = vadd.f32 0.0, %v1332
        %v1334 = vpop.f32.mrb[0].mxu0
        %1335 = vmatprep.mubr.f32.mxu0 0.0
        %1336 = vmatmul.mubr.f32.gmra.mrb[0].mxu0 %v829
        %v1337 = vpop.f32.mrb[0].mxu0
        %v1338 = vadd.f32 0.0, %v1337
        %v1339 = vpop.f32.mrb[0].mxu0
        %1340 = vmatprep.mubr.f32.mxu0 0.0
        %1341 = vmatmul.mubr.f32.gmra.mrb[0].mxu0 %v830
        %v1342 = vpop.f32.mrb[0].mxu0
        %v1343 = vadd.f32 0.0, %v1342
        %v1344 = vpop.f32.mrb[0].mxu0
        %1345 = vmatprep.mubr.f32.mxu0 0.0
        %1346 = vmatmul.mubr.f32.gmra.mrb[0].mxu0 %v831
        %v1347 = vpop.f32.mrb[0].mxu0
        %v1348 = vadd.f32 0.0, %v1347
        %v1349 = vpop.f32.mrb[0].mxu0
        %1350 = vmatprep.mubr.f32.mxu0 0.0
        %1351 = vmatmul.mubr.f32.gmra.mrb[0].mxu0 %v832
        %v1352 = vpop.f32.mrb[0].mxu0
        %v1353 = vadd.f32 0.0, %v1352
        %v1354 = vpop.f32.mrb[0].mxu0
        %1355 = vdwg.mxu0
        %v1356 = vadd.f32 %v1069, %v1197
        %v1357 = vadd.f32 %v1074, %v1202
        %v1358 = vadd.f32 %v1079, %v1207
        %v1359 = vadd.f32 %v1084, %v1212
        %v1360 = vadd.f32 %v1089, %v1217
        %v1361 = vadd.f32 %v1094, %v1222
        %v1362 = vadd.f32 %v1099, %v1227
        %v1363 = vadd.f32 %v1104, %v1232
        %v1364 = vadd.f32 %v1356, %v1318
        %v1365 = vadd.f32 %v1357, %v1323
        %v1366 = vadd.f32 %v1358, %v1328
        %v1367 = vadd.f32 %v1359, %v1333
        %v1368 = vadd.f32 %v1360, %v1338
        %v1369 = vadd.f32 %v1361, %v1343
        %v1370 = vadd.f32 %v1362, %v1348
        %v1371 = vadd.f32 %v1363, %v1353
        %v1372 = vadd.f32 %v1364, %v1365
        %v1373 = vadd.f32 %v1372, %v1366
        %v1374 = vadd.f32 %v1373, %v1367
        %v1375 = vadd.f32 %v1374, %v1368
        %v1376 = vadd.f32 %v1375, %v1369
        %v1377 = vadd.f32 %v1376, %v1370
        %v1378 = vadd.f32 %v1377, %v1371
        %v1379 = vrot.slane %v1378, 4
        %v1380 = vadd.f32 %v1378, %v1379
        %v1381 = vrot.slane %v1380, 2
        %v1382 = vadd.f32 %v1380, %v1381
        %v1383 = vrot.slane %v1382, 1
        %v1384 = vadd.f32 %v1382, %v1383
        %v1385 = vrcp.pop 64.0
        %v1386 = vmul.f32 %v1384, %v1385
        %v1387 = vld [vmem:[%s9] sm:$0xff]
        %v1388 = vld [vmem:[%s9 + $0x8] sm:$0xff]
        %v1389 = vld [vmem:[%s9 + $0x10] sm:$0xff]
        %v1390 = vld [vmem:[%s9 + $0x18] sm:$0xff]
        %v1391 = vld [vmem:[%s9 + $0x20] sm:$0xff]
        %v1392 = vld [vmem:[%s9 + $0x28] sm:$0xff]
        %v1393 = vld [vmem:[%s9 + $0x30] sm:$0xff]
        %v1394 = vld [vmem:[%s9 + $0x38] sm:$0xff]
        %v1395 = vld [vmem:[%s9 + $0x40] sm:$0xff]
        %v1396 = vld [vmem:[%s9 + $0x48] sm:$0xff]
        %v1397 = vld [vmem:[%s9 + $0x50] sm:$0xff]
        %v1398 = vld [vmem:[%s9 + $0x58] sm:$0xff]
        %v1399 = vld [vmem:[%s9 + $0x60] sm:$0xff]
        %v1400 = vld [vmem:[%s9 + $0x68] sm:$0xff]
        %v1401 = vld [vmem:[%s9 + $0x70] sm:$0xff]
        %v1402 = vld [vmem:[%s9 + $0x78] sm:$0xff]
        %v1403 = vld [vmem:[%s10] sm:$0x1]
        %1404 = vmatprep.subr.mxu0 0.0
        %1405 = vmatpush1.msra.mxu0 %v1387
        %1406 = vmatprep.subr.mxu0 0.0
        %1407 = vmatpush1.msra.mxu0 %v1388
        %1408 = vmatprep.subr.mxu0 0.0
        %1409 = vmatpush1.msra.mxu0 %v1389
        %1410 = vmatprep.subr.mxu0 0.0
        %1411 = vmatpush1.msra.mxu0 %v1390
        %1412 = vmatprep.subr.mxu0 0.0
        %1413 = vmatpush1.msra.mxu0 %v1391
        %1414 = vmatprep.subr.mxu0 0.0
        %1415 = vmatpush1.msra.mxu0 %v1392
        %1416 = vmatprep.subr.mxu0 0.0
        %1417 = vmatpush1.msra.mxu0 %v1393
        %1418 = vmatprep.subr.mxu0 0.0
        %1419 = vmatpush1.msra.mxu0 %v1394
        %1420 = vmatprep.subr.mxu0 0.0
        %1421 = vmatpush1.msra.mxu0 %v1395
        %1422 = vmatprep.subr.mxu0 0.0
        %1423 = vmatpush1.msra.mxu0 %v1396
        %1424 = vmatprep.subr.mxu0 0.0
        %1425 = vmatpush1.msra.mxu0 %v1397
        %1426 = vmatprep.subr.mxu0 0.0
        %1427 = vmatpush1.msra.mxu0 %v1398
        %1428 = vmatprep.subr.mxu0 0.0
        %1429 = vmatpush1.msra.mxu0 %v1399
        %1430 = vmatprep.subr.mxu0 0.0
        %1431 = vmatpush1.msra.mxu0 %v1400
        %1432 = vmatprep.subr.mxu0 0.0
        %1433 = vmatpush1.msra.mxu0 %v1401
        %1434 = vmatprep.subr.mxu0 0.0
        %1435 = vmatpush1.msra.mxu0 %v1402
        %1436 = vmatprep.subr.mxu0 0.0
        %1437 = vmatpush1.msra.mxu0 0.0
        %1438 = vmatprep.subr.mxu0 0.0
        %1439 = vmatpush1.msra.mxu0 0.0
        %1440 = vmatprep.subr.mxu0 0.0
        %1441 = vmatpush1.msra.mxu0 0.0
        %1442 = vmatprep.subr.mxu0 0.0
        %1443 = vmatpush1.msra.mxu0 0.0
        %1444 = vmatprep.subr.mxu0 0.0
        %1445 = vmatpush1.msra.mxu0 0.0
        %1446 = vmatprep.subr.mxu0 0.0
        %1447 = vmatpush1.msra.mxu0 0.0
        %1448 = vmatprep.subr.mxu0 0.0
        %1449 = vmatpush1.msra.mxu0 0.0
        %1450 = vmatprep.subr.mxu0 0.0
        %1451 = vmatpush1.msra.mxu0 0.0
        %1452 = vmatprep.subr.mxu0 0.0
        %1453 = vmatpush1.msra.mxu0 0.0
        %1454 = vmatprep.subr.mxu0 0.0
        %1455 = vmatpush1.msra.mxu0 0.0
        %1456 = vmatprep.subr.mxu0 0.0
        %1457 = vmatpush1.msra.mxu0 0.0
        %1458 = vmatprep.subr.mxu0 0.0
        %1459 = vmatpush1.msra.mxu0 0.0
        %1460 = vmatprep.subr.mxu0 0.0
        %1461 = vmatpush1.msra.mxu0 0.0
        %1462 = vmatprep.subr.mxu0 0.0
        %1463 = vmatpush1.msra.mxu0 0.0
        %1464 = vmatprep.subr.mxu0 0.0
        %1465 = vmatpush1.msra.mxu0 0.0
        %1466 = vmatprep.subr.mxu0 0.0
        %1467 = vmatpush1.msra.mxu0 0.0
        %1468 = vmatprep.mubr.f32.mxu0 0.0
        %1469 = vmatmul.mubr.f32.gmra.mrb[0].mxu0 %v1386
        %v1470 = vpop.f32.mrb[0].mxu0
        %v1471 = vadd.f32 %v1403, %v1470
        %v1472 = vpop.f32.mrb[0].mxu0
        %1473 = vdwg.mxu0
        %v1474 = vmul.f32 %v1471, 0.5
        %v1475 = vmul.f32 %v1471, 0.044715
        %v1476 = vmul.f32 %v1475, %v1471
        %v1477 = vmul.f32 %v1476, %v1471
        %v1478 = vadd.f32 %v1471, %v1477
        %v1479 = vmul.f32 %v1478, 0.7978846
        %v1480 = vtanh.pop %v1479
        %v1481 = vadd.f32 %v1480, 1.0
        %v1482 = vmul.f32 %v1474, %v1481
        %v1483 = vld [vmem:[#allocation9] sm:$0xff]
        %v1484 = vld [vmem:[#allocation9 + $0x8] sm:$0xff]
        %v1485 = vld [vmem:[#allocation9 + $0x10] sm:$0xff]
        %v1486 = vld [vmem:[#allocation9 + $0x18] sm:$0xff]
        %v1487 = vld [vmem:[%s12] sm:$0x1]
        %vm1488 = vcmask 261120
        %v1490 = vsel %vm1488, %v1482, 0
        %1492 = vmatprep.subr.mxu0 0.0
        %1493 = vmatpush1.msra.mxu0 %v1483
        %1494 = vmatprep.subr.mxu0 0.0
        %1495 = vmatpush1.msra.mxu0 %v1484
        %1496 = vmatprep.subr.mxu0 0.0
        %1497 = vmatpush1.msra.mxu0 %v1485
        %1498 = vmatprep.subr.mxu0 0.0
        %1499 = vmatpush1.msra.mxu0 %v1486
        %1500 = vmatprep.subr.mxu0 0.0
        %1501 = vmatpush1.msra.mxu0 0.0
        %1502 = vmatprep.subr.mxu0 0.0
        %1503 = vmatpush1.msra.mxu0 0.0
        %1504 = vmatprep.subr.mxu0 0.0
        %1505 = vmatpush1.msra.mxu0 0.0
        %1506 = vmatprep.subr.mxu0 0.0
        %1507 = vmatpush1.msra.mxu0 0.0
        %1508 = vmatprep.subr.mxu0 0.0
        %1509 = vmatpush1.msra.mxu0 0.0
        %1510 = vmatprep.subr.mxu0 0.0
        %1511 = vmatpush1.msra.mxu0 0.0
        %1512 = vmatprep.subr.mxu0 0.0
        %1513 = vmatpush1.msra.mxu0 0.0
        %1514 = vmatprep.subr.mxu0 0.0
        %1515 = vmatpush1.msra.mxu0 0.0
        %1516 = vmatprep.subr.mxu0 0.0
        %1517 = vmatpush1.msra.mxu0 0.0
        %1518 = vmatprep.subr.mxu0 0.0
        %1519 = vmatpush1.msra.mxu0 0.0
        %1520 = vmatprep.subr.mxu0 0.0
        %1521 = vmatpush1.msra.mxu0 0.0
        %1522 = vmatprep.subr.mxu0 0.0
        %1523 = vmatpush1.msra.mxu0 0.0
        %1524 = vmatprep.subr.mxu0 0.0
        %1525 = vmatpush1.msra.mxu0 0.0
        %1526 = vmatprep.subr.mxu0 0.0
        %1527 = vmatpush1.msra.mxu0 0.0
        %1528 = vmatprep.subr.mxu0 0.0
        %1529 = vmatpush1.msra.mxu0 0.0
        %1530 = vmatprep.subr.mxu0 0.0
        %1531 = vmatpush1.msra.mxu0 0.0
        %1532 = vmatprep.subr.mxu0 0.0
        %1533 = vmatpush1.msra.mxu0 0.0
        %1534 = vmatprep.subr.mxu0 0.0
        %1535 = vmatpush1.msra.mxu0 0.0
        %1536 = vmatprep.subr.mxu0 0.0
        %1537 = vmatpush1.msra.mxu0 0.0
        %1538 = vmatprep.subr.mxu0 0.0
        %1539 = vmatpush1.msra.mxu0 0.0
        %1540 = vmatprep.subr.mxu0 0.0
        %1541 = vmatpush1.msra.mxu0 0.0
        %1542 = vmatprep.subr.mxu0 0.0
        %1543 = vmatpush1.msra.mxu0 0.0
        %1544 = vmatprep.subr.mxu0 0.0
        %1545 = vmatpush1.msra.mxu0 0.0
        %1546 = vmatprep.subr.mxu0 0.0
        %1547 = vmatpush1.msra.mxu0 0.0
        %1548 = vmatprep.subr.mxu0 0.0
        %1549 = vmatpush1.msra.mxu0 0.0
        %1550 = vmatprep.subr.mxu0 0.0
        %1551 = vmatpush1.msra.mxu0 0.0
        %1552 = vmatprep.subr.mxu0 0.0
        %1553 = vmatpush1.msra.mxu0 0.0
        %1554 = vmatprep.subr.mxu0 0.0
        %1555 = vmatpush1.msra.mxu0 0.0
        %1556 = vmatprep.mubr.f32.mxu0 0.0
        %1557 = vmatmul.mubr.f32.gmra.mrb[0].mxu0 %v1490
        %v1558 = vpop.f32.mrb[0].mxu0
        %v1559 = vadd.f32 %v1487, %v1558
        %v1560 = vpop.f32.mrb[0].mxu0
        %1561 = vdwg.mxu0
        %s1562 = scalar_lea.vmem [#allocation9], 32
        %v1563 = vld [vmem:[%s1562] sm:$0xff]
        %v1564 = vld [vmem:[%s1562 + $0x8] sm:$0xff]
        %v1565 = vld [vmem:[%s1562 + $0x10] sm:$0xff]
        %v1566 = vld [vmem:[%s1562 + $0x18] sm:$0xff]
        %v1567 = vld [vmem:[%s12 + $0x1] sm:$0x1]
        %1568 = vmatprep.subr.mxu0 0.0
        %1569 = vmatpush1.msra.mxu0 %v1563
        %1570 = vmatprep.subr.mxu0 0.0
        %1571 = vmatpush1.msra.mxu0 %v1564
        %1572 = vmatprep.subr.mxu0 0.0
        %1573 = vmatpush1.msra.mxu0 %v1565
        %1574 = vmatprep.subr.mxu0 0.0
        %1575 = vmatpush1.msra.mxu0 %v1566
        %1576 = vmatprep.subr.mxu0 0.0
        %1577 = vmatpush1.msra.mxu0 0.0
        %1578 = vmatprep.subr.mxu0 0.0
        %1579 = vmatpush1.msra.mxu0 0.0
        %1580 = vmatprep.subr.mxu0 0.0
        %1581 = vmatpush1.msra.mxu0 0.0
        %1582 = vmatprep.subr.mxu0 0.0
        %1583 = vmatpush1.msra.mxu0 0.0
        %1584 = vmatprep.subr.mxu0 0.0
        %1585 = vmatpush1.msra.mxu0 0.0
        %1586 = vmatprep.subr.mxu0 0.0
        %1587 = vmatpush1.msra.mxu0 0.0
        %1588 = vmatprep.subr.mxu0 0.0
        %1589 = vmatpush1.msra.mxu0 0.0
        %1590 = vmatprep.subr.mxu0 0.0
        %1591 = vmatpush1.msra.mxu0 0.0
        %1592 = vmatprep.subr.mxu0 0.0
        %1593 = vmatpush1.msra.mxu0 0.0
        %1594 = vmatprep.subr.mxu0 0.0
        %1595 = vmatpush1.msra.mxu0 0.0
        %1596 = vmatprep.subr.mxu0 0.0
        %1597 = vmatpush1.msra.mxu0 0.0
        %1598 = vmatprep.subr.mxu0 0.0
        %1599 = vmatpush1.msra.mxu0 0.0
        %1600 = vmatprep.subr.mxu0 0.0
        %1601 = vmatpush1.msra.mxu0 0.0
        %1602 = vmatprep.subr.mxu0 0.0
        %1603 = vmatpush1.msra.mxu0 0.0
        %1604 = vmatprep.subr.mxu0 0.0
        %1605 = vmatpush1.msra.mxu0 0.0
        %1606 = vmatprep.subr.mxu0 0.0
        %1607 = vmatpush1.msra.mxu0 0.0
        %1608 = vmatprep.subr.mxu0 0.0
        %1609 = vmatpush1.msra.mxu0 0.0
        %1610 = vmatprep.subr.mxu0 0.0
        %1611 = vmatpush1.msra.mxu0 0.0
        %1612 = vmatprep.subr.mxu0 0.0
        %1613 = vmatpush1.msra.mxu0 0.0
        %1614 = vmatprep.subr.mxu0 0.0
        %1615 = vmatpush1.msra.mxu0 0.0
        %1616 = vmatprep.subr.mxu0 0.0
        %1617 = vmatpush1.msra.mxu0 0.0
        %1618 = vmatprep.subr.mxu0 0.0
        %1619 = vmatpush1.msra.mxu0 0.0
        %1620 = vmatprep.subr.mxu0 0.0
        %1621 = vmatpush1.msra.mxu0 0.0
        %1622 = vmatprep.subr.mxu0 0.0
        %1623 = vmatpush1.msra.mxu0 0.0
        %1624 = vmatprep.subr.mxu0 0.0
        %1625 = vmatpush1.msra.mxu0 0.0
        %1626 = vmatprep.subr.mxu0 0.0
        %1627 = vmatpush1.msra.mxu0 0.0
        %1628 = vmatprep.subr.mxu0 0.0
        %1629 = vmatpush1.msra.mxu0 0.0
        %1630 = vmatprep.subr.mxu0 0.0
        %1631 = vmatpush1.msra.mxu0 0.0
        %1632 = vmatprep.mubr.f32.mxu0 0.0
        %1633 = vmatmul.mubr.f32.gmra.mrb[0].mxu0 %v1490
        %v1634 = vpop.f32.mrb[0].mxu0
        %v1635 = vadd.f32 %v1567, %v1634
        %v1636 = vpop.f32.mrb[0].mxu0
        %1637 = vdwg.mxu0
        %s1638 = scalar_lea.vmem [#allocation9], 64
        %v1639 = vld [vmem:[%s1638] sm:$0xff]
        %v1640 = vld [vmem:[%s1638 + $0x8] sm:$0xff]
        %v1641 = vld [vmem:[%s1638 + $0x10] sm:$0xff]
        %v1642 = vld [vmem:[%s1638 + $0x18] sm:$0xff]
        %v1643 = vld [vmem:[%s12 + $0x2] sm:$0x1]
        %1644 = vmatprep.subr.mxu0 0.0
        %1645 = vmatpush1.msra.mxu0 %v1639
        %1646 = vmatprep.subr.mxu0 0.0
        %1647 = vmatpush1.msra.mxu0 %v1640
        %1648 = vmatprep.subr.mxu0 0.0
        %1649 = vmatpush1.msra.mxu0 %v1641
        %1650 = vmatprep.subr.mxu0 0.0
        %1651 = vmatpush1.msra.mxu0 %v1642
        %1652 = vmatprep.subr.mxu0 0.0
        %1653 = vmatpush1.msra.mxu0 0.0
        %1654 = vmatprep.subr.mxu0 0.0
        %1655 = vmatpush1.msra.mxu0 0.0
        %1656 = vmatprep.subr.mxu0 0.0
        %1657 = vmatpush1.msra.mxu0 0.0
        %1658 = vmatprep.subr.mxu0 0.0
        %1659 = vmatpush1.msra.mxu0 0.0
        %1660 = vmatprep.subr.mxu0 0.0
        %1661 = vmatpush1.msra.mxu0 0.0
        %1662 = vmatprep.subr.mxu0 0.0
        %1663 = vmatpush1.msra.mxu0 0.0
        %1664 = vmatprep.subr.mxu0 0.0
        %1665 = vmatpush1.msra.mxu0 0.0
        %1666 = vmatprep.subr.mxu0 0.0
        %1667 = vmatpush1.msra.mxu0 0.0
        %1668 = vmatprep.subr.mxu0 0.0
        %1669 = vmatpush1.msra.mxu0 0.0
        %1670 = vmatprep.subr.mxu0 0.0
        %1671 = vmatpush1.msra.mxu0 0.0
        %1672 = vmatprep.subr.mxu0 0.0
        %1673 = vmatpush1.msra.mxu0 0.0
        %1674 = vmatprep.subr.mxu0 0.0
        %1675 = vmatpush1.msra.mxu0 0.0
        %1676 = vmatprep.subr.mxu0 0.0
        %1677 = vmatpush1.msra.mxu0 0.0
        %1678 = vmatprep.subr.mxu0 0.0
        %1679 = vmatpush1.msra.mxu0 0.0
        %1680 = vmatprep.subr.mxu0 0.0
        %1681 = vmatpush1.msra.mxu0 0.0
        %1682 = vmatprep.subr.mxu0 0.0
        %1683 = vmatpush1.msra.mxu0 0.0
        %1684 = vmatprep.subr.mxu0 0.0
        %1685 = vmatpush1.msra.mxu0 0.0
        %1686 = vmatprep.subr.mxu0 0.0
        %1687 = vmatpush1.msra.mxu0 0.0
        %1688 = vmatprep.subr.mxu0 0.0
        %1689 = vmatpush1.msra.mxu0 0.0
        %1690 = vmatprep.subr.mxu0 0.0
        %1691 = vmatpush1.msra.mxu0 0.0
        %1692 = vmatprep.subr.mxu0 0.0
        %1693 = vmatpush1.msra.mxu0 0.0
        %1694 = vmatprep.subr.mxu0 0.0
        %1695 = vmatpush1.msra.mxu0 0.0
        %1696 = vmatprep.subr.mxu0 0.0
        %1697 = vmatpush1.msra.mxu0 0.0
        %1698 = vmatprep.subr.mxu0 0.0
        %1699 = vmatpush1.msra.mxu0 0.0
        %1700 = vmatprep.subr.mxu0 0.0
        %1701 = vmatpush1.msra.mxu0 0.0
        %1702 = vmatprep.subr.mxu0 0.0
        %1703 = vmatpush1.msra.mxu0 0.0
        %1704 = vmatprep.subr.mxu0 0.0
        %1705 = vmatpush1.msra.mxu0 0.0
        %1706 = vmatprep.subr.mxu0 0.0
        %1707 = vmatpush1.msra.mxu0 0.0
        %1708 = vmatprep.mubr.f32.mxu0 0.0
        %1709 = vmatmul.mubr.f32.gmra.mrb[0].mxu0 %v1490
        %v1710 = vpop.f32.mrb[0].mxu0
        %v1711 = vadd.f32 %v1643, %v1710
        %v1712 = vpop.f32.mrb[0].mxu0
        %1713 = vdwg.mxu0
        %v1714 = vmax.f32 %v1559, %v1635
        %v1715 = vmax.f32 %v1714, %v1711
        %v1716 = vsub.f32 %v1559, %v1715
        %v1717 = vmul.f32 %v1716, 1.442695
        %v1718 = vpow.pop %v1717
        %v1719 = vsub.f32 %v1635, %v1715
        %v1720 = vmul.f32 %v1719, 1.442695
        %v1721 = vpow.pop %v1720
        %v1722 = vsub.f32 %v1711, %v1715
        %v1723 = vmul.f32 %v1722, 1.442695
        %v1724 = vpow.pop %v1723
        %v1725 = vadd.f32 %v1718, %v1721
        %v1726 = vadd.f32 %v1725, %v1724
        %v1727 = vrcp.pop %v1726
        %v1728 = vmul.f32 1.0, %v1727
        %v1729 = vmul.f32 %v1718, %v1728
        %v1730 = vmul.f32 %v1721, %v1728
        %v1731 = vmul.f32 %v1724, %v1728
        %v1732 = vlaneseq
        %v1733 = vshrl.u32 %v1732, 7
        %v1734 = vsub.s32 0, %v1733
        %v1735 = vrot.slane %v1729, %v1734
        %v1736 = vmul.f32 %v1069, %v1735
        %v1737 = vmul.f32 %v1074, %v1735
        %v1738 = vmul.f32 %v1079, %v1735
        %v1739 = vmul.f32 %v1084, %v1735
        %v1740 = vmul.f32 %v1089, %v1735
        %v1741 = vmul.f32 %v1094, %v1735
        %v1742 = vmul.f32 %v1099, %v1735
        %v1743 = vmul.f32 %v1104, %v1735
        %v1744 = vlaneseq
        %v1745 = vshrl.u32 %v1744, 7
        %v1746 = vsub.s32 0, %v1745
        %v1747 = vrot.slane %v1730, %v1746
        %v1748 = vmul.f32 %v1197, %v1747
        %v1749 = vmul.f32 %v1202, %v1747
        %v1750 = vmul.f32 %v1207, %v1747
        %v1751 = vmul.f32 %v1212, %v1747
        %v1752 = vmul.f32 %v1217, %v1747
        %v1753 = vmul.f32 %v1222, %v1747
        %v1754 = vmul.f32 %v1227, %v1747
        %v1755 = vmul.f32 %v1232, %v1747
        %v1756 = vadd.f32 %v1736, %v1748
        %v1757 = vadd.f32 %v1737, %v1749
        %v1758 = vadd.f32 %v1738, %v1750
        %v1759 = vadd.f32 %v1739, %v1751
        %v1760 = vadd.f32 %v1740, %v1752
        %v1761 = vadd.f32 %v1741, %v1753
        %v1762 = vadd.f32 %v1742, %v1754
        %v1763 = vadd.f32 %v1743, %v1755
        %v1764 = vlaneseq
        %v1765 = vshrl.u32 %v1764, 7
        %v1766 = vsub.s32 0, %v1765
        %v1767 = vrot.slane %v1731, %v1766
        %v1768 = vmul.f32 %v1318, %v1767
        %v1769 = vmul.f32 %v1323, %v1767
        %v1770 = vmul.f32 %v1328, %v1767
        %v1771 = vmul.f32 %v1333, %v1767
        %v1772 = vmul.f32 %v1338, %v1767
        %v1773 = vmul.f32 %v1343, %v1767
        %v1774 = vmul.f32 %v1348, %v1767
        %v1775 = vmul.f32 %v1353, %v1767
        %v1776 = vadd.f32 %v1756, %v1768
        %v1777 = vadd.f32 %v1757, %v1769
        %v1778 = vadd.f32 %v1758, %v1770
        %v1779 = vadd.f32 %v1759, %v1771
        %v1780 = vadd.f32 %v1760, %v1772
        %v1781 = vadd.f32 %v1761, %v1773
        %v1782 = vadd.f32 %v1762, %v1774
        %v1783 = vadd.f32 %v1763, %v1775
        %v1784 = vld [vmem:[#allocation11] sm:$0xff]
        %v1785 = vld [vmem:[#allocation11 + $0x8] sm:$0xff]
        %v1786 = vld [vmem:[#allocation11 + $0x10] sm:$0xff]
        %v1787 = vld [vmem:[#allocation11 + $0x18] sm:$0xff]
        %v1788 = vld [vmem:[#allocation11 + $0x20] sm:$0xff]
        %v1789 = vld [vmem:[#allocation11 + $0x28] sm:$0xff]
        %v1790 = vld [vmem:[#allocation11 + $0x30] sm:$0xff]
        %v1791 = vld [vmem:[#allocation11 + $0x38] sm:$0xff]
        %v1792 = vld [vmem:[#allocation11 + $0x40] sm:$0xff]
        %v1793 = vld [vmem:[#allocation11 + $0x48] sm:$0xff]
        %v1794 = vld [vmem:[#allocation11 + $0x50] sm:$0xff]
        %v1795 = vld [vmem:[#allocation11 + $0x58] sm:$0xff]
        %v1796 = vld [vmem:[#allocation11 + $0x60] sm:$0xff]
        %v1797 = vld [vmem:[#allocation11 + $0x68] sm:$0xff]
        %v1798 = vld [vmem:[#allocation11 + $0x70] sm:$0xff]
        %v1799 = vld [vmem:[#allocation11 + $0x78] sm:$0xff]
        %v1800 = vld [vmem:[%s14] sm:$0x1]
        %v1802 = vlaneseq
        %v1803 = vshrl.u32 %v1802, 7
        %v1804 = vsub.s32 0, %v1803
        %v1805 = vrot.slane %v1800, %v1804
        %1807 = vmatprep.subr.mxu0 0.0
        %1808 = vmatpush1.msra.mxu0 %v1784
        %1809 = vmatprep.subr.mxu0 0.0
        %1810 = vmatpush1.msra.mxu0 %v1785
        %1811 = vmatprep.subr.mxu0 0.0
        %1812 = vmatpush1.msra.mxu0 %v1786
        %1813 = vmatprep.subr.mxu0 0.0
        %1814 = vmatpush1.msra.mxu0 %v1787
        %1815 = vmatprep.subr.mxu0 0.0
        %1816 = vmatpush1.msra.mxu0 %v1788
        %1817 = vmatprep.subr.mxu0 0.0
        %1818 = vmatpush1.msra.mxu0 %v1789
        %1819 = vmatprep.subr.mxu0 0.0
        %1820 = vmatpush1.msra.mxu0 %v1790
        %1821 = vmatprep.subr.mxu0 0.0
        %1822 = vmatpush1.msra.mxu0 %v1791
        %1823 = vmatprep.subr.mxu0 0.0
        %1824 = vmatpush1.msra.mxu0 %v1792
        %1825 = vmatprep.subr.mxu0 0.0
        %1826 = vmatpush1.msra.mxu0 %v1793
        %1827 = vmatprep.subr.mxu0 0.0
        %1828 = vmatpush1.msra.mxu0 %v1794
        %1829 = vmatprep.subr.mxu0 0.0
        %1830 = vmatpush1.msra.mxu0 %v1795
        %1831 = vmatprep.subr.mxu0 0.0
        %1832 = vmatpush1.msra.mxu0 %v1796
        %1833 = vmatprep.subr.mxu0 0.0
        %1834 = vmatpush1.msra.mxu0 %v1797
        %1835 = vmatprep.subr.mxu0 0.0
        %1836 = vmatpush1.msra.mxu0 %v1798
        %1837 = vmatprep.subr.mxu0 0.0
        %1838 = vmatpush1.msra.mxu0 %v1799
        %1839 = vmatprep.subr.mxu0 0.0
        %1840 = vmatpush1.msra.mxu0 0.0
        %1841 = vmatprep.subr.mxu0 0.0
        %1842 = vmatpush1.msra.mxu0 0.0
        %1843 = vmatprep.subr.mxu0 0.0
        %1844 = vmatpush1.msra.mxu0 0.0
        %1845 = vmatprep.subr.mxu0 0.0
        %1846 = vmatpush1.msra.mxu0 0.0
        %1847 = vmatprep.subr.mxu0 0.0
        %1848 = vmatpush1.msra.mxu0 0.0
        %1849 = vmatprep.subr.mxu0 0.0
        %1850 = vmatpush1.msra.mxu0 0.0
        %1851 = vmatprep.subr.mxu0 0.0
        %1852 = vmatpush1.msra.mxu0 0.0
        %1853 = vmatprep.subr.mxu0 0.0
        %1854 = vmatpush1.msra.mxu0 0.0
        %1855 = vmatprep.subr.mxu0 0.0
        %1856 = vmatpush1.msra.mxu0 0.0
        %1857 = vmatprep.subr.mxu0 0.0
        %1858 = vmatpush1.msra.mxu0 0.0
        %1859 = vmatprep.subr.mxu0 0.0
        %1860 = vmatpush1.msra.mxu0 0.0
        %1861 = vmatprep.subr.mxu0 0.0
        %1862 = vmatpush1.msra.mxu0 0.0
        %1863 = vmatprep.subr.mxu0 0.0
        %1864 = vmatpush1.msra.mxu0 0.0
        %1865 = vmatprep.subr.mxu0 0.0
        %1866 = vmatpush1.msra.mxu0 0.0
        %1867 = vmatprep.subr.mxu0 0.0
        %1868 = vmatpush1.msra.mxu0 0.0
        %1869 = vmatprep.subr.mxu0 0.0
        %1870 = vmatpush1.msra.mxu0 0.0
        %1871 = vmatprep.mubr.f32.mxu0 0.0
        %1872 = vmatmul.mubr.f32.gmra.mrb[0].mxu0 %v1776
        %v1873 = vpop.f32.mrb[0].mxu0
        %v1874 = vadd.f32 %v1805, %v1873
        %v1875 = vpop.f32.mrb[0].mxu0
        %1876 = vmatprep.mubr.f32.mxu0 0.0
        %1877 = vmatmul.mubr.f32.gmra.mrb[0].mxu0 %v1777
        %v1878 = vpop.f32.mrb[0].mxu0
        %v1879 = vadd.f32 %v1805, %v1878
        %v1880 = vpop.f32.mrb[0].mxu0
        %1881 = vmatprep.mubr.f32.mxu0 0.0
        %1882 = vmatmul.mubr.f32.gmra.mrb[0].mxu0 %v1778
        %v1883 = vpop.f32.mrb[0].mxu0
        %v1884 = vadd.f32 %v1805, %v1883
        %v1885 = vpop.f32.mrb[0].mxu0
        %1886 = vmatprep.mubr.f32.mxu0 0.0
        %1887 = vmatmul.mubr.f32.gmra.mrb[0].mxu0 %v1779
        %v1888 = vpop.f32.mrb[0].mxu0
        %v1889 = vadd.f32 %v1805, %v1888
        %v1890 = vpop.f32.mrb[0].mxu0
        %1891 = vmatprep.mubr.f32.mxu0 0.0
        %1892 = vmatmul.mubr.f32.gmra.mrb[0].mxu0 %v1780
        %v1893 = vpop.f32.mrb[0].mxu0
        %v1894 = vadd.f32 %v1805, %v1893
        %v1895 = vpop.f32.mrb[0].mxu0
        %1896 = vmatprep.mubr.f32.mxu0 0.0
        %1897 = vmatmul.mubr.f32.gmra.mrb[0].mxu0 %v1781
        %v1898 = vpop.f32.mrb[0].mxu0
        %v1899 = vadd.f32 %v1805, %v1898
        %v1900 = vpop.f32.mrb[0].mxu0
        %1901 = vmatprep.mubr.f32.mxu0 0.0
        %1902 = vmatmul.mubr.f32.gmra.mrb[0].mxu0 %v1782
        %v1903 = vpop.f32.mrb[0].mxu0
        %v1904 = vadd.f32 %v1805, %v1903
        %v1905 = vpop.f32.mrb[0].mxu0
        %1906 = vmatprep.mubr.f32.mxu0 0.0
        %1907 = vmatmul.mubr.f32.gmra.mrb[0].mxu0 %v1783
        %v1908 = vpop.f32.mrb[0].mxu0
        %v1909 = vadd.f32 %v1805, %v1908
        %v1910 = vpop.f32.mrb[0].mxu0
        %1911 = vdwg.mxu0
        %v1912 = vadd.f32 %v703, %v1874
        %v1913 = vadd.f32 %v704, %v1879
        %v1914 = vadd.f32 %v705, %v1884
        %v1915 = vadd.f32 %v706, %v1889
        %v1916 = vadd.f32 %v707, %v1894
        %v1917 = vadd.f32 %v708, %v1899
        %v1918 = vadd.f32 %v709, %v1904
        %v1919 = vadd.f32 %v710, %v1909
        %1920 = vadd.xlane.f32.xlu0 %v1912
        %v1921 = vpop.xlane.xlu0 %1920
        %1922 = vadd.xlane.f32.xlu0 %v1913
        %v1923 = vpop.xlane.xlu0 %1922
        %1924 = vadd.xlane.f32.xlu0 %v1914
        %v1925 = vpop.xlane.xlu0 %1924
        %1926 = vadd.xlane.f32.xlu0 %v1915
        %v1927 = vpop.xlane.xlu0 %1926
        %1928 = vadd.xlane.f32.xlu0 %v1916
        %v1929 = vpop.xlane.xlu0 %1928
        %1930 = vadd.xlane.f32.xlu0 %v1917
        %v1931 = vpop.xlane.xlu0 %1930
        %1932 = vadd.xlane.f32.xlu0 %v1918
        %v1933 = vpop.xlane.xlu0 %1932
        %1934 = vadd.xlane.f32.xlu0 %v1919
        %v1935 = vpop.xlane.xlu0 %1934
        %v1936 = vmul.f32 %v1921, %v732
        %v1937 = vmul.f32 %v1923, %v732
        %v1938 = vmul.f32 %v1925, %v732
        %v1939 = vmul.f32 %v1927, %v732
        %v1940 = vmul.f32 %v1929, %v732
        %v1941 = vmul.f32 %v1931, %v732
        %v1942 = vmul.f32 %v1933, %v732
        %v1943 = vmul.f32 %v1935, %v732
        %v1944 = vsub.f32 %v1912, %v1936
        %v1945 = vsub.f32 %v1913, %v1937
        %v1946 = vsub.f32 %v1914, %v1938
        %v1947 = vsub.f32 %v1915, %v1939
        %v1948 = vsub.f32 %v1916, %v1940
        %v1949 = vsub.f32 %v1917, %v1941
        %v1950 = vsub.f32 %v1918, %v1942
        %v1951 = vsub.f32 %v1919, %v1943
        %v1952 = vmul.f32 %v1944, %v1944
        %v1953 = vmul.f32 %v1945, %v1945
        %v1954 = vmul.f32 %v1946, %v1946
        %v1955 = vmul.f32 %v1947, %v1947
        %v1956 = vmul.f32 %v1948, %v1948
        %v1957 = vmul.f32 %v1949, %v1949
        %v1958 = vmul.f32 %v1950, %v1950
        %v1959 = vmul.f32 %v1951, %v1951
        %1960 = vadd.xlane.f32.xlu0 %v1952
        %v1961 = vpop.xlane.xlu0 %1960
        %1962 = vadd.xlane.f32.xlu0 %v1953
        %v1963 = vpop.xlane.xlu0 %1962
        %1964 = vadd.xlane.f32.xlu0 %v1954
        %v1965 = vpop.xlane.xlu0 %1964
        %1966 = vadd.xlane.f32.xlu0 %v1955
        %v1967 = vpop.xlane.xlu0 %1966
        %1968 = vadd.xlane.f32.xlu0 %v1956
        %v1969 = vpop.xlane.xlu0 %1968
        %1970 = vadd.xlane.f32.xlu0 %v1957
        %v1971 = vpop.xlane.xlu0 %1970
        %1972 = vadd.xlane.f32.xlu0 %v1958
        %v1973 = vpop.xlane.xlu0 %1972
        %1974 = vadd.xlane.f32.xlu0 %v1959
        %v1975 = vpop.xlane.xlu0 %1974
        %v1976 = vmul.f32 %v1961, %v732
        %v1977 = vmul.f32 %v1963, %v732
        %v1978 = vmul.f32 %v1965, %v732
        %v1979 = vmul.f32 %v1967, %v732
        %v1980 = vmul.f32 %v1969, %v732
        %v1981 = vmul.f32 %v1971, %v732
        %v1982 = vmul.f32 %v1973, %v732
        %v1983 = vmul.f32 %v1975, %v732
        %v1984 = vadd.f32 %v1976, 1e-05
        %v1985 = vadd.f32 %v1977, 1e-05
        %v1986 = vadd.f32 %v1978, 1e-05
        %v1987 = vadd.f32 %v1979, 1e-05
        %v1988 = vadd.f32 %v1980, 1e-05
        %v1989 = vadd.f32 %v1981, 1e-05
        %v1990 = vadd.f32 %v1982, 1e-05
        %v1991 = vadd.f32 %v1983, 1e-05
        %v1992 = vrsqrt.pop %v1984
        %v1993 = vrsqrt.pop %v1985
        %v1994 = vrsqrt.pop %v1986
        %v1995 = vrsqrt.pop %v1987
        %v1996 = vrsqrt.pop %v1988
        %v1997 = vrsqrt.pop %v1989
        %v1998 = vrsqrt.pop %v1990
        %v1999 = vrsqrt.pop %v1991
        %v2000 = vmul.f32 %v1944, %v1992
        %v2001 = vmul.f32 %v1945, %v1993
        %v2002 = vmul.f32 %v1946, %v1994
        %v2003 = vmul.f32 %v1947, %v1995
        %v2004 = vmul.f32 %v1948, %v1996
        %v2005 = vmul.f32 %v1949, %v1997
        %v2006 = vmul.f32 %v1950, %v1998
        %v2007 = vmul.f32 %v1951, %v1999
        %v2008 = vld [vmem:[#allocation12] sm:$0xff]
        %v2009 = vld [vmem:[#allocation12 + $0x8] sm:$0xff]
        %v2010 = vld [vmem:[#allocation12 + $0x10] sm:$0xff]
        %v2011 = vld [vmem:[#allocation12 + $0x18] sm:$0xff]
        %v2012 = vld [vmem:[#allocation12 + $0x20] sm:$0xff]
        %v2013 = vld [vmem:[#allocation12 + $0x28] sm:$0xff]
        %v2014 = vld [vmem:[#allocation12 + $0x30] sm:$0xff]
        %v2015 = vld [vmem:[#allocation12 + $0x38] sm:$0xff]
        %v2016 = vld [vmem:[#allocation12 + $0x40] sm:$0xff]
        %v2017 = vld [vmem:[#allocation12 + $0x48] sm:$0xff]
        %v2018 = vld [vmem:[#allocation12 + $0x50] sm:$0xff]
        %v2019 = vld [vmem:[#allocation12 + $0x58] sm:$0xff]
        %v2020 = vld [vmem:[#allocation12 + $0x60] sm:$0xff]
        %v2021 = vld [vmem:[#allocation12 + $0x68] sm:$0xff]
        %v2022 = vld [vmem:[#allocation12 + $0x70] sm:$0xff]
        %v2023 = vld [vmem:[#allocation12 + $0x78] sm:$0xff]
        %v2024 = vld [vmem:[#allocation12 + $0x80] sm:$0xff]
        %v2025 = vld [vmem:[#allocation12 + $0x88] sm:$0xff]
        %v2026 = vld [vmem:[#allocation12 + $0x90] sm:$0xff]
        %v2027 = vld [vmem:[#allocation12 + $0x98] sm:$0xff]
        %v2028 = vld [vmem:[#allocation12 + $0xa0] sm:$0xff]
        %v2029 = vld [vmem:[#allocation12 + $0xa8] sm:$0xff]
        %v2030 = vld [vmem:[#allocation12 + $0xb0] sm:$0xff]
        %v2031 = vld [vmem:[#allocation12 + $0xb8] sm:$0xff]
        %v2032 = vld [vmem:[#allocation12 + $0xc0] sm:$0xff]
        %v2033 = vld [vmem:[#allocation12 + $0xc8] sm:$0xff]
        %v2034 = vld [vmem:[#allocation12 + $0xd0] sm:$0xff]
        %v2035 = vld [vmem:[#allocation12 + $0xd8] sm:$0xff]
        %v2036 = vld [vmem:[#allocation12 + $0xe0] sm:$0xff]
        %v2037 = vld [vmem:[#allocation12 + $0xe8] sm:$0xff]
        %v2038 = vld [vmem:[#allocation12 + $0xf0] sm:$0xff]
        %v2039 = vld [vmem:[#allocation12 + $0xf8] sm:$0xff]
        %v2040 = vld [vmem:[#allocation12 + $0x100] sm:$0xff]
        %v2041 = vld [vmem:[#allocation12 + $0x108] sm:$0xff]
        %v2042 = vld [vmem:[#allocation12 + $0x110] sm:$0xff]
        %v2043 = vld [vmem:[#allocation12 + $0x118] sm:$0xff]
        %v2044 = vld [vmem:[#allocation12 + $0x120] sm:$0xff]
        %v2045 = vld [vmem:[#allocation12 + $0x128] sm:$0xff]
        %v2046 = vld [vmem:[#allocation12 + $0x130] sm:$0xff]
        %v2047 = vld [vmem:[#allocation12 + $0x138] sm:$0xff]
        %v2048 = vld [vmem:[#allocation12 + $0x140] sm:$0xff]
        %v2049 = vld [vmem:[#allocation12 + $0x148] sm:$0xff]
        %v2050 = vld [vmem:[#allocation12 + $0x150] sm:$0xff]
        %v2051 = vld [vmem:[#allocation12 + $0x158] sm:$0xff]
        %v2052 = vld [vmem:[#allocation12 + $0x160] sm:$0xff]
        %v2053 = vld [vmem:[#allocation12 + $0x168] sm:$0xff]
        %v2054 = vld [vmem:[#allocation12 + $0x170] sm:$0xff]
        %v2055 = vld [vmem:[#allocation12 + $0x178] sm:$0xff]
        %v2056 = vld [vmem:[#allocation12 + $0x180] sm:$0xff]
        %v2057 = vld [vmem:[#allocation12 + $0x188] sm:$0xff]
        %v2058 = vld [vmem:[#allocation12 + $0x190] sm:$0xff]
        %v2059 = vld [vmem:[#allocation12 + $0x198] sm:$0xff]
        %v2060 = vld [vmem:[#allocation12 + $0x1a0] sm:$0xff]
        %v2061 = vld [vmem:[#allocation12 + $0x1a8] sm:$0xff]
        %v2062 = vld [vmem:[#allocation12 + $0x1b0] sm:$0xff]
        %v2063 = vld [vmem:[#allocation12 + $0x1b8] sm:$0xff]
        %v2064 = vld [vmem:[#allocation12 + $0x1c0] sm:$0xff]
        %v2065 = vld [vmem:[#allocation12 + $0x1c8] sm:$0xff]
        %v2066 = vld [vmem:[#allocation12 + $0x1d0] sm:$0xff]
        %v2067 = vld [vmem:[#allocation12 + $0x1d8] sm:$0xff]
        %v2068 = vld [vmem:[#allocation12 + $0x1e0] sm:$0xff]
        %v2069 = vld [vmem:[#allocation12 + $0x1e8] sm:$0xff]
        %v2070 = vld [vmem:[#allocation12 + $0x1f0] sm:$0xff]
        %v2071 = vld [vmem:[#allocation12 + $0x1f8] sm:$0xff]
        %v2072 = vld [vmem:[%s16] sm:$0xf]
        %v2074 = vlaneseq
        %v2075 = vshrl.u32 %v2074, 7
        %v2076 = vsub.s32 0, %v2075
        %v2077 = vrot.slane %v2072, %v2076
        %v2078 = vlaneseq
        %v2079 = vshrl.u32 %v2078, 7
        %v2080 = vsub.s32 1, %v2079
        %v2081 = vrot.slane %v2072, %v2080
        %v2082 = vlaneseq
        %v2083 = vshrl.u32 %v2082, 7
        %v2084 = vsub.s32 2, %v2083
        %v2085 = vrot.slane %v2072, %v2084
        %v2086 = vlaneseq
        %v2087 = vshrl.u32 %v2086, 7
        %v2088 = vsub.s32 3, %v2087
        %v2089 = vrot.slane %v2072, %v2088
        %2094 = vmatprep.subr.mxu0 %v2009
        %2095 = vmatpush1.msra.mxu0 %v2008
        %2096 = vmatprep.subr.mxu0 %v2013
        %2097 = vmatpush1.msra.mxu0 %v2012
        %2098 = vmatprep.subr.mxu0 %v2017
        %2099 = vmatpush1.msra.mxu0 %v2016
        %2100 = vmatprep.subr.mxu0 %v2021
        %2101 = vmatpush1.msra.mxu0 %v2020
        %2102 = vmatprep.subr.mxu0 %v2025
        %2103 = vmatpush1.msra.mxu0 %v2024
        %2104 = vmatprep.subr.mxu0 %v2029
        %2105 = vmatpush1.msra.mxu0 %v2028
        %2106 = vmatprep.subr.mxu0 %v2033
        %2107 = vmatpush1.msra.mxu0 %v2032
        %2108 = vmatprep.subr.mxu0 %v2037
        %2109 = vmatpush1.msra.mxu0 %v2036
        %2110 = vmatprep.subr.mxu0 %v2041
        %2111 = vmatpush1.msra.mxu0 %v2040
        %2112 = vmatprep.subr.mxu0 %v2045
        %2113 = vmatpush1.msra.mxu0 %v2044
        %2114 = vmatprep.subr.mxu0 %v2049
        %2115 = vmatpush1.msra.mxu0 %v2048
        %2116 = vmatprep.subr.mxu0 %v2053
        %2117 = vmatpush1.msra.mxu0 %v2052
        %2118 = vmatprep.subr.mxu0 %v2057
        %2119 = vmatpush1.msra.mxu0 %v2056
        %2120 = vmatprep.subr.mxu0 %v2061
        %2121 = vmatpush1.msra.mxu0 %v2060
        %2122 = vmatprep.subr.mxu0 %v2065
        %2123 = vmatpush1.msra.mxu0 %v2064
        %2124 = vmatprep.subr.mxu0 %v2069
        %2125 = vmatpush1.msra.mxu0 %v2068
        %2126 = vmatprep.subr.mxu0 0.0
        %2127 = vmatpush1.msra.mxu0 0.0
        %2128 = vmatprep.subr.mxu0 0.0
        %2129 = vmatpush1.msra.mxu0 0.0
        %2130 = vmatprep.subr.mxu0 0.0
        %2131 = vmatpush1.msra.mxu0 0.0
        %2132 = vmatprep.subr.mxu0 0.0
        %2133 = vmatpush1.msra.mxu0 0.0
        %2134 = vmatprep.subr.mxu0 0.0
        %2135 = vmatpush1.msra.mxu0 0.0
        %2136 = vmatprep.subr.mxu0 0.0
        %2137 = vmatpush1.msra.mxu0 0.0
        %2138 = vmatprep.subr.mxu0 0.0
        %2139 = vmatpush1.msra.mxu0 0.0
        %2140 = vmatprep.subr.mxu0 0.0
        %2141 = vmatpush1.msra.mxu0 0.0
        %2142 = vmatprep.subr.mxu0 0.0
        %2143 = vmatpush1.msra.mxu0 0.0
        %2144 = vmatprep.subr.mxu0 0.0
        %2145 = vmatpush1.msra.mxu0 0.0
        %2146 = vmatprep.subr.mxu0 0.0
        %2147 = vmatpush1.msra.mxu0 0.0
        %2148 = vmatprep.subr.mxu0 0.0
        %2149 = vmatpush1.msra.mxu0 0.0
        %2150 = vmatprep.subr.mxu0 0.0
        %2151 = vmatpush1.msra.mxu0 0.0
        %2152 = vmatprep.subr.mxu0 0.0
        %2153 = vmatpush1.msra.mxu0 0.0
        %2154 = vmatprep.subr.mxu0 0.0
        %2155 = vmatpush1.msra.mxu0 0.0
        %2156 = vmatprep.subr.mxu0 0.0
        %2157 = vmatpush1.msra.mxu0 0.0
        %2158 = vmatprep.mubr.f32.mxu0 0.0
        %2159 = vmatmul.mubr.f32.gmra.mrb[0].mxu0 %v2000
        %v2160 = vpop.f32.mrb[0].mxu0
        %v2161 = vadd.f32 %v2077, %v2160
        %v2162 = vpop.f32.mrb[0].mxu0
        %v2163 = vadd.f32 %v2081, %v2162
        %2164 = vmatprep.mubr.f32.mxu0 0.0
        %2165 = vmatmul.mubr.f32.gmra.mrb[0].mxu0 %v2001
        %v2166 = vpop.f32.mrb[0].mxu0
        %v2167 = vadd.f32 %v2077, %v2166
        %v2168 = vpop.f32.mrb[0].mxu0
        %v2169 = vadd.f32 %v2081, %v2168
        %2170 = vmatprep.mubr.f32.mxu0 0.0
        %2171 = vmatmul.mubr.f32.gmra.mrb[0].mxu0 %v2002
        %v2172 = vpop.f32.mrb[0].mxu0
        %v2173 = vadd.f32 %v2077, %v2172
        %v2174 = vpop.f32.mrb[0].mxu0
        %v2175 = vadd.f32 %v2081, %v2174
        %2176 = vmatprep.mubr.f32.mxu0 0.0
        %2177 = vmatmul.mubr.f32.gmra.mrb[0].mxu0 %v2003
        %v2178 = vpop.f32.mrb[0].mxu0
        %v2179 = vadd.f32 %v2077, %v2178
        %v2180 = vpop.f32.mrb[0].mxu0
        %v2181 = vadd.f32 %v2081, %v2180
        %2182 = vmatprep.mubr.f32.mxu0 0.0
        %2183 = vmatmul.mubr.f32.gmra.mrb[0].mxu0 %v2004
        %v2184 = vpop.f32.mrb[0].mxu0
        %v2185 = vadd.f32 %v2077, %v2184
        %v2186 = vpop.f32.mrb[0].mxu0
        %v2187 = vadd.f32 %v2081, %v2186
        %2188 = vmatprep.mubr.f32.mxu0 0.0
        %2189 = vmatmul.mubr.f32.gmra.mrb[0].mxu0 %v2005
        %v2190 = vpop.f32.mrb[0].mxu0
        %v2191 = vadd.f32 %v2077, %v2190
        %v2192 = vpop.f32.mrb[0].mxu0
        %v2193 = vadd.f32 %v2081, %v2192
        %2194 = vmatprep.mubr.f32.mxu0 0.0
        %2195 = vmatmul.mubr.f32.gmra.mrb[0].mxu0 %v2006
        %v2196 = vpop.f32.mrb[0].mxu0
        %v2197 = vadd.f32 %v2077, %v2196
        %v2198 = vpop.f32.mrb[0].mxu0
        %v2199 = vadd.f32 %v2081, %v2198
        %2200 = vmatprep.mubr.f32.mxu0 0.0
        %2201 = vmatmul.mubr.f32.gmra.mrb[0].mxu0 %v2007
        %v2202 = vpop.f32.mrb[0].mxu0
        %v2203 = vadd.f32 %v2077, %v2202
        %v2204 = vpop.f32.mrb[0].mxu0
        %v2205 = vadd.f32 %v2081, %v2204
        %2206 = vdwg.mxu0
        %2207 = vmatprep.subr.mxu0 %v2011
        %2208 = vmatpush1.msra.mxu0 %v2010
        %2209 = vmatprep.subr.mxu0 %v2015
        %2210 = vmatpush1.msra.mxu0 %v2014
        %2211 = vmatprep.subr.mxu0 %v2019
        %2212 = vmatpush1.msra.mxu0 %v2018
        %2213 = vmatprep.subr.mxu0 %v2023
        %2214 = vmatpush1.msra.mxu0 %v2022
        %2215 = vmatprep.subr.mxu0 %v2027
        %2216 = vmatpush1.msra.mxu0 %v2026
        %2217 = vmatprep.subr.mxu0 %v2031
        %2218 = vmatpush1.msra.mxu0 %v2030
        %2219 = vmatprep.subr.mxu0 %v2035
        %2220 = vmatpush1.msra.mxu0 %v2034
        %2221 = vmatprep.subr.mxu0 %v2039
        %2222 = vmatpush1.msra.mxu0 %v2038
        %2223 = vmatprep.subr.mxu0 %v2043
        %2224 = vmatpush1.msra.mxu0 %v2042
        %2225 = vmatprep.subr.mxu0 %v2047
        %2226 = vmatpush1.msra.mxu0 %v2046
        %2227 = vmatprep.subr.mxu0 %v2051
        %2228 = vmatpush1.msra.mxu0 %v2050
        %2229 = vmatprep.subr.mxu0 %v2055
        %2230 = vmatpush1.msra.mxu0 %v2054
        %2231 = vmatprep.subr.mxu0 %v2059
        %2232 = vmatpush1.msra.mxu0 %v2058
        %2233 = vmatprep.subr.mxu0 %v2063
        %2234 = vmatpush1.msra.mxu0 %v2062
        %2235 = vmatprep.subr.mxu0 %v2067
        %2236 = vmatpush1.msra.mxu0 %v2066
        %2237 = vmatprep.subr.mxu0 %v2071
        %2238 = vmatpush1.msra.mxu0 %v2070
        %2239 = vmatprep.subr.mxu0 0.0
        %2240 = vmatpush1.msra.mxu0 0.0
        %2241 = vmatprep.subr.mxu0 0.0
        %2242 = vmatpush1.msra.mxu0 0.0
        %2243 = vmatprep.subr.mxu0 0.0
        %2244 = vmatpush1.msra.mxu0 0.0
        %2245 = vmatprep.subr.mxu0 0.0
        %2246 = vmatpush1.msra.mxu0 0.0
        %2247 = vmatprep.subr.mxu0 0.0
        %2248 = vmatpush1.msra.mxu0 0.0
        %2249 = vmatprep.subr.mxu0 0.0
        %2250 = vmatpush1.msra.mxu0 0.0
        %2251 = vmatprep.subr.mxu0 0.0
        %2252 = vmatpush1.msra.mxu0 0.0
        %2253 = vmatprep.subr.mxu0 0.0
        %2254 = vmatpush1.msra.mxu0 0.0
        %2255 = vmatprep.subr.mxu0 0.0
        %2256 = vmatpush1.msra.mxu0 0.0
        %2257 = vmatprep.subr.mxu0 0.0
        %2258 = vmatpush1.msra.mxu0 0.0
        %2259 = vmatprep.subr.mxu0 0.0
        %2260 = vmatpush1.msra.mxu0 0.0
        %2261 = vmatprep.subr.mxu0 0.0
        %2262 = vmatpush1.msra.mxu0 0.0
        %2263 = vmatprep.subr.mxu0 0.0
        %2264 = vmatpush1.msra.mxu0 0.0
        %2265 = vmatprep.subr.mxu0 0.0
        %2266 = vmatpush1.msra.mxu0 0.0
        %2267 = vmatprep.subr.mxu0 0.0
        %2268 = vmatpush1.msra.mxu0 0.0
        %2269 = vmatprep.subr.mxu0 0.0
        %2270 = vmatpush1.msra.mxu0 0.0
        %2271 = vmatprep.mubr.f32.mxu0 0.0
        %2272 = vmatmul.mubr.f32.gmra.mrb[0].mxu0 %v2000
        %v2273 = vpop.f32.mrb[0].mxu0
        %v2274 = vadd.f32 %v2085, %v2273
        %v2275 = vpop.f32.mrb[0].mxu0
        %v2276 = vadd.f32 %v2089, %v2275
        %2277 = vmatprep.mubr.f32.mxu0 0.0
        %2278 = vmatmul.mubr.f32.gmra.mrb[0].mxu0 %v2001
        %v2279 = vpop.f32.mrb[0].mxu0
        %v2280 = vadd.f32 %v2085, %v2279
        %v2281 = vpop.f32.mrb[0].mxu0
        %v2282 = vadd.f32 %v2089, %v2281
        %2283 = vmatprep.mubr.f32.mxu0 0.0
        %2284 = vmatmul.mubr.f32.gmra.mrb[0].mxu0 %v2002
        %v2285 = vpop.f32.mrb[0].mxu0
        %v2286 = vadd.f32 %v2085, %v2285
        %v2287 = vpop.f32.mrb[0].mxu0
        %v2288 = vadd.f32 %v2089, %v2287
        %2289 = vmatprep.mubr.f32.mxu0 0.0
        %2290 = vmatmul.mubr.f32.gmra.mrb[0].mxu0 %v2003
        %v2291 = vpop.f32.mrb[0].mxu0
        %v2292 = vadd.f32 %v2085, %v2291
        %v2293 = vpop.f32.mrb[0].mxu0
        %v2294 = vadd.f32 %v2089, %v2293
        %2295 = vmatprep.mubr.f32.mxu0 0.0
        %2296 = vmatmul.mubr.f32.gmra.mrb[0].mxu0 %v2004
        %v2297 = vpop.f32.mrb[0].mxu0
        %v2298 = vadd.f32 %v2085, %v2297
        %v2299 = vpop.f32.mrb[0].mxu0
        %v2300 = vadd.f32 %v2089, %v2299
        %2301 = vmatprep.mubr.f32.mxu0 0.0
        %2302 = vmatmul.mubr.f32.gmra.mrb[0].mxu0 %v2005
        %v2303 = vpop.f32.mrb[0].mxu0
        %v2304 = vadd.f32 %v2085, %v2303
        %v2305 = vpop.f32.mrb[0].mxu0
        %v2306 = vadd.f32 %v2089, %v2305
        %2307 = vmatprep.mubr.f32.mxu0 0.0
        %2308 = vmatmul.mubr.f32.gmra.mrb[0].mxu0 %v2006
        %v2309 = vpop.f32.mrb[0].mxu0
        %v2310 = vadd.f32 %v2085, %v2309
        %v2311 = vpop.f32.mrb[0].mxu0
        %v2312 = vadd.f32 %v2089, %v2311
        %2313 = vmatprep.mubr.f32.mxu0 0.0
        %2314 = vmatmul.mubr.f32.gmra.mrb[0].mxu0 %v2007
        %v2315 = vpop.f32.mrb[0].mxu0
        %v2316 = vadd.f32 %v2085, %v2315
        %v2317 = vpop.f32.mrb[0].mxu0
        %v2318 = vadd.f32 %v2089, %v2317
        %2319 = vdwg.mxu0
        %v2320 = vmul.f32 %v2161, 0.5
        %v2321 = vmul.f32 %v2163, 0.5
        %v2322 = vmul.f32 %v2274, 0.5
        %v2323 = vmul.f32 %v2276, 0.5
        %v2324 = vmul.f32 %v2167, 0.5
        %v2325 = vmul.f32 %v2169, 0.5
        %v2326 = vmul.f32 %v2280, 0.5
        %v2327 = vmul.f32 %v2282, 0.5
        %v2328 = vmul.f32 %v2173, 0.5
        %v2329 = vmul.f32 %v2175, 0.5
        %v2330 = vmul.f32 %v2286, 0.5
        %v2331 = vmul.f32 %v2288, 0.5
        %v2332 = vmul.f32 %v2179, 0.5
        %v2333 = vmul.f32 %v2181, 0.5
        %v2334 = vmul.f32 %v2292, 0.5
        %v2335 = vmul.f32 %v2294, 0.5
        %v2336 = vmul.f32 %v2185, 0.5
        %v2337 = vmul.f32 %v2187, 0.5
        %v2338 = vmul.f32 %v2298, 0.5
        %v2339 = vmul.f32 %v2300, 0.5
        %v2340 = vmul.f32 %v2191, 0.5
        %v2341 = vmul.f32 %v2193, 0.5
        %v2342 = vmul.f32 %v2304, 0.5
        %v2343 = vmul.f32 %v2306, 0.5
        %v2344 = vmul.f32 %v2197, 0.5
        %v2345 = vmul.f32 %v2199, 0.5
        %v2346 = vmul.f32 %v2310, 0.5
        %v2347 = vmul.f32 %v2312, 0.5
        %v2348 = vmul.f32 %v2203, 0.5
        %v2349 = vmul.f32 %v2205, 0.5
        %v2350 = vmul.f32 %v2316, 0.5
        %v2351 = vmul.f32 %v2318, 0.5
        %v2352 = vmul.f32 %v2161, 0.044715
        %v2353 = vmul.f32 %v2163, 0.044715
        %v2354 = vmul.f32 %v2274, 0.044715
        %v2355 = vmul.f32 %v2276, 0.044715
        %v2356 = vmul.f32 %v2167, 0.044715
        %v2357 = vmul.f32 %v2169, 0.044715
        %v2358 = vmul.f32 %v2280, 0.044715
        %v2359 = vmul.f32 %v2282, 0.044715
        %v2360 = vmul.f32 %v2173, 0.044715
        %v2361 = vmul.f32 %v2175, 0.044715
        %v2362 = vmul.f32 %v2286, 0.044715
        %v2363 = vmul.f32 %v2288, 0.044715
        %v2364 = vmul.f32 %v2179, 0.044715
        %v2365 = vmul.f32 %v2181, 0.044715
        %v2366 = vmul.f32 %v2292, 0.044715
        %v2367 = vmul.f32 %v2294, 0.044715
        %v2368 = vmul.f32 %v2185, 0.044715
        %v2369 = vmul.f32 %v2187, 0.044715
        %v2370 = vmul.f32 %v2298, 0.044715
        %v2371 = vmul.f32 %v2300, 0.044715
        %v2372 = vmul.f32 %v2191, 0.044715
        %v2373 = vmul.f32 %v2193, 0.044715
        %v2374 = vmul.f32 %v2304, 0.044715
        %v2375 = vmul.f32 %v2306, 0.044715
        %v2376 = vmul.f32 %v2197, 0.044715
        %v2377 = vmul.f32 %v2199, 0.044715
        %v2378 = vmul.f32 %v2310, 0.044715
        %v2379 = vmul.f32 %v2312, 0.044715
        %v2380 = vmul.f32 %v2203, 0.044715
        %v2381 = vmul.f32 %v2205, 0.044715
        %v2382 = vmul.f32 %v2316, 0.044715
        %v2383 = vmul.f32 %v2318, 0.044715
        %v2384 = vmul.f32 %v2352, %v2161
        %v2385 = vmul.f32 %v2353, %v2163
        %v2386 = vmul.f32 %v2354, %v2274
        %v2387 = vmul.f32 %v2355, %v2276
        %v2388 = vmul.f32 %v2356, %v2167
        %v2389 = vmul.f32 %v2357, %v2169
        %v2390 = vmul.f32 %v2358, %v2280
        %v2391 = vmul.f32 %v2359, %v2282
        %v2392 = vmul.f32 %v2360, %v2173
        %v2393 = vmul.f32 %v2361, %v2175
        %v2394 = vmul.f32 %v2362, %v2286
        %v2395 = vmul.f32 %v2363, %v2288
        %v2396 = vmul.f32 %v2364, %v2179
        %v2397 = vmul.f32 %v2365, %v2181
        %v2398 = vmul.f32 %v2366, %v2292
        %v2399 = vmul.f32 %v2367, %v2294
        %v2400 = vmul.f32 %v2368, %v2185
        %v2401 = vmul.f32 %v2369, %v2187
        %v2402 = vmul.f32 %v2370, %v2298
        %v2403 = vmul.f32 %v2371, %v2300
        %v2404 = vmul.f32 %v2372, %v2191
        %v2405 = vmul.f32 %v2373, %v2193
        %v2406 = vmul.f32 %v2374, %v2304
        %v2407 = vmul.f32 %v2375, %v2306
        %v2408 = vmul.f32 %v2376, %v2197
        %v2409 = vmul.f32 %v2377, %v2199
        %v2410 = vmul.f32 %v2378, %v2310
        %v2411 = vmul.f32 %v2379, %v2312
        %v2412 = vmul.f32 %v2380, %v2203
        %v2413 = vmul.f32 %v2381, %v2205
        %v2414 = vmul.f32 %v2382, %v2316
        %v2415 = vmul.f32 %v2383, %v2318
        %v2416 = vmul.f32 %v2384, %v2161
        %v2417 = vmul.f32 %v2385, %v2163
        %v2418 = vmul.f32 %v2386, %v2274
        %v2419 = vmul.f32 %v2387, %v2276
        %v2420 = vmul.f32 %v2388, %v2167
        %v2421 = vmul.f32 %v2389, %v2169
        %v2422 = vmul.f32 %v2390, %v2280
        %v2423 = vmul.f32 %v2391, %v2282
        %v2424 = vmul.f32 %v2392, %v2173
        %v2425 = vmul.f32 %v2393, %v2175
        %v2426 = vmul.f32 %v2394, %v2286
        %v2427 = vmul.f32 %v2395, %v2288
        %v2428 = vmul.f32 %v2396, %v2179
        %v2429 = vmul.f32 %v2397, %v2181
        %v2430 = vmul.f32 %v2398, %v2292
        %v2431 = vmul.f32 %v2399, %v2294
        %v2432 = vmul.f32 %v2400, %v2185
        %v2433 = vmul.f32 %v2401, %v2187
        %v2434 = vmul.f32 %v2402, %v2298
        %v2435 = vmul.f32 %v2403, %v2300
        %v2436 = vmul.f32 %v2404, %v2191
        %v2437 = vmul.f32 %v2405, %v2193
        %v2438 = vmul.f32 %v2406, %v2304
        %v2439 = vmul.f32 %v2407, %v2306
        %v2440 = vmul.f32 %v2408, %v2197
        %v2441 = vmul.f32 %v2409, %v2199
        %v2442 = vmul.f32 %v2410, %v2310
        %v2443 = vmul.f32 %v2411, %v2312
        %v2444 = vmul.f32 %v2412, %v2203
        %v2445 = vmul.f32 %v2413, %v2205
        %v2446 = vmul.f32 %v2414, %v2316
        %v2447 = vmul.f32 %v2415, %v2318
        %v2448 = vadd.f32 %v2161, %v2416
        %v2449 = vadd.f32 %v2163, %v2417
        %v2450 = vadd.f32 %v2274, %v2418
        %v2451 = vadd.f32 %v2276, %v2419
        %v2452 = vadd.f32 %v2167, %v2420
        %v2453 = vadd.f32 %v2169, %v2421
        %v2454 = vadd.f32 %v2280, %v2422
        %v2455 = vadd.f32 %v2282, %v2423
        %v2456 = vadd.f32 %v2173, %v2424
        %v2457 = vadd.f32 %v2175, %v2425
        %v2458 = vadd.f32 %v2286, %v2426
        %v2459 = vadd.f32 %v2288, %v2427
        %v2460 = vadd.f32 %v2179, %v2428
        %v2461 = vadd.f32 %v2181, %v2429
        %v2462 = vadd.f32 %v2292, %v2430
        %v2463 = vadd.f32 %v2294, %v2431
        %v2464 = vadd.f32 %v2185, %v2432
        %v2465 = vadd.f32 %v2187, %v2433
        %v2466 = vadd.f32 %v2298, %v2434
        %v2467 = vadd.f32 %v2300, %v2435
        %v2468 = vadd.f32 %v2191, %v2436
        %v2469 = vadd.f32 %v2193, %v2437
        %v2470 = vadd.f32 %v2304, %v2438
        %v2471 = vadd.f32 %v2306, %v2439
        %v2472 = vadd.f32 %v2197, %v2440
        %v2473 = vadd.f32 %v2199, %v2441
        %v2474 = vadd.f32 %v2310, %v2442
        %v2475 = vadd.f32 %v2312, %v2443
        %v2476 = vadd.f32 %v2203, %v2444
        %v2477 = vadd.f32 %v2205, %v2445
        %v2478 = vadd.f32 %v2316, %v2446
        %v2479 = vadd.f32 %v2318, %v2447
        %v2480 = vmul.f32 %v2448, 0.7978846
        %v2481 = vmul.f32 %v2449, 0.7978846
        %v2482 = vmul.f32 %v2450, 0.7978846
        %v2483 = vmul.f32 %v2451, 0.7978846
        %v2484 = vmul.f32 %v2452, 0.7978846
        %v2485 = vmul.f32 %v2453, 0.7978846
        %v2486 = vmul.f32 %v2454, 0.7978846
        %v2487 = vmul.f32 %v2455, 0.7978846
        %v2488 = vmul.f32 %v2456, 0.7978846
        %v2489 = vmul.f32 %v2457, 0.7978846
        %v2490 = vmul.f32 %v2458, 0.7978846
        %v2491 = vmul.f32 %v2459, 0.7978846
        %v2492 = vmul.f32 %v2460, 0.7978846
        %v2493 = vmul.f32 %v2461, 0.7978846
        %v2494 = vmul.f32 %v2462, 0.7978846
        %v2495 = vmul.f32 %v2463, 0.7978846
        %v2496 = vmul.f32 %v2464, 0.7978846
        %v2497 = vmul.f32 %v2465, 0.7978846
        %v2498 = vmul.f32 %v2466, 0.7978846
        %v2499 = vmul.f32 %v2467, 0.7978846
        %v2500 = vmul.f32 %v2468, 0.7978846
        %v2501 = vmul.f32 %v2469, 0.7978846
        %v2502 = vmul.f32 %v2470, 0.7978846
        %v2503 = vmul.f32 %v2471, 0.7978846
        %v2504 = vmul.f32 %v2472, 0.7978846
        %v2505 = vmul.f32 %v2473, 0.7978846
        %v2506 = vmul.f32 %v2474, 0.7978846
        %v2507 = vmul.f32 %v2475, 0.7978846
        %v2508 = vmul.f32 %v2476, 0.7978846
        %v2509 = vmul.f32 %v2477, 0.7978846
        %v2510 = vmul.f32 %v2478, 0.7978846
        %v2511 = vmul.f32 %v2479, 0.7978846
        %v2512 = vtanh.pop %v2480
        %v2513 = vtanh.pop %v2481
        %v2514 = vtanh.pop %v2482
        %v2515 = vtanh.pop %v2483
        %v2516 = vtanh.pop %v2484
        %v2517 = vtanh.pop %v2485
        %v2518 = vtanh.pop %v2486
        %v2519 = vtanh.pop %v2487
        %v2520 = vtanh.pop %v2488
        %v2521 = vtanh.pop %v2489
        %v2522 = vtanh.pop %v2490
        %v2523 = vtanh.pop %v2491
        %v2524 = vtanh.pop %v2492
        %v2525 = vtanh.pop %v2493
        %v2526 = vtanh.pop %v2494
        %v2527 = vtanh.pop %v2495
        %v2528 = vtanh.pop %v2496
        %v2529 = vtanh.pop %v2497
        %v2530 = vtanh.pop %v2498
        %v2531 = vtanh.pop %v2499
        %v2532 = vtanh.pop %v2500
        %v2533 = vtanh.pop %v2501
        %v2534 = vtanh.pop %v2502
        %v2535 = vtanh.pop %v2503
        %v2536 = vtanh.pop %v2504
        %v2537 = vtanh.pop %v2505
        %v2538 = vtanh.pop %v2506
        %v2539 = vtanh.pop %v2507
        %v2540 = vtanh.pop %v2508
        %v2541 = vtanh.pop %v2509
        %v2542 = vtanh.pop %v2510
        %v2543 = vtanh.pop %v2511
        %v2544 = vadd.f32 %v2512, 1.0
        %v2545 = vadd.f32 %v2513, 1.0
        %v2546 = vadd.f32 %v2514, 1.0
        %v2547 = vadd.f32 %v2515, 1.0
        %v2548 = vadd.f32 %v2516, 1.0
        %v2549 = vadd.f32 %v2517, 1.0
        %v2550 = vadd.f32 %v2518, 1.0
        %v2551 = vadd.f32 %v2519, 1.0
        %v2552 = vadd.f32 %v2520, 1.0
        %v2553 = vadd.f32 %v2521, 1.0
        %v2554 = vadd.f32 %v2522, 1.0
        %v2555 = vadd.f32 %v2523, 1.0
        %v2556 = vadd.f32 %v2524, 1.0
        %v2557 = vadd.f32 %v2525, 1.0
        %v2558 = vadd.f32 %v2526, 1.0
        %v2559 = vadd.f32 %v2527, 1.0
        %v2560 = vadd.f32 %v2528, 1.0
        %v2561 = vadd.f32 %v2529, 1.0
        %v2562 = vadd.f32 %v2530, 1.0
        %v2563 = vadd.f32 %v2531, 1.0
        %v2564 = vadd.f32 %v2532, 1.0
        %v2565 = vadd.f32 %v2533, 1.0
        %v2566 = vadd.f32 %v2534, 1.0
        %v2567 = vadd.f32 %v2535, 1.0
        %v2568 = vadd.f32 %v2536, 1.0
        %v2569 = vadd.f32 %v2537, 1.0
        %v2570 = vadd.f32 %v2538, 1.0
        %v2571 = vadd.f32 %v2539, 1.0
        %v2572 = vadd.f32 %v2540, 1.0
        %v2573 = vadd.f32 %v2541, 1.0
        %v2574 = vadd.f32 %v2542, 1.0
        %v2575 = vadd.f32 %v2543, 1.0
        %v2576 = vmul.f32 %v2320, %v2544
        %v2577 = vmul.f32 %v2321, %v2545
        %v2578 = vmul.f32 %v2322, %v2546
        %v2579 = vmul.f32 %v2323, %v2547
        %v2580 = vmul.f32 %v2324, %v2548
        %v2581 = vmul.f32 %v2325, %v2549
        %v2582 = vmul.f32 %v2326, %v2550
        %v2583 = vmul.f32 %v2327, %v2551
        %v2584 = vmul.f32 %v2328, %v2552
        %v2585 = vmul.f32 %v2329, %v2553
        %v2586 = vmul.f32 %v2330, %v2554
        %v2587 = vmul.f32 %v2331, %v2555
        %v2588 = vmul.f32 %v2332, %v2556
        %v2589 = vmul.f32 %v2333, %v2557
        %v2590 = vmul.f32 %v2334, %v2558
        %v2591 = vmul.f32 %v2335, %v2559
        %v2592 = vmul.f32 %v2336, %v2560
        %v2593 = vmul.f32 %v2337, %v2561
        %v2594 = vmul.f32 %v2338, %v2562
        %v2595 = vmul.f32 %v2339, %v2563
        %v2596 = vmul.f32 %v2340, %v2564
        %v2597 = vmul.f32 %v2341, %v2565
        %v2598 = vmul.f32 %v2342, %v2566
        %v2599 = vmul.f32 %v2343, %v2567
        %v2600 = vmul.f32 %v2344, %v2568
        %v2601 = vmul.f32 %v2345, %v2569
        %v2602 = vmul.f32 %v2346, %v2570
        %v2603 = vmul.f32 %v2347, %v2571
        %v2604 = vmul.f32 %v2348, %v2572
        %v2605 = vmul.f32 %v2349, %v2573
        %v2606 = vmul.f32 %v2350, %v2574
        %v2607 = vmul.f32 %v2351, %v2575
        %v2608 = vld [vmem:[#allocation14] sm:$0xff]
        %v2609 = vld [vmem:[#allocation14 + $0x8] sm:$0xff]
        %v2610 = vld [vmem:[#allocation14 + $0x10] sm:$0xff]
        %v2611 = vld [vmem:[#allocation14 + $0x18] sm:$0xff]
        %v2612 = vld [vmem:[#allocation14 + $0x20] sm:$0xff]
        %v2613 = vld [vmem:[#allocation14 + $0x28] sm:$0xff]
        %v2614 = vld [vmem:[#allocation14 + $0x30] sm:$0xff]
        %v2615 = vld [vmem:[#allocation14 + $0x38] sm:$0xff]
        %v2616 = vld [vmem:[#allocation14 + $0x40] sm:$0xff]
        %v2617 = vld [vmem:[#allocation14 + $0x48] sm:$0xff]
        %v2618 = vld [vmem:[#allocation14 + $0x50] sm:$0xff]
        %v2619 = vld [vmem:[#allocation14 + $0x58] sm:$0xff]
        %v2620 = vld [vmem:[#allocation14 + $0x60] sm:$0xff]
        %v2621 = vld [vmem:[#allocation14 + $0x68] sm:$0xff]
        %v2622 = vld [vmem:[#allocation14 + $0x70] sm:$0xff]
        %v2623 = vld [vmem:[#allocation14 + $0x78] sm:$0xff]
        %v2624 = vld [vmem:[#allocation14 + $0x80] sm:$0xff]
        %v2625 = vld [vmem:[#allocation14 + $0x88] sm:$0xff]
        %v2626 = vld [vmem:[#allocation14 + $0x90] sm:$0xff]
        %v2627 = vld [vmem:[#allocation14 + $0x98] sm:$0xff]
        %v2628 = vld [vmem:[#allocation14 + $0xa0] sm:$0xff]
        %v2629 = vld [vmem:[#allocation14 + $0xa8] sm:$0xff]
        %v2630 = vld [vmem:[#allocation14 + $0xb0] sm:$0xff]
        %v2631 = vld [vmem:[#allocation14 + $0xb8] sm:$0xff]
        %v2632 = vld [vmem:[#allocation14 + $0xc0] sm:$0xff]
        %v2633 = vld [vmem:[#allocation14 + $0xc8] sm:$0xff]
        %v2634 = vld [vmem:[#allocation14 + $0xd0] sm:$0xff]
        %v2635 = vld [vmem:[#allocation14 + $0xd8] sm:$0xff]
        %v2636 = vld [vmem:[#allocation14 + $0xe0] sm:$0xff]
        %v2637 = vld [vmem:[#allocation14 + $0xe8] sm:$0xff]
        %v2638 = vld [vmem:[#allocation14 + $0xf0] sm:$0xff]
        %v2639 = vld [vmem:[#allocation14 + $0xf8] sm:$0xff]
        %v2640 = vld [vmem:[#allocation14 + $0x100] sm:$0xff]
        %v2641 = vld [vmem:[#allocation14 + $0x108] sm:$0xff]
        %v2642 = vld [vmem:[#allocation14 + $0x110] sm:$0xff]
        %v2643 = vld [vmem:[#allocation14 + $0x118] sm:$0xff]
        %v2644 = vld [vmem:[#allocation14 + $0x120] sm:$0xff]
        %v2645 = vld [vmem:[#allocation14 + $0x128] sm:$0xff]
        %v2646 = vld [vmem:[#allocation14 + $0x130] sm:$0xff]
        %v2647 = vld [vmem:[#allocation14 + $0x138] sm:$0xff]
        %v2648 = vld [vmem:[#allocation14 + $0x140] sm:$0xff]
        %v2649 = vld [vmem:[#allocation14 + $0x148] sm:$0xff]
        %v2650 = vld [vmem:[#allocation14 + $0x150] sm:$0xff]
        %v2651 = vld [vmem:[#allocation14 + $0x158] sm:$0xff]
        %v2652 = vld [vmem:[#allocation14 + $0x160] sm:$0xff]
        %v2653 = vld [vmem:[#allocation14 + $0x168] sm:$0xff]
        %v2654 = vld [vmem:[#allocation14 + $0x170] sm:$0xff]
        %v2655 = vld [vmem:[#allocation14 + $0x178] sm:$0xff]
        %v2656 = vld [vmem:[#allocation14 + $0x180] sm:$0xff]
        %v2657 = vld [vmem:[#allocation14 + $0x188] sm:$0xff]
        %v2658 = vld [vmem:[#allocation14 + $0x190] sm:$0xff]
        %v2659 = vld [vmem:[#allocation14 + $0x198] sm:$0xff]
        %v2660 = vld [vmem:[#allocation14 + $0x1a0] sm:$0xff]
        %v2661 = vld [vmem:[#allocation14 + $0x1a8] sm:$0xff]
        %v2662 = vld [vmem:[#allocation14 + $0x1b0] sm:$0xff]
        %v2663 = vld [vmem:[#allocation14 + $0x1b8] sm:$0xff]
        %v2664 = vld [vmem:[#allocation14 + $0x1c0] sm:$0xff]
        %v2665 = vld [vmem:[#allocation14 + $0x1c8] sm:$0xff]
        %v2666 = vld [vmem:[#allocation14 + $0x1d0] sm:$0xff]
        %v2667 = vld [vmem:[#allocation14 + $0x1d8] sm:$0xff]
        %v2668 = vld [vmem:[#allocation14 + $0x1e0] sm:$0xff]
        %v2669 = vld [vmem:[#allocation14 + $0x1e8] sm:$0xff]
        %v2670 = vld [vmem:[#allocation14 + $0x1f0] sm:$0xff]
        %v2671 = vld [vmem:[#allocation14 + $0x1f8] sm:$0xff]
        %v2672 = vld [vmem:[%s18] sm:$0x1]
        %v2674 = vlaneseq
        %v2675 = vshrl.u32 %v2674, 7
        %v2676 = vsub.s32 0, %v2675
        %v2677 = vrot.slane %v2672, %v2676
        %2679 = vmatprep.subr.mxu0 0.0
        %2680 = vmatpush1.msra.mxu0 %v2608
        %2681 = vmatprep.subr.mxu0 0.0
        %2682 = vmatpush1.msra.mxu0 %v2609
        %2683 = vmatprep.subr.mxu0 0.0
        %2684 = vmatpush1.msra.mxu0 %v2610
        %2685 = vmatprep.subr.mxu0 0.0
        %2686 = vmatpush1.msra.mxu0 %v2611
        %2687 = vmatprep.subr.mxu0 0.0
        %2688 = vmatpush1.msra.mxu0 %v2612
        %2689 = vmatprep.subr.mxu0 0.0
        %2690 = vmatpush1.msra.mxu0 %v2613
        %2691 = vmatprep.subr.mxu0 0.0
        %2692 = vmatpush1.msra.mxu0 %v2614
        %2693 = vmatprep.subr.mxu0 0.0
        %2694 = vmatpush1.msra.mxu0 %v2615
        %2695 = vmatprep.subr.mxu0 0.0
        %2696 = vmatpush1.msra.mxu0 %v2616
        %2697 = vmatprep.subr.mxu0 0.0
        %2698 = vmatpush1.msra.mxu0 %v2617
        %2699 = vmatprep.subr.mxu0 0.0
        %2700 = vmatpush1.msra.mxu0 %v2618
        %2701 = vmatprep.subr.mxu0 0.0
        %2702 = vmatpush1.msra.mxu0 %v2619
        %2703 = vmatprep.subr.mxu0 0.0
        %2704 = vmatpush1.msra.mxu0 %v2620
        %2705 = vmatprep.subr.mxu0 0.0
        %2706 = vmatpush1.msra.mxu0 %v2621
        %2707 = vmatprep.subr.mxu0 0.0
        %2708 = vmatpush1.msra.mxu0 %v2622
        %2709 = vmatprep.subr.mxu0 0.0
        %2710 = vmatpush1.msra.mxu0 %v2623
        %2711 = vmatprep.subr.mxu0 0.0
        %2712 = vmatpush1.msra.mxu0 %v2624
        %2713 = vmatprep.subr.mxu0 0.0
        %2714 = vmatpush1.msra.mxu0 %v2625
        %2715 = vmatprep.subr.mxu0 0.0
        %2716 = vmatpush1.msra.mxu0 %v2626
        %2717 = vmatprep.subr.mxu0 0.0
        %2718 = vmatpush1.msra.mxu0 %v2627
        %2719 = vmatprep.subr.mxu0 0.0
        %2720 = vmatpush1.msra.mxu0 %v2628
        %2721 = vmatprep.subr.mxu0 0.0
        %2722 = vmatpush1.msra.mxu0 %v2629
        %2723 = vmatprep.subr.mxu0 0.0
        %2724 = vmatpush1.msra.mxu0 %v2630
        %2725 = vmatprep.subr.mxu0 0.0
        %2726 = vmatpush1.msra.mxu0 %v2631
        %2727 = vmatprep.subr.mxu0 0.0
        %2728 = vmatpush1.msra.mxu0 %v2632
        %2729 = vmatprep.subr.mxu0 0.0
        %2730 = vmatpush1.msra.mxu0 %v2633
        %2731 = vmatprep.subr.mxu0 0.0
        %2732 = vmatpush1.msra.mxu0 %v2634
        %2733 = vmatprep.subr.mxu0 0.0
        %2734 = vmatpush1.msra.mxu0 %v2635
        %2735 = vmatprep.subr.mxu0 0.0
        %2736 = vmatpush1.msra.mxu0 %v2636
        %2737 = vmatprep.subr.mxu0 0.0
        %2738 = vmatpush1.msra.mxu0 %v2637
        %2739 = vmatprep.subr.mxu0 0.0
        %2740 = vmatpush1.msra.mxu0 %v2638
        %2741 = vmatprep.subr.mxu0 0.0
        %2742 = vmatpush1.msra.mxu0 %v2639
        %2743 = vmatprep.mubr.f32.mxu0 %v2577
        %2744 = vmatmul.mubr.f32.gmra.mrb[0].mxu0 %v2576
        %v2745 = vpop.f32.mrb[0].mxu0
        %v2746 = vadd.f32 %v2677, %v2745
        %v2747 = vpop.f32.mrb[0].mxu0
        %2748 = vmatprep.mubr.f32.mxu0 %v2581
        %2749 = vmatmul.mubr.f32.gmra.mrb[0].mxu0 %v2580
        %v2750 = vpop.f32.mrb[0].mxu0
        %v2751 = vadd.f32 %v2677, %v2750
        %v2752 = vpop.f32.mrb[0].mxu0
        %2753 = vmatprep.mubr.f32.mxu0 %v2585
        %2754 = vmatmul.mubr.f32.gmra.mrb[0].mxu0 %v2584
        %v2755 = vpop.f32.mrb[0].mxu0
        %v2756 = vadd.f32 %v2677, %v2755
        %v2757 = vpop.f32.mrb[0].mxu0
        %2758 = vmatprep.mubr.f32.mxu0 %v2589
        %2759 = vmatmul.mubr.f32.gmra.mrb[0].mxu0 %v2588
        %v2760 = vpop.f32.mrb[0].mxu0
        %v2761 = vadd.f32 %v2677, %v2760
        %v2762 = vpop.f32.mrb[0].mxu0
        %2763 = vmatprep.mubr.f32.mxu0 %v2593
        %2764 = vmatmul.mubr.f32.gmra.mrb[0].mxu0 %v2592
        %v2765 = vpop.f32.mrb[0].mxu0
        %v2766 = vadd.f32 %v2677, %v2765
        %v2767 = vpop.f32.mrb[0].mxu0
        %2768 = vmatprep.mubr.f32.mxu0 %v2597
        %2769 = vmatmul.mubr.f32.gmra.mrb[0].mxu0 %v2596
        %v2770 = vpop.f32.mrb[0].mxu0
        %v2771 = vadd.f32 %v2677, %v2770
        %v2772 = vpop.f32.mrb[0].mxu0
        %2773 = vmatprep.mubr.f32.mxu0 %v2601
        %2774 = vmatmul.mubr.f32.gmra.mrb[0].mxu0 %v2600
        %v2775 = vpop.f32.mrb[0].mxu0
        %v2776 = vadd.f32 %v2677, %v2775
        %v2777 = vpop.f32.mrb[0].mxu0
        %2778 = vmatprep.mubr.f32.mxu0 %v2605
        %2779 = vmatmul.mubr.f32.gmra.mrb[0].mxu0 %v2604
        %v2780 = vpop.f32.mrb[0].mxu0
        %v2781 = vadd.f32 %v2677, %v2780
        %v2782 = vpop.f32.mrb[0].mxu0
        %2783 = vdwg.mxu0
        %2784 = vmatprep.subr.mxu0 0.0
        %2785 = vmatpush1.msra.mxu0 %v2640
        %2786 = vmatprep.subr.mxu0 0.0
        %2787 = vmatpush1.msra.mxu0 %v2641
        %2788 = vmatprep.subr.mxu0 0.0
        %2789 = vmatpush1.msra.mxu0 %v2642
        %2790 = vmatprep.subr.mxu0 0.0
        %2791 = vmatpush1.msra.mxu0 %v2643
        %2792 = vmatprep.subr.mxu0 0.0
        %2793 = vmatpush1.msra.mxu0 %v2644
        %2794 = vmatprep.subr.mxu0 0.0
        %2795 = vmatpush1.msra.mxu0 %v2645
        %2796 = vmatprep.subr.mxu0 0.0
        %2797 = vmatpush1.msra.mxu0 %v2646
        %2798 = vmatprep.subr.mxu0 0.0
        %2799 = vmatpush1.msra.mxu0 %v2647
        %2800 = vmatprep.subr.mxu0 0.0
        %2801 = vmatpush1.msra.mxu0 %v2648
        %2802 = vmatprep.subr.mxu0 0.0
        %2803 = vmatpush1.msra.mxu0 %v2649
        %2804 = vmatprep.subr.mxu0 0.0
        %2805 = vmatpush1.msra.mxu0 %v2650
        %2806 = vmatprep.subr.mxu0 0.0
        %2807 = vmatpush1.msra.mxu0 %v2651
        %2808 = vmatprep.subr.mxu0 0.0
        %2809 = vmatpush1.msra.mxu0 %v2652
        %2810 = vmatprep.subr.mxu0 0.0
        %2811 = vmatpush1.msra.mxu0 %v2653
        %2812 = vmatprep.subr.mxu0 0.0
        %2813 = vmatpush1.msra.mxu0 %v2654
        %2814 = vmatprep.subr.mxu0 0.0
        %2815 = vmatpush1.msra.mxu0 %v2655
        %2816 = vmatprep.subr.mxu0 0.0
        %2817 = vmatpush1.msra.mxu0 %v2656
        %2818 = vmatprep.subr.mxu0 0.0
        %2819 = vmatpush1.msra.mxu0 %v2657
        %2820 = vmatprep.subr.mxu0 0.0
        %2821 = vmatpush1.msra.mxu0 %v2658
        %2822 = vmatprep.subr.mxu0 0.0
        %2823 = vmatpush1.msra.mxu0 %v2659
        %2824 = vmatprep.subr.mxu0 0.0
        %2825 = vmatpush1.msra.mxu0 %v2660
        %2826 = vmatprep.subr.mxu0 0.0
        %2827 = vmatpush1.msra.mxu0 %v2661
        %2828 = vmatprep.subr.mxu0 0.0
        %2829 = vmatpush1.msra.mxu0 %v2662
        %2830 = vmatprep.subr.mxu0 0.0
        %2831 = vmatpush1.msra.mxu0 %v2663
        %2832 = vmatprep.subr.mxu0 0.0
        %2833 = vmatpush1.msra.mxu0 %v2664
        %2834 = vmatprep.subr.mxu0 0.0
        %2835 = vmatpush1.msra.mxu0 %v2665
        %2836 = vmatprep.subr.mxu0 0.0
        %2837 = vmatpush1.msra.mxu0 %v2666
        %2838 = vmatprep.subr.mxu0 0.0
        %2839 = vmatpush1.msra.mxu0 %v2667
        %2840 = vmatprep.subr.mxu0 0.0
        %2841 = vmatpush1.msra.mxu0 %v2668
        %2842 = vmatprep.subr.mxu0 0.0
        %2843 = vmatpush1.msra.mxu0 %v2669
        %2844 = vmatprep.subr.mxu0 0.0
        %2845 = vmatpush1.msra.mxu0 %v2670
        %2846 = vmatprep.subr.mxu0 0.0
        %2847 = vmatpush1.msra.mxu0 %v2671
        %2848 = vmatprep.mubr.f32.mxu0 %v2579
        %2849 = vmatmul.mubr.f32.gmra.mrb[0].mxu0 %v2578
        %v2850 = vpop.f32.mrb[0].mxu0
        %v2851 = vadd.f32 %v2746, %v2850
        %v2852 = vpop.f32.mrb[0].mxu0
        %2853 = vmatprep.mubr.f32.mxu0 %v2583
        %2854 = vmatmul.mubr.f32.gmra.mrb[0].mxu0 %v2582
        %v2855 = vpop.f32.mrb[0].mxu0
        %v2856 = vadd.f32 %v2751, %v2855
        %v2857 = vpop.f32.mrb[0].mxu0
        %2858 = vmatprep.mubr.f32.mxu0 %v2587
        %2859 = vmatmul.mubr.f32.gmra.mrb[0].mxu0 %v2586
        %v2860 = vpop.f32.mrb[0].mxu0
        %v2861 = vadd.f32 %v2756, %v2860
        %v2862 = vpop.f32.mrb[0].mxu0
        %2863 = vmatprep.mubr.f32.mxu0 %v2591
        %2864 = vmatmul.mubr.f32.gmra.mrb[0].mxu0 %v2590
        %v2865 = vpop.f32.mrb[0].mxu0
        %v2866 = vadd.f32 %v2761, %v2865
        %v2867 = vpop.f32.mrb[0].mxu0
        %2868 = vmatprep.mubr.f32.mxu0 %v2595
        %2869 = vmatmul.mubr.f32.gmra.mrb[0].mxu0 %v2594
        %v2870 = vpop.f32.mrb[0].mxu0
        %v2871 = vadd.f32 %v2766, %v2870
        %v2872 = vpop.f32.mrb[0].mxu0
        %2873 = vmatprep.mubr.f32.mxu0 %v2599
        %2874 = vmatmul.mubr.f32.gmra.mrb[0].mxu0 %v2598
        %v2875 = vpop.f32.mrb[0].mxu0
        %v2876 = vadd.f32 %v2771, %v2875
        %v2877 = vpop.f32.mrb[0].mxu0
        %2878 = vmatprep.mubr.f32.mxu0 %v2603
        %2879 = vmatmul.mubr.f32.gmra.mrb[0].mxu0 %v2602
        %v2880 = vpop.f32.mrb[0].mxu0
        %v2881 = vadd.f32 %v2776, %v2880
        %v2882 = vpop.f32.mrb[0].mxu0
        %2883 = vmatprep.mubr.f32.mxu0 %v2607
        %2884 = vmatmul.mubr.f32.gmra.mrb[0].mxu0 %v2606
        %v2885 = vpop.f32.mrb[0].mxu0
        %v2886 = vadd.f32 %v2781, %v2885
        %v2887 = vpop.f32.mrb[0].mxu0
        %2888 = vdwg.mxu0
        %v2889 = vadd.f32 %v1912, %v2851
        %v2890 = vadd.f32 %v1913, %v2856
        %v2891 = vadd.f32 %v1914, %v2861
        %v2892 = vadd.f32 %v1915, %v2866
        %v2893 = vadd.f32 %v1916, %v2871
        %v2894 = vadd.f32 %v1917, %v2876
        %v2895 = vadd.f32 %v1918, %v2881
        %v2896 = vadd.f32 %v1919, %v2886
        %2897 = vst [vmem:[%s697] sm:$0xff] %v2889
        %2898 = vst [vmem:[%s697 + $0x8] sm:$0xff] %v2890
        %2899 = vst [vmem:[%s697 + $0x10] sm:$0xff] %v2891
        %2900 = vst [vmem:[%s697 + $0x18] sm:$0xff] %v2892
        %2901 = vst [vmem:[%s697 + $0x20] sm:$0xff] %v2893
        %2902 = vst [vmem:[%s697 + $0x28] sm:$0xff] %v2894
        %2903 = vst [vmem:[%s697 + $0x30] sm:$0xff] %v2895
        %2904 = vst [vmem:[%s697 + $0x38] sm:$0xff] %v2896
        %s2905 = sand.u32 %s449, 1
        %s2906 = scalar_lea.sflag [#allocation5], %s2905
        %s2907 = sand.u32 %s449, 1
        %s2908 = smul.addr %s2907, 64
        %s2909 = scalar_lea.vmem [#allocation15], %s2908
        // Predicated region
        $region125: #{tpu_custom_call.1} parent=95 // pred_check
          %p2910 = pneg %p459
        $region126: #{tpu_custom_call.1} parent=95 // pred_check_branch
          %2912 = sbr.rel (%p2910) target = $region128
        $region127: #{tpu_custom_call.1} parent=95 // pred_region
          %s2914 = ssub.s32 1024, 1024
          %2915 = vsyncadd %s2906, %s2914
          %s2916 = smul.addr %s37, 8
          %s2917 = smul.addr %s2916, 128
          %s2918 = scalar_lea.hbm %s19, %s2917
          %s2919 = sshll.u32 %s2909, 4
          %s2920 = int_to_ptr.vmem [resolvable:$true] %s2919
          %2925 = dma.vmem_to_hbm [thread:$0]  %s2920, 1024, %s2918, %s2906, 128, 128, 8
        $region128: #{tpu_custom_call.1} parent=95 // pred_fallthru
          _
      $region96: #{tpu_custom_call.1} parent=5 // pred_fallthru
        _
      %p2926 = scmp.le.s32.totalorder 2, %s32
      // Predicated region
      $region129: #{tpu_custom_call.1} parent=5 // pred_check
        %p2927 = pneg %p2926
      $region130: #{tpu_custom_call.1} parent=5 // pred_check_branch
        %2929 = sbr.rel (%p2927) target = $region132
      $region131: #{tpu_custom_call.1} parent=5 // pred_region
        %s2930 = ssub.s32 %s32, 2
        // Predicated region
        $region133: #{tpu_custom_call.1} parent=131 // pred_check
          %p2931 = pneg %p465
        $region134: #{tpu_custom_call.1} parent=131 // pred_check_branch
          %2933 = sbr.rel (%p2931) target = $region136
        $region135: #{tpu_custom_call.1} parent=131 // pred_region
          %s2934 = sand.u32 %s450, 1
          %s2935 = scalar_lea.sflag [#allocation5], %s2934
          %s2936 = sand.u32 %s450, 1
          %s2937 = smul.addr %s2936, 64
          %s2938 = scalar_lea.vmem [#allocation15], %s2937
          %2939 = dma.done %s2935, 1024
        $region136: #{tpu_custom_call.1} parent=131 // pred_fallthru
          _
      $region132: #{tpu_custom_call.1} parent=5 // pred_fallthru
        _
    $region6: #{tpu_custom_call.1} parent=1 // loop_footer
      %s36 = sadd.s32 1, %s32
    $region7: #{tpu_custom_call.1} parent=1 // loop_footer_branch
      %31 = sbr.rel target = $region3
    $region8: #{tpu_custom_call.1} parent=1 // loop_exit
      _
    %2940 = vsyncpa [#allocation4], 1
    %s2941 = scalar_lea.sflag [#allocation4], 1
    %2942 = vsyncpa %s2941, 1
    %2943 = vsyncpa [#allocation7], 1
    %2944 = vsyncpa [#allocation10], 1
    %2945 = vsyncpa [#allocation13], 1
    %2946 = vsyncpa [#allocation5], 1
    %s2947 = scalar_lea.sflag [#allocation5], 1
    %2948 = vsyncpa %s2947, 1

</llo_original>
